<compile_context>
chip_gen: v6e
topology: v6e:2x2x1
jax: 0.10.0
libtpu: 0.0.40
codegen_flags: <defaults>
</compile_context>

<pallas_src>
import functools
import math

import jax
import jax.numpy as jnp
import numpy as np
from jax import lax
from jax.experimental import pallas as pl
from jax.experimental.pallas import tpu as pltpu

EPS = 1e-5                 # InstanceNorm3d default eps
LRELU_SLOPE = 0.2          # LeakyReLU(0.2)
INV_SQRT2 = 1.0 / math.sqrt(2.0)
VMEM_LIMIT = 32 * 1024 * 1024   # explicit scoped-VMEM budget (safe on v5e/v6e/v7x)


# ----------------------------------------------------------------------------
# Kernel 1: single-pass InstanceNorm statistics fused with the AdaIN affine.
#   Produces per-(n, c) scale/shift such that  adain(x) = x * scale + shift.
#   Tiled over depth with an "arbitrary" reduction axis (sum & sum-of-squares
#   accumulated in VMEM scratch in ONE sweep over the data).
# ----------------------------------------------------------------------------
def _adain_stats_kernel(x_ref, g_ref, b_ref, scale_ref, shift_ref,
                        sum_ref, sq_ref, *, inv_n):
    dt = pl.program_id(1)

    @pl.when(dt == 0)
    def _init():
        sum_ref[...] = jnp.zeros_like(sum_ref)
        sq_ref[...] = jnp.zeros_like(sq_ref)

    xs = x_ref[0].astype(jnp.float32)                    # (tD, C, HW)
    ps = jnp.sum(xs, axis=2, keepdims=True)              # (tD, C, 1)
    pq = jnp.sum(xs * xs, axis=2, keepdims=True)         # (tD, C, 1)
    sum_ref[...] += jnp.sum(ps, axis=0)                  # (C, 1)
    sq_ref[...] += jnp.sum(pq, axis=0)                   # (C, 1)

    @pl.when(dt == pl.num_programs(1) - 1)
    def _finalize():
        mean = sum_ref[...] * inv_n
        var = sq_ref[...] * inv_n - mean * mean          # biased variance
        rstd = lax.rsqrt(var + EPS)
        g = g_ref[0].astype(jnp.float32)                 # (C, 1)
        b = b_ref[0].astype(jnp.float32)                 # (C, 1)
        sc = (1.0 + g) * rstd
        scale_ref[0] = sc.astype(scale_ref.dtype)
        shift_ref[0] = (b - sc * mean).astype(shift_ref.dtype)


def adain_scale_shift(x, gamma, beta, *, tile_bytes=2 * 1024 * 1024):
    """x: (N, D, C, HW); gamma/beta: (N, C, 1) -> (scale, shift) each (N, C, 1)."""
    N, D, C, HW = x.shape
    slice_bytes = C * HW * x.dtype.itemsize
    tD = 1
    for cand in range(D, 0, -1):                  # largest divisor of D in budget
        if D % cand == 0 and cand * slice_bytes <= tile_bytes:
            tD = cand
            break
    kernel = functools.partial(_adain_stats_kernel, inv_n=1.0 / float(D * HW))
    scale, shift = pl.pallas_call(
        kernel,
        out_shape=(jax.ShapeDtypeStruct((N, C, 1), jnp.float32),
                   jax.ShapeDtypeStruct((N, C, 1), jnp.float32)),
        grid=(N, D // tD),
        in_specs=[
            pl.BlockSpec((1, tD, C, HW), lambda n, d: (n, d, 0, 0)),
            pl.BlockSpec((1, C, 1), lambda n, d: (n, 0, 0)),
            pl.BlockSpec((1, C, 1), lambda n, d: (n, 0, 0)),
        ],
        out_specs=(pl.BlockSpec((1, C, 1), lambda n, d: (n, 0, 0)),
                   pl.BlockSpec((1, C, 1), lambda n, d: (n, 0, 0))),
        scratch_shapes=[pltpu.VMEM((C, 1), jnp.float32),
                        pltpu.VMEM((C, 1), jnp.float32)],
        compiler_params=pltpu.CompilerParams(
            dimension_semantics=("parallel", "arbitrary"),
            vmem_limit_bytes=VMEM_LIMIT),
    )(x, gamma, beta)
    return scale, shift


# ----------------------------------------------------------------------------
# Kernel 2/3: fused AdaIN + LeakyReLU + 3x3x3 conv  (conv2 also fuses the
# learned 1x1x1 shortcut + residual add + 1/sqrt(2) into its epilogue).
#
# grid = (N, D, 3): one output depth slice per (n, d); kd (depth tap) is the
# reduction ("arbitrary") axis accumulating into an f32 VMEM scratch.
# ----------------------------------------------------------------------------
def _shift_hw(x, s):
    """y[:, p] = x[:, p + s], zero-filled outside [0, HW).  s is a static int."""
    if s == 0:
        return x
    c, hw = x.shape
    if s > 0:
        pad = jnp.zeros((c, s), x.dtype)
        return jnp.concatenate([x[:, s:], pad], axis=1)
    pad = jnp.zeros((c, -s), x.dtype)
    return jnp.concatenate([pad, x[:, :hw + s]], axis=1)


def _conv_accumulate(x_ref, scale_ref, shift_ref, w_ref, mask_ref, acc_ref,
                     *, width, num_d):
    """AdaIN + LeakyReLU prologue, then accumulate the 9 in-plane taps of the
    current depth tap (kd) into the f32 VMEM accumulator."""
    d, kd = pl.program_id(1), pl.program_id(2)
    src = d + kd - 1
    src_valid = jnp.logical_and(src >= 0, src < num_d)   # depth zero-padding

    @pl.when(kd == 0)
    def _init():
        acc_ref[...] = jnp.zeros_like(acc_ref)

    @pl.when(src_valid)
    def _accum():
        xs = x_ref[0, 0].astype(jnp.float32)              # (Cin, HW)
        xs = xs * scale_ref[0] + shift_ref[0]             # fused AdaIN (f32)
        xs = jnp.where(xs >= 0.0, xs, LRELU_SLOPE * xs)   # LeakyReLU(0.2)
        for kh in range(3):
            for kw in range(3):
                tap = kh * 3 + kw
                shift = (kh - 1) * width + (kw - 1)
                # shifted slab * boundary mask == zero-padded 3x3 window
                xt = _shift_hw(xs, shift) * mask_ref[tap]          # (Cin, HW)
                wt = w_ref[kd * 9 + tap]                           # (Cout, Cin) bf16
                acc_ref[...] += jnp.dot(wt, xt.astype(jnp.bfloat16),
                                        preferred_element_type=jnp.float32)


def _conv1_kernel(x_ref, scale_ref, shift_ref, w_ref, b_ref, mask_ref,
                  o_ref, acc_ref, *, width, num_d):
    _conv_accumulate(x_ref, scale_ref, shift_ref, w_ref, mask_ref, acc_ref,
                     width=width, num_d=num_d)

    @pl.when(pl.program_id(2) == 2)
    def _finalize():
        o_ref[0, 0] = (acc_ref[...] + b_ref[...]).astype(o_ref.dtype)


def _conv2_kernel(x_ref, scale_ref, shift_ref, w_ref, b_ref, mask_ref,
                  xsc_ref, wsc_ref, o_ref, acc_ref, *, width, num_d):
    _conv_accumulate(x_ref, scale_ref, shift_ref, w_ref, mask_ref, acc_ref,
                     width=width, num_d=num_d)

    @pl.when(pl.program_id(2) == 2)
    def _finalize():
        # learned 1x1x1 shortcut on the raw input + residual merge, fused here.
        sc = jnp.dot(wsc_ref[...], xsc_ref[0, 0].astype(jnp.bfloat16),
                     preferred_element_type=jnp.float32)           # (Cout, HW)
        o_ref[0, 0] = ((acc_ref[...] + b_ref[...] + sc) * INV_SQRT2
                       ).astype(o_ref.dtype)


def fused_adain_conv(x, scale, shift, w_taps, bias, masks, *, width,
                     shortcut=None):
    """y = conv3x3x3(lrelu(x*scale + shift)) [+ shortcut epilogue].

    x:      (N, D, Cin, HW) f32
    scale/shift: (N, Cin, 1) f32
    w_taps: (27, Cout, Cin) bf16, tap index = kd*9 + kh*3 + kw
    bias:   (Cout, 1) f32
    masks:  (9, 1, HW) f32 in-plane boundary masks
    shortcut: optional (x_orig (N,D,Csc,HW) f32, w_sc (Cout,Csc) bf16)
    """
    N, D, Cin, HW = x.shape
    Cout = w_taps.shape[1]
    num_d = D

    def x_map(n, d, kd):
        # depth tap: clamp the source slice; out-of-range taps are skipped
        # in-kernel (== zero padding along D).
        return (n, jnp.clip(d + kd - 1, 0, num_d - 1), 0, 0)

    in_specs = [
        pl.BlockSpec((1, 1, Cin, HW), x_map),
        pl.BlockSpec((1, Cin, 1), lambda n, d, kd: (n, 0, 0)),
        pl.BlockSpec((1, Cin, 1), lambda n, d, kd: (n, 0, 0)),
        pl.BlockSpec((27, Cout, Cin), lambda n, d, kd: (0, 0, 0)),  # resident
        pl.BlockSpec((Cout, 1), lambda n, d, kd: (0, 0)),           # resident
        pl.BlockSpec((9, 1, HW), lambda n, d, kd: (0, 0, 0)),       # resident
    ]
    args = [x, scale, shift, w_taps, bias, masks]

    if shortcut is None:
        kernel = functools.partial(_conv1_kernel, width=width, num_d=num_d)
    else:
        x_orig, w_sc = shortcut
        c_sc = x_orig.shape[2]
        in_specs += [
            pl.BlockSpec((1, 1, c_sc, HW), lambda n, d, kd: (n, d, 0, 0)),
            pl.BlockSpec((Cout, c_sc), lambda n, d, kd: (0, 0)),
        ]
        args += [x_orig, w_sc]
        kernel = functools.partial(_conv2_kernel, width=width, num_d=num_d)

    return pl.pallas_call(
        kernel,
        out_shape=jax.ShapeDtypeStruct((N, D, Cout, HW), x.dtype),
        grid=(N, D, 3),
        in_specs=in_specs,
        out_specs=pl.BlockSpec((1, 1, Cout, HW), lambda n, d, kd: (n, d, 0, 0)),
        scratch_shapes=[pltpu.VMEM((Cout, HW), jnp.float32)],
        compiler_params=pltpu.CompilerParams(
            dimension_semantics=("parallel", "parallel", "arbitrary"),
            vmem_limit_bytes=VMEM_LIMIT),
    )(*args)


# ----------------------------------------------------------------------------
# Host-side helpers (pure layout plumbing, no heavy compute)
# ----------------------------------------------------------------------------
def _make_tap_masks(H, W):
    """(9, 1, H*W) f32: 1 where the (kh,kw)-shifted source pixel is in-bounds."""
    m = np.zeros((9, 1, H * W), np.float32)
    hh, ww = np.meshgrid(np.arange(H), np.arange(W), indexing="ij")
    for kh in range(3):
        for kw in range(3):
            dh, dw = kh - 1, kw - 1
            valid = ((hh + dh >= 0) & (hh + dh < H) &
                     (ww + dw >= 0) & (ww + dw < W))
            m[kh * 3 + kw, 0] = valid.reshape(-1).astype(np.float32)
    return jnp.asarray(m)


def _taps(w):
    """(Cout, Cin, 3, 3, 3) torch layout -> (27, Cout, Cin) bf16 (tap-major)."""
    cout, cin = w.shape[:2]
    return jnp.transpose(w, (2, 3, 4, 0, 1)).reshape(27, cout, cin
                                                     ).astype(jnp.bfloat16)


def adain_resblk_forward(params, x_ncdhw, s):
    """x: (N, Cin, D, H, W) (PyTorch NCDHW), s: (N, style_dim)."""
    N, Cin, D, H, W = x_ncdhw.shape
    HW = H * W
    Cout = params["conv1_w"].shape[0]

    # lane-dense compute layout: (N, D, C, H*W)
    x = jnp.transpose(x_ncdhw, (0, 2, 1, 3, 4)).reshape(N, D, Cin, HW)

    masks = _make_tap_masks(H, W)
    w1 = _taps(params["conv1_w"])
    w2 = _taps(params["conv2_w"])
    b1 = params["conv1_b"].reshape(Cout, 1)
    b2 = params["conv2_b"].reshape(Cout, 1)
    w_sc = params["sc_w"].reshape(Cout, Cin).astype(jnp.bfloat16)

    # AdaIN-1 (style projection is tiny glue; normalization fused into conv1)
    h1 = s @ params["fc1_w"].T + params["fc1_b"]
    g1 = h1[:, :Cin].reshape(N, Cin, 1)
    be1 = h1[:, Cin:].reshape(N, Cin, 1)
    sc1, sh1 = adain_scale_shift(x, g1, be1)
    y1 = fused_adain_conv(x, sc1, sh1, w1, b1, masks, width=W)

    # AdaIN-2 + conv2 + learned shortcut + residual merge (one kernel)
    h2 = s @ params["fc2_w"].T + params["fc2_b"]
    g2 = h2[:, :Cout].reshape(N, Cout, 1)
    be2 = h2[:, Cout:].reshape(N, Cout, 1)
    sc2, sh2 = adain_scale_shift(y1, g2, be2)
    out = fused_adain_conv(y1, sc2, sh2, w2, b2, masks, width=W,
                           shortcut=(x, w_sc))

    return jnp.transpose(out.reshape(N, D, Cout, H, W), (0, 2, 1, 3, 4))


# ----------------------------------------------------------------------------
# Pure-JAX reference (semantics of the PyTorch module) for verification
# ----------------------------------------------------------------------------
def reference_forward(params, x, s):
    def adain(v, gamma, beta):
        mean = jnp.mean(v, axis=(2, 3, 4), keepdims=True)
        var = jnp.mean((v - mean) ** 2, axis=(2, 3, 4), keepdims=True)
        vn = (v - mean) / jnp.sqrt(var + EPS)
        return ((1.0 + gamma[:, :, None, None, None]) * vn
                + beta[:, :, None, None, None])

    def lrelu(v):
        return jnp.where(v >= 0, v, LRELU_SLOPE * v)

    def conv3(v, w, b):
        y = lax.conv_general_dilated(
            v, w, (1, 1, 1), "SAME",
            dimension_numbers=("NCDHW", "OIDHW", "NCDHW"))
        return y + b[None, :, None, None, None]

    Cin = x.shape[1]
    h1 = s @ params["fc1_w"].T + params["fc1_b"]
    out = lrelu(adain(x, h1[:, :Cin], h1[:, Cin:]))
    out = conv3(out, params["conv1_w"], params["conv1_b"])
    Cout = out.shape[1]
    h2 = s @ params["fc2_w"].T + params["fc2_b"]
    out = lrelu(adain(out, h2[:, :Cout], h2[:, Cout:]))
    out = conv3(out, params["conv2_w"], params["conv2_b"])
    sc = lax.conv_general_dilated(
        x, params["sc_w"], (1, 1, 1), "VALID",
        dimension_numbers=("NCDHW", "OIDHW", "NCDHW"))
    return (out + sc) * INV_SQRT2


def init_params(key, dim_in, dim_out, style_dim):
    ks = jax.random.split(key, 9)
    f = lambda k, shape: jax.random.normal(k, shape, jnp.float32) * 0.1
    return {
        # AdaIN fc layers: Linear(style_dim, 2*num_features)
        "fc1_w": f(ks[0], (2 * dim_in, style_dim)),
        "fc1_b": f(ks[1], (2 * dim_in,)),
        "fc2_w": f(ks[2], (2 * dim_out, style_dim)),
        "fc2_b": f(ks[3], (2 * dim_out,)),
        # Conv3d weights in PyTorch layout (Cout, Cin, 3, 3, 3)
        "conv1_w": f(ks[4], (dim_out, dim_in, 3, 3, 3)),
        "conv1_b": f(ks[5], (dim_out,)),
        "conv2_w": f(ks[6], (dim_out, dim_out, 3, 3, 3)),
        "conv2_b": f(ks[7], (dim_out,)),
        # learned 1x1x1 shortcut (no bias)
        "sc_w": f(ks[8], (dim_out, dim_in, 1, 1, 1)),
    }


if __name__ == "__main__":
    N, Cin, Cout = 2, 4, 8            # dim_in != dim_out -> learned shortcut
    D, H, W = 8, 16, 16               # H*W = 256 -> lane-dense kernel layout
    style_dim = 64

    key = jax.random.PRNGKey(0)
    kx, ks_, kp = jax.random.split(key, 3)
    x = jax.random.normal(kx, (N, Cin, D, H, W), jnp.float32)   # NCDHW (torch layout)
    s = jax.random.normal(ks_, (N, style_dim), jnp.float32)
    params = init_params(kp, Cin, Cout, style_dim)

    fwd = jax.jit(adain_resblk_forward)
    out = jax.block_until_ready(fwd(params, x, s))

    ref = jax.block_until_ready(reference_forward(params, x, s))
    # bf16 MXU operands (f32 accumulation) across two chained convs => slightly
    # looser tolerance than a pure-f32 comparison.
    np.testing.assert_allclose(np.asarray(out), np.asarray(ref),
                               rtol=5e-2, atol=5e-2)
    print("KERNEL_OK")
</pallas_src>

<mosaic_0001>
module attributes {stable_mosaic.version = 11 : i64} {
  func.func @_adain_stats_kernel(%arg0: i32, %arg1: i32, %arg2: memref<1x8x8x256xf32, #tpu.memory_space<vmem>>, %arg3: memref<1x8x1xf32, #tpu.memory_space<vmem>>, %arg4: memref<1x8x1xf32, #tpu.memory_space<vmem>>, %arg5: memref<1x8x1xf32, #tpu.memory_space<vmem>>, %arg6: memref<1x8x1xf32, #tpu.memory_space<vmem>>, %arg7: memref<8x1xf32, #tpu.memory_space<vmem>>, %arg8: memref<8x1xf32, #tpu.memory_space<vmem>>) attributes {dimension_semantics = [#tpu.dimension_semantics<parallel>, #tpu.dimension_semantics<arbitrary>], iteration_bounds = array<i64: 2, 1>, scalar_prefetch = 0 : i64, scratch_operands = 2 : i64, tpu.core_type = #tpu.core_type<tc>, window_params = [{transform_indices = @transform_0, window_bounds = array<i64: 1, 8, 8, 256>}, {transform_indices = @transform_1, window_bounds = array<i64: 1, 8, 1>}, {transform_indices = @transform_2, window_bounds = array<i64: 1, 8, 1>}, {transform_indices = @transform_3, window_bounds = array<i64: 1, 8, 1>}, {transform_indices = @transform_4, window_bounds = array<i64: 1, 8, 1>}]} {
    %c0_i32 = arith.constant 0 : i32
    %0 = arith.cmpi eq, %arg1, %c0_i32 : i32
    %1 = arith.extui %0 : i1 to i32
    %c0_i32_0 = arith.constant 0 : i32
    %2 = arith.cmpi ne, %1, %c0_i32_0 : i32
    scf.if %2 {
      %cst_17 = arith.constant 0.000000e+00 : f32
      %21 = vector.broadcast %cst_17 : f32 to vector<8x1xf32>
      %c0_18 = arith.constant 0 : index
      %c0_19 = arith.constant 0 : index
      %22 = vector.load %arg7[%c0_18, %c0_19] : memref<8x1xf32, #tpu.memory_space<vmem>>, vector<8x1xf32>
      tpu.vector_store %arg7[%c0_18, %c0_19], %21 {strides = array<i32>} : memref<8x1xf32, #tpu.memory_space<vmem>>, vector<8x1xf32>,
      %cst_20 = arith.constant 0.000000e+00 : f32
      %23 = vector.broadcast %cst_20 : f32 to vector<8x1xf32>
      %c0_21 = arith.constant 0 : index
      %c0_22 = arith.constant 0 : index
      %24 = vector.load %arg8[%c0_21, %c0_22] : memref<8x1xf32, #tpu.memory_space<vmem>>, vector<8x1xf32>
      tpu.vector_store %arg8[%c0_21, %c0_22], %23 {strides = array<i32>} : memref<8x1xf32, #tpu.memory_space<vmem>>, vector<8x1xf32>,
    } else {
    }
    %c0 = arith.constant 0 : index
    %c0_1 = arith.constant 0 : index
    %c0_2 = arith.constant 0 : index
    %c0_3 = arith.constant 0 : index
    %3 = vector.load %arg2[%c0, %c0_1, %c0_2, %c0_3] : memref<1x8x8x256xf32, #tpu.memory_space<vmem>>, vector<1x8x8x256xf32>
    %4 = vector.shape_cast %3 : vector<1x8x8x256xf32> to vector<8x8x256xf32>
    %cst = arith.constant dense<0.000000e+00> : vector<8x8xf32>
    %5 = vector.multi_reduction <add>, %4, %cst [2] : vector<8x8x256xf32> to vector<8x8xf32>
    %6 = vector.shape_cast %5 : vector<8x8xf32> to vector<8x8x1xf32>
    %7 = arith.mulf %4, %4 : vector<8x8x256xf32>
    %cst_4 = arith.constant dense<0.000000e+00> : vector<8x8xf32>
    %8 = vector.multi_reduction <add>, %7, %cst_4 [2] : vector<8x8x256xf32> to vector<8x8xf32>
    %9 = vector.shape_cast %8 : vector<8x8xf32> to vector<8x8x1xf32>
    %c0_5 = arith.constant 0 : index
    %c0_6 = arith.constant 0 : index
    %10 = vector.load %arg7[%c0_5, %c0_6] : memref<8x1xf32, #tpu.memory_space<vmem>>, vector<8x1xf32>
    %cst_7 = arith.constant dense<0.000000e+00> : vector<8x1xf32>
    %11 = vector.multi_reduction <add>, %6, %cst_7 [0] : vector<8x8x1xf32> to vector<8x1xf32>
    %12 = arith.addf %10, %11 : vector<8x1xf32>
    %c0_8 = arith.constant 0 : index
    %c0_9 = arith.constant 0 : index
    %13 = vector.load %arg7[%c0_8, %c0_9] : memref<8x1xf32, #tpu.memory_space<vmem>>, vector<8x1xf32>
    tpu.vector_store %arg7[%c0_8, %c0_9], %12 {strides = array<i32>} : memref<8x1xf32, #tpu.memory_space<vmem>>, vector<8x1xf32>,
    %c0_10 = arith.constant 0 : index
    %c0_11 = arith.constant 0 : index
    %14 = vector.load %arg8[%c0_10, %c0_11] : memref<8x1xf32, #tpu.memory_space<vmem>>, vector<8x1xf32>
    %cst_12 = arith.constant dense<0.000000e+00> : vector<8x1xf32>
    %15 = vector.multi_reduction <add>, %9, %cst_12 [0] : vector<8x8x1xf32> to vector<8x1xf32>
    %16 = arith.addf %14, %15 : vector<8x1xf32>
    %c0_13 = arith.constant 0 : index
    %c0_14 = arith.constant 0 : index
    %17 = vector.load %arg8[%c0_13, %c0_14] : memref<8x1xf32, #tpu.memory_space<vmem>>, vector<8x1xf32>
    tpu.vector_store %arg8[%c0_13, %c0_14], %16 {strides = array<i32>} : memref<8x1xf32, #tpu.memory_space<vmem>>, vector<8x1xf32>,
    %c0_i32_15 = arith.constant 0 : i32
    %18 = arith.cmpi eq, %arg1, %c0_i32_15 : i32
    %19 = arith.extui %18 : i1 to i32
    %c0_i32_16 = arith.constant 0 : i32
    %20 = arith.cmpi ne, %19, %c0_i32_16 : i32
    scf.if %20 {
      %c0_17 = arith.constant 0 : index
      %c0_18 = arith.constant 0 : index
      %21 = vector.load %arg7[%c0_17, %c0_18] : memref<8x1xf32, #tpu.memory_space<vmem>>, vector<8x1xf32>
      %cst_19 = arith.constant 4.8828125E-4 : f32
      %22 = vector.broadcast %cst_19 : f32 to vector<8x1xf32>
      %23 = arith.mulf %21, %22 : vector<8x1xf32>
      %c0_20 = arith.constant 0 : index
      %c0_21 = arith.constant 0 : index
      %24 = vector.load %arg8[%c0_20, %c0_21] : memref<8x1xf32, #tpu.memory_space<vmem>>, vector<8x1xf32>
      %cst_22 = arith.constant 4.8828125E-4 : f32
      %25 = vector.broadcast %cst_22 : f32 to vector<8x1xf32>
      %26 = arith.mulf %24, %25 : vector<8x1xf32>
      %27 = arith.mulf %23, %23 : vector<8x1xf32>
      %28 = arith.subf %26, %27 : vector<8x1xf32>
      %cst_23 = arith.constant 9.99999974E-6 : f32
      %29 = vector.broadcast %cst_23 : f32 to vector<8x1xf32>
      %30 = arith.addf %28, %29 : vector<8x1xf32>
      %31 = math.rsqrt %30 : vector<8x1xf32>
      %c0_24 = arith.constant 0 : index
      %c0_25 = arith.constant 0 : index
      %c0_26 = arith.constant 0 : index
      %32 = vector.load %arg3[%c0_24, %c0_25, %c0_26] : memref<1x8x1xf32, #tpu.memory_space<vmem>>, vector<1x8x1xf32>
      %33 = vector.shape_cast %32 : vector<1x8x1xf32> to vector<8x1xf32>
      %c0_27 = arith.constant 0 : index
      %c0_28 = arith.constant 0 : index
      %c0_29 = arith.constant 0 : index
      %34 = vector.load %arg4[%c0_27, %c0_28, %c0_29] : memref<1x8x1xf32, #tpu.memory_space<vmem>>, vector<1x8x1xf32>
      %35 = vector.shape_cast %34 : vector<1x8x1xf32> to vector<8x1xf32>
      %cst_30 = arith.constant 1.000000e+00 : f32
      %36 = vector.broadcast %cst_30 : f32 to vector<8x1xf32>
      %37 = arith.addf %36, %33 : vector<8x1xf32>
      %38 = arith.mulf %37, %31 : vector<8x1xf32>
      %c0_31 = arith.constant 0 : index
      %c0_32 = arith.constant 0 : index
      %c0_33 = arith.constant 0 : index
      %39 = vector.load %arg5[%c0_31, %c0_32, %c0_33] : memref<1x8x1xf32, #tpu.memory_space<vmem>>, vector<1x8x1xf32>
      %40 = vector.shape_cast %39 : vector<1x8x1xf32> to vector<8x1xf32>
      %41 = vector.shape_cast %38 : vector<8x1xf32> to vector<1x8x1xf32>
      tpu.vector_store %arg5[%c0_31, %c0_32, %c0_33], %41 {strides = array<i32>} : memref<1x8x1xf32, #tpu.memory_space<vmem>>, vector<1x8x1xf32>,
      %42 = arith.mulf %38, %23 : vector<8x1xf32>
      %43 = arith.subf %35, %42 : vector<8x1xf32>
      %c0_34 = arith.constant 0 : index
      %c0_35 = arith.constant 0 : index
      %c0_36 = arith.constant 0 : index
      %44 = vector.load %arg6[%c0_34, %c0_35, %c0_36] : memref<1x8x1xf32, #tpu.memory_space<vmem>>, vector<1x8x1xf32>
      %45 = vector.shape_cast %44 : vector<1x8x1xf32> to vector<8x1xf32>
      %46 = vector.shape_cast %43 : vector<8x1xf32> to vector<1x8x1xf32>
      tpu.vector_store %arg6[%c0_34, %c0_35, %c0_36], %46 {strides = array<i32>} : memref<1x8x1xf32, #tpu.memory_space<vmem>>, vector<1x8x1xf32>,
    } else {
    }
    return
  }
  func.func @transform_0(%arg0: i32, %arg1: i32) -> (i32, i32, i32, i32) {
    %c0_i32 = arith.constant 0 : i32
    %c0_i32_0 = arith.constant 0 : i32
    %c0_i32_1 = arith.constant 0 : i32
    return %arg0, %arg1, %c0_i32, %c0_i32_0 : i32, i32, i32, i32
  }
  func.func @transform_1(%arg0: i32, %arg1: i32) -> (i32, i32, i32) {
    %c0_i32 = arith.constant 0 : i32
    %c0_i32_0 = arith.constant 0 : i32
    %c0_i32_1 = arith.constant 0 : i32
    return %arg0, %c0_i32, %c0_i32_0 : i32, i32, i32
  }
  func.func @transform_2(%arg0: i32, %arg1: i32) -> (i32, i32, i32) {
    %c0_i32 = arith.constant 0 : i32
    %c0_i32_0 = arith.constant 0 : i32
    %c0_i32_1 = arith.constant 0 : i32
    return %arg0, %c0_i32, %c0_i32_0 : i32, i32, i32
  }
  func.func @transform_3(%arg0: i32, %arg1: i32) -> (i32, i32, i32) {
    %c0_i32 = arith.constant 0 : i32
    %c0_i32_0 = arith.constant 0 : i32
    %c0_i32_1 = arith.constant 0 : i32
    return %arg0, %c0_i32, %c0_i32_0 : i32, i32, i32
  }
  func.func @transform_4(%arg0: i32, %arg1: i32) -> (i32, i32, i32) {
    %c0_i32 = arith.constant 0 : i32
    %c0_i32_0 = arith.constant 0 : i32
    %c0_i32_1 = arith.constant 0 : i32
    return %arg0, %c0_i32, %c0_i32_0 : i32, i32, i32
  }
}

module attributes {stable_mosaic.version = 11 : i64} {
  func.func @_adain_stats_kernel(%arg0: i32, %arg1: i32, %arg2: memref<1x8x4x256xf32, #tpu.memory_space<vmem>>, %arg3: memref<1x4x1xf32, #tpu.memory_space<vmem>>, %arg4: memref<1x4x1xf32, #tpu.memory_space<vmem>>, %arg5: memref<1x4x1xf32, #tpu.memory_space<vmem>>, %arg6: memref<1x4x1xf32, #tpu.memory_space<vmem>>, %arg7: memref<4x1xf32, #tpu.memory_space<vmem>>, %arg8: memref<4x1xf32, #tpu.memory_space<vmem>>) attributes {dimension_semantics = [#tpu.dimension_semantics<parallel>, #tpu.dimension_semantics<arbitrary>], iteration_bounds = array<i64: 2, 1>, scalar_prefetch = 0 : i64, scratch_operands = 2 : i64, tpu.core_type = #tpu.core_type<tc>, window_params = [{transform_indices = @transform_0, window_bounds = array<i64: 1, 8, 4, 256>}, {transform_indices = @transform_1, window_bounds = array<i64: 1, 4, 1>}, {transform_indices = @transform_2, window_bounds = array<i64: 1, 4, 1>}, {transform_indices = @transform_3, window_bounds = array<i64: 1, 4, 1>}, {transform_indices = @transform_4, window_bounds = array<i64: 1, 4, 1>}]} {
    %c0_i32 = arith.constant 0 : i32
    %0 = arith.cmpi eq, %arg1, %c0_i32 : i32
    %1 = arith.extui %0 : i1 to i32
    %c0_i32_0 = arith.constant 0 : i32
    %2 = arith.cmpi ne, %1, %c0_i32_0 : i32
    scf.if %2 {
      %cst_17 = arith.constant 0.000000e+00 : f32
      %21 = vector.broadcast %cst_17 : f32 to vector<4x1xf32>
      %c0_18 = arith.constant 0 : index
      %c0_19 = arith.constant 0 : index
      %22 = vector.load %arg7[%c0_18, %c0_19] : memref<4x1xf32, #tpu.memory_space<vmem>>, vector<4x1xf32>
      tpu.vector_store %arg7[%c0_18, %c0_19], %21 {strides = array<i32>} : memref<4x1xf32, #tpu.memory_space<vmem>>, vector<4x1xf32>,
      %cst_20 = arith.constant 0.000000e+00 : f32
      %23 = vector.broadcast %cst_20 : f32 to vector<4x1xf32>
      %c0_21 = arith.constant 0 : index
      %c0_22 = arith.constant 0 : index
      %24 = vector.load %arg8[%c0_21, %c0_22] : memref<4x1xf32, #tpu.memory_space<vmem>>, vector<4x1xf32>
      tpu.vector_store %arg8[%c0_21, %c0_22], %23 {strides = array<i32>} : memref<4x1xf32, #tpu.memory_space<vmem>>, vector<4x1xf32>,
    } else {
    }
    %c0 = arith.constant 0 : index
    %c0_1 = arith.constant 0 : index
    %c0_2 = arith.constant 0 : index
    %c0_3 = arith.constant 0 : index
    %3 = vector.load %arg2[%c0, %c0_1, %c0_2, %c0_3] : memref<1x8x4x256xf32, #tpu.memory_space<vmem>>, vector<1x8x4x256xf32>
    %4 = vector.shape_cast %3 : vector<1x8x4x256xf32> to vector<8x4x256xf32>
    %cst = arith.constant dense<0.000000e+00> : vector<8x4xf32>
    %5 = vector.multi_reduction <add>, %4, %cst [2] : vector<8x4x256xf32> to vector<8x4xf32>
    %6 = vector.shape_cast %5 : vector<8x4xf32> to vector<8x4x1xf32>
    %7 = arith.mulf %4, %4 : vector<8x4x256xf32>
    %cst_4 = arith.constant dense<0.000000e+00> : vector<8x4xf32>
    %8 = vector.multi_reduction <add>, %7, %cst_4 [2] : vector<8x4x256xf32> to vector<8x4xf32>
    %9 = vector.shape_cast %8 : vector<8x4xf32> to vector<8x4x1xf32>
    %c0_5 = arith.constant 0 : index
    %c0_6 = arith.constant 0 : index
    %10 = vector.load %arg7[%c0_5, %c0_6] : memref<4x1xf32, #tpu.memory_space<vmem>>, vector<4x1xf32>
    %cst_7 = arith.constant dense<0.000000e+00> : vector<4x1xf32>
    %11 = vector.multi_reduction <add>, %6, %cst_7 [0] : vector<8x4x1xf32> to vector<4x1xf32>
    %12 = arith.addf %10, %11 : vector<4x1xf32>
    %c0_8 = arith.constant 0 : index
    %c0_9 = arith.constant 0 : index
    %13 = vector.load %arg7[%c0_8, %c0_9] : memref<4x1xf32, #tpu.memory_space<vmem>>, vector<4x1xf32>
    tpu.vector_store %arg7[%c0_8, %c0_9], %12 {strides = array<i32>} : memref<4x1xf32, #tpu.memory_space<vmem>>, vector<4x1xf32>,
    %c0_10 = arith.constant 0 : index
    %c0_11 = arith.constant 0 : index
    %14 = vector.load %arg8[%c0_10, %c0_11] : memref<4x1xf32, #tpu.memory_space<vmem>>, vector<4x1xf32>
    %cst_12 = arith.constant dense<0.000000e+00> : vector<4x1xf32>
    %15 = vector.multi_reduction <add>, %9, %cst_12 [0] : vector<8x4x1xf32> to vector<4x1xf32>
    %16 = arith.addf %14, %15 : vector<4x1xf32>
    %c0_13 = arith.constant 0 : index
    %c0_14 = arith.constant 0 : index
    %17 = vector.load %arg8[%c0_13, %c0_14] : memref<4x1xf32, #tpu.memory_space<vmem>>, vector<4x1xf32>
    tpu.vector_store %arg8[%c0_13, %c0_14], %16 {strides = array<i32>} : memref<4x1xf32, #tpu.memory_space<vmem>>, vector<4x1xf32>,
    %c0_i32_15 = arith.constant 0 : i32
    %18 = arith.cmpi eq, %arg1, %c0_i32_15 : i32
    %19 = arith.extui %18 : i1 to i32
    %c0_i32_16 = arith.constant 0 : i32
    %20 = arith.cmpi ne, %19, %c0_i32_16 : i32
    scf.if %20 {
      %c0_17 = arith.constant 0 : index
      %c0_18 = arith.constant 0 : index
      %21 = vector.load %arg7[%c0_17, %c0_18] : memref<4x1xf32, #tpu.memory_space<vmem>>, vector<4x1xf32>
      %cst_19 = arith.constant 4.8828125E-4 : f32
      %22 = vector.broadcast %cst_19 : f32 to vector<4x1xf32>
      %23 = arith.mulf %21, %22 : vector<4x1xf32>
      %c0_20 = arith.constant 0 : index
      %c0_21 = arith.constant 0 : index
      %24 = vector.load %arg8[%c0_20, %c0_21] : memref<4x1xf32, #tpu.memory_space<vmem>>, vector<4x1xf32>
      %cst_22 = arith.constant 4.8828125E-4 : f32
      %25 = vector.broadcast %cst_22 : f32 to vector<4x1xf32>
      %26 = arith.mulf %24, %25 : vector<4x1xf32>
      %27 = arith.mulf %23, %23 : vector<4x1xf32>
      %28 = arith.subf %26, %27 : vector<4x1xf32>
      %cst_23 = arith.constant 9.99999974E-6 : f32
      %29 = vector.broadcast %cst_23 : f32 to vector<4x1xf32>
      %30 = arith.addf %28, %29 : vector<4x1xf32>
      %31 = math.rsqrt %30 : vector<4x1xf32>
      %c0_24 = arith.constant 0 : index
      %c0_25 = arith.constant 0 : index
      %c0_26 = arith.constant 0 : index
      %32 = vector.load %arg3[%c0_24, %c0_25, %c0_26] : memref<1x4x1xf32, #tpu.memory_space<vmem>>, vector<1x4x1xf32>
      %33 = vector.shape_cast %32 : vector<1x4x1xf32> to vector<4x1xf32>
      %c0_27 = arith.constant 0 : index
      %c0_28 = arith.constant 0 : index
      %c0_29 = arith.constant 0 : index
      %34 = vector.load %arg4[%c0_27, %c0_28, %c0_29] : memref<1x4x1xf32, #tpu.memory_space<vmem>>, vector<1x4x1xf32>
      %35 = vector.shape_cast %34 : vector<1x4x1xf32> to vector<4x1xf32>
      %cst_30 = arith.constant 1.000000e+00 : f32
      %36 = vector.broadcast %cst_30 : f32 to vector<4x1xf32>
      %37 = arith.addf %36, %33 : vector<4x1xf32>
      %38 = arith.mulf %37, %31 : vector<4x1xf32>
      %c0_31 = arith.constant 0 : index
      %c0_32 = arith.constant 0 : index
      %c0_33 = arith.constant 0 : index
      %39 = vector.load %arg5[%c0_31, %c0_32, %c0_33] : memref<1x4x1xf32, #tpu.memory_space<vmem>>, vector<1x4x1xf32>
      %40 = vector.shape_cast %39 : vector<1x4x1xf32> to vector<4x1xf32>
      %41 = vector.shape_cast %38 : vector<4x1xf32> to vector<1x4x1xf32>
      tpu.vector_store %arg5[%c0_31, %c0_32, %c0_33], %41 {strides = array<i32>} : memref<1x4x1xf32, #tpu.memory_space<vmem>>, vector<1x4x1xf32>,
      %42 = arith.mulf %38, %23 : vector<4x1xf32>
      %43 = arith.subf %35, %42 : vector<4x1xf32>
      %c0_34 = arith.constant 0 : index
      %c0_35 = arith.constant 0 : index
      %c0_36 = arith.constant 0 : index
      %44 = vector.load %arg6[%c0_34, %c0_35, %c0_36] : memref<1x4x1xf32, #tpu.memory_space<vmem>>, vector<1x4x1xf32>
      %45 = vector.shape_cast %44 : vector<1x4x1xf32> to vector<4x1xf32>
      %46 = vector.shape_cast %43 : vector<4x1xf32> to vector<1x4x1xf32>
      tpu.vector_store %arg6[%c0_34, %c0_35, %c0_36], %46 {strides = array<i32>} : memref<1x4x1xf32, #tpu.memory_space<vmem>>, vector<1x4x1xf32>,
    } else {
    }
    return
  }
  func.func @transform_0(%arg0: i32, %arg1: i32) -> (i32, i32, i32, i32) {
    %c0_i32 = arith.constant 0 : i32
    %c0_i32_0 = arith.constant 0 : i32
    %c0_i32_1 = arith.constant 0 : i32
    return %arg0, %arg1, %c0_i32, %c0_i32_0 : i32, i32, i32, i32
  }
  func.func @transform_1(%arg0: i32, %arg1: i32) -> (i32, i32, i32) {
    %c0_i32 = arith.constant 0 : i32
    %c0_i32_0 = arith.constant 0 : i32
    %c0_i32_1 = arith.constant 0 : i32
    return %arg0, %c0_i32, %c0_i32_0 : i32, i32, i32
  }
  func.func @transform_2(%arg0: i32, %arg1: i32) -> (i32, i32, i32) {
    %c0_i32 = arith.constant 0 : i32
    %c0_i32_0 = arith.constant 0 : i32
    %c0_i32_1 = arith.constant 0 : i32
    return %arg0, %c0_i32, %c0_i32_0 : i32, i32, i32
  }
  func.func @transform_3(%arg0: i32, %arg1: i32) -> (i32, i32, i32) {
    %c0_i32 = arith.constant 0 : i32
    %c0_i32_0 = arith.constant 0 : i32
    %c0_i32_1 = arith.constant 0 : i32
    return %arg0, %c0_i32, %c0_i32_0 : i32, i32, i32
  }
  func.func @transform_4(%arg0: i32, %arg1: i32) -> (i32, i32, i32) {
    %c0_i32 = arith.constant 0 : i32
    %c0_i32_0 = arith.constant 0 : i32
    %c0_i32_1 = arith.constant 0 : i32
    return %arg0, %c0_i32, %c0_i32_0 : i32, i32, i32
  }
}

module attributes {stable_mosaic.version = 11 : i64} {
  func.func @_conv1_kernel(%arg0: i32, %arg1: i32, %arg2: i32, %arg3: memref<1x1x4x256xf32, #tpu.memory_space<vmem>>, %arg4: memref<1x4x1xf32, #tpu.memory_space<vmem>>, %arg5: memref<1x4x1xf32, #tpu.memory_space<vmem>>, %arg6: memref<27x8x4xbf16, #tpu.memory_space<vmem>>, %arg7: memref<8x1xf32, #tpu.memory_space<vmem>>, %arg8: memref<9x1x256xf32, #tpu.memory_space<vmem>>, %arg9: memref<1x1x8x256xf32, #tpu.memory_space<vmem>>, %arg10: memref<8x256xf32, #tpu.memory_space<vmem>>) attributes {dimension_semantics = [#tpu.dimension_semantics<parallel>, #tpu.dimension_semantics<parallel>, #tpu.dimension_semantics<arbitrary>], iteration_bounds = array<i64: 2, 8, 3>, scalar_prefetch = 0 : i64, scratch_operands = 1 : i64, tpu.core_type = #tpu.core_type<tc>, window_params = [{transform_indices = @transform_0, window_bounds = array<i64: 1, 1, 4, 256>}, {transform_indices = @transform_1, window_bounds = array<i64: 1, 4, 1>}, {transform_indices = @transform_2, window_bounds = array<i64: 1, 4, 1>}, {pipeline_mode = #tpu.pipeline_mode<synchronous>, transform_indices = @transform_3, window_bounds = array<i64: 27, 8, 4>}, {pipeline_mode = #tpu.pipeline_mode<synchronous>, transform_indices = @transform_4, window_bounds = array<i64: 8, 1>}, {pipeline_mode = #tpu.pipeline_mode<synchronous>, transform_indices = @transform_5, window_bounds = array<i64: 9, 1, 256>}, {transform_indices = @transform_6, window_bounds = array<i64: 1, 1, 8, 256>}]} {
    %0 = arith.addi %arg1, %arg2 : i32
    %c1_i32 = arith.constant 1 : i32
    %1 = arith.subi %0, %c1_i32 : i32
    %c0_i32 = arith.constant 0 : i32
    %2 = arith.cmpi sge, %1, %c0_i32 : i32
    %c8_i32 = arith.constant 8 : i32
    %3 = arith.cmpi slt, %1, %c8_i32 : i32
    %4 = arith.andi %2, %3 : i1
    %c0_i32_0 = arith.constant 0 : i32
    %5 = arith.cmpi eq, %arg2, %c0_i32_0 : i32
    %6 = arith.extui %5 : i1 to i32
    %c0_i32_1 = arith.constant 0 : i32
    %7 = arith.cmpi ne, %6, %c0_i32_1 : i32
    scf.if %7 {
      %cst = arith.constant 0.000000e+00 : f32
      %13 = vector.broadcast %cst : f32 to vector<8x256xf32>
      %c0 = arith.constant 0 : index
      %c0_4 = arith.constant 0 : index
      %14 = vector.load %arg10[%c0, %c0_4] : memref<8x256xf32, #tpu.memory_space<vmem>>, vector<8x256xf32>
      tpu.vector_store %arg10[%c0, %c0_4], %13 {strides = array<i32>} : memref<8x256xf32, #tpu.memory_space<vmem>>, vector<8x256xf32>,
    } else {
    }
    %8 = arith.extui %4 : i1 to i32
    %c0_i32_2 = arith.constant 0 : i32
    %9 = arith.cmpi ne, %8, %c0_i32_2 : i32
    scf.if %9 {
      %c0 = arith.constant 0 : index
      %c0_4 = arith.constant 0 : index
      %c0_5 = arith.constant 0 : index
      %c0_6 = arith.constant 0 : index
      %13 = vector.load %arg3[%c0, %c0_4, %c0_5, %c0_6] : memref<1x1x4x256xf32, #tpu.memory_space<vmem>>, vector<1x1x4x256xf32>
      %14 = vector.shape_cast %13 : vector<1x1x4x256xf32> to vector<4x256xf32>
      %c0_7 = arith.constant 0 : index
      %c0_8 = arith.constant 0 : index
      %c0_9 = arith.constant 0 : index
      %15 = vector.load %arg4[%c0_7, %c0_8, %c0_9] : memref<1x4x1xf32, #tpu.memory_space<vmem>>, vector<1x4x1xf32>
      %16 = vector.shape_cast %15 : vector<1x4x1xf32> to vector<4x1xf32>
      %17 = vector.broadcast %16 : vector<4x1xf32> to vector<4x256xf32>
      %18 = arith.mulf %14, %17 : vector<4x256xf32>
      %c0_10 = arith.constant 0 : index
      %c0_11 = arith.constant 0 : index
      %c0_12 = arith.constant 0 : index
      %19 = vector.load %arg5[%c0_10, %c0_11, %c0_12] : memref<1x4x1xf32, #tpu.memory_space<vmem>>, vector<1x4x1xf32>
      %20 = vector.shape_cast %19 : vector<1x4x1xf32> to vector<4x1xf32>
      %21 = vector.broadcast %20 : vector<4x1xf32> to vector<4x256xf32>
      %22 = arith.addf %18, %21 : vector<4x256xf32>
      %cst = arith.constant 0.000000e+00 : f32
      %23 = vector.broadcast %cst : f32 to vector<4x256xf32>
      %24 = arith.cmpf oge, %22, %23 : vector<4x256xf32>
      %cst_13 = arith.constant 2.000000e-01 : f32
      %25 = vector.broadcast %cst_13 : f32 to vector<4x256xf32>
      %26 = arith.mulf %25, %22 : vector<4x256xf32>
      %27 = arith.select %24, %22, %26 : vector<4x256xi1>, vector<4x256xf32>
      %cst_14 = arith.constant 0.000000e+00 : f32
      %28 = vector.broadcast %cst_14 : f32 to vector<4x17xf32>
      %29 = vector.extract_strided_slice %27 {offsets = [0, 0], sizes = [4, 239], strides = [1, 1]} : vector<4x256xf32> to vector<4x239xf32>
      %30 = tpu.concatenate %28, %29 in 1 : vector<4x17xf32>, vector<4x239xf32> -> vector<4x256xf32>
      %c0_15 = arith.constant 0 : index
      %c0_16 = arith.constant 0 : index
      %c0_17 = arith.constant 0 : index
      %31 = vector.load %arg8[%c0_15, %c0_16, %c0_17] : memref<9x1x256xf32, #tpu.memory_space<vmem>>, vector<1x1x256xf32>
      %32 = vector.shape_cast %31 : vector<1x1x256xf32> to vector<1x256xf32>
      %33 = vector.broadcast %32 : vector<1x256xf32> to vector<4x256xf32>
      %34 = arith.mulf %30, %33 : vector<4x256xf32>
      %c9_i32 = arith.constant 9 : i32
      %35 = arith.muli %arg2, %c9_i32 : i32
      %c0_i32_18 = arith.constant 0 : i32
      %36 = arith.addi %35, %c0_i32_18 : i32
      %37 = arith.index_cast %36 : i32 to index
      %c0_19 = arith.constant 0 : index
      %c0_20 = arith.constant 0 : index
      %38 = vector.load %arg6[%37, %c0_19, %c0_20] : memref<27x8x4xbf16, #tpu.memory_space<vmem>>, vector<1x8x4xbf16>
      %39 = vector.shape_cast %38 : vector<1x8x4xbf16> to vector<8x4xbf16>
      %c0_21 = arith.constant 0 : index
      %c0_22 = arith.constant 0 : index
      %40 = vector.load %arg10[%c0_21, %c0_22] : memref<8x256xf32, #tpu.memory_space<vmem>>, vector<8x256xf32>
      %41 = arith.truncf %34 : vector<4x256xf32> to vector<4x256xbf16>
      %cst_23 = arith.constant dense<0.000000e+00> : vector<8x256xf32>
      %42 = tpu.matmul %39, %41, %cst_23 {dimension_numbers = #tpu.dot_dimension_numbers<[1], [0], [0], [1], [0, 0, 1, 1], [], []>} : vector<8x4xbf16>, vector<4x256xbf16>, vector<8x256xf32> -> vector<8x256xf32>
      %43 = arith.addf %40, %42 : vector<8x256xf32>
      %c0_24 = arith.constant 0 : index
      %c0_25 = arith.constant 0 : index
      %44 = vector.load %arg10[%c0_24, %c0_25] : memref<8x256xf32, #tpu.memory_space<vmem>>, vector<8x256xf32>
      tpu.vector_store %arg10[%c0_24, %c0_25], %43 {strides = array<i32>} : memref<8x256xf32, #tpu.memory_space<vmem>>, vector<8x256xf32>,
      %cst_26 = arith.constant 0.000000e+00 : f32
      %45 = vector.broadcast %cst_26 : f32 to vector<4x16xf32>
      %46 = vector.extract_strided_slice %27 {offsets = [0, 0], sizes = [4, 240], strides = [1, 1]} : vector<4x256xf32> to vector<4x240xf32>
      %47 = tpu.concatenate %45, %46 in 1 : vector<4x16xf32>, vector<4x240xf32> -> vector<4x256xf32>
      %c1 = arith.constant 1 : index
      %c0_27 = arith.constant 0 : index
      %c0_28 = arith.constant 0 : index
      %48 = vector.load %arg8[%c1, %c0_27, %c0_28] : memref<9x1x256xf32, #tpu.memory_space<vmem>>, vector<1x1x256xf32>
      %49 = vector.shape_cast %48 : vector<1x1x256xf32> to vector<1x256xf32>
      %50 = vector.broadcast %49 : vector<1x256xf32> to vector<4x256xf32>
      %51 = arith.mulf %47, %50 : vector<4x256xf32>
      %c9_i32_29 = arith.constant 9 : i32
      %52 = arith.muli %arg2, %c9_i32_29 : i32
      %c1_i32_30 = arith.constant 1 : i32
      %53 = arith.addi %52, %c1_i32_30 : i32
      %54 = arith.index_cast %53 : i32 to index
      %c0_31 = arith.constant 0 : index
      %c0_32 = arith.constant 0 : index
      %55 = vector.load %arg6[%54, %c0_31, %c0_32] : memref<27x8x4xbf16, #tpu.memory_space<vmem>>, vector<1x8x4xbf16>
      %56 = vector.shape_cast %55 : vector<1x8x4xbf16> to vector<8x4xbf16>
      %c0_33 = arith.constant 0 : index
      %c0_34 = arith.constant 0 : index
      %57 = vector.load %arg10[%c0_33, %c0_34] : memref<8x256xf32, #tpu.memory_space<vmem>>, vector<8x256xf32>
      %58 = arith.truncf %51 : vector<4x256xf32> to vector<4x256xbf16>
      %cst_35 = arith.constant dense<0.000000e+00> : vector<8x256xf32>
      %59 = tpu.matmul %56, %58, %cst_35 {dimension_numbers = #tpu.dot_dimension_numbers<[1], [0], [0], [1], [0, 0, 1, 1], [], []>} : vector<8x4xbf16>, vector<4x256xbf16>, vector<8x256xf32> -> vector<8x256xf32>
      %60 = arith.addf %57, %59 : vector<8x256xf32>
      %c0_36 = arith.constant 0 : index
      %c0_37 = arith.constant 0 : index
      %61 = vector.load %arg10[%c0_36, %c0_37] : memref<8x256xf32, #tpu.memory_space<vmem>>, vector<8x256xf32>
      tpu.vector_store %arg10[%c0_36, %c0_37], %60 {strides = array<i32>} : memref<8x256xf32, #tpu.memory_space<vmem>>, vector<8x256xf32>,
      %cst_38 = arith.constant 0.000000e+00 : f32
      %62 = vector.broadcast %cst_38 : f32 to vector<4x15xf32>
      %63 = vector.extract_strided_slice %27 {offsets = [0, 0], sizes = [4, 241], strides = [1, 1]} : vector<4x256xf32> to vector<4x241xf32>
      %64 = tpu.concatenate %62, %63 in 1 : vector<4x15xf32>, vector<4x241xf32> -> vector<4x256xf32>
      %c2 = arith.constant 2 : index
      %c0_39 = arith.constant 0 : index
      %c0_40 = arith.constant 0 : index
      %65 = vector.load %arg8[%c2, %c0_39, %c0_40] : memref<9x1x256xf32, #tpu.memory_space<vmem>>, vector<1x1x256xf32>
      %66 = vector.shape_cast %65 : vector<1x1x256xf32> to vector<1x256xf32>
      %67 = vector.broadcast %66 : vector<1x256xf32> to vector<4x256xf32>
      %68 = arith.mulf %64, %67 : vector<4x256xf32>
      %c9_i32_41 = arith.constant 9 : i32
      %69 = arith.muli %arg2, %c9_i32_41 : i32
      %c2_i32_42 = arith.constant 2 : i32
      %70 = arith.addi %69, %c2_i32_42 : i32
      %71 = arith.index_cast %70 : i32 to index
      %c0_43 = arith.constant 0 : index
      %c0_44 = arith.constant 0 : index
      %72 = vector.load %arg6[%71, %c0_43, %c0_44] : memref<27x8x4xbf16, #tpu.memory_space<vmem>>, vector<1x8x4xbf16>
      %73 = vector.shape_cast %72 : vector<1x8x4xbf16> to vector<8x4xbf16>
      %c0_45 = arith.constant 0 : index
      %c0_46 = arith.constant 0 : index
      %74 = vector.load %arg10[%c0_45, %c0_46] : memref<8x256xf32, #tpu.memory_space<vmem>>, vector<8x256xf32>
      %75 = arith.truncf %68 : vector<4x256xf32> to vector<4x256xbf16>
      %cst_47 = arith.constant dense<0.000000e+00> : vector<8x256xf32>
      %76 = tpu.matmul %73, %75, %cst_47 {dimension_numbers = #tpu.dot_dimension_numbers<[1], [0], [0], [1], [0, 0, 1, 1], [], []>} : vector<8x4xbf16>, vector<4x256xbf16>, vector<8x256xf32> -> vector<8x256xf32>
      %77 = arith.addf %74, %76 : vector<8x256xf32>
      %c0_48 = arith.constant 0 : index
      %c0_49 = arith.constant 0 : index
      %78 = vector.load %arg10[%c0_48, %c0_49] : memref<8x256xf32, #tpu.memory_space<vmem>>, vector<8x256xf32>
      tpu.vector_store %arg10[%c0_48, %c0_49], %77 {strides = array<i32>} : memref<8x256xf32, #tpu.memory_space<vmem>>, vector<8x256xf32>,
      %cst_50 = arith.constant 0.000000e+00 : f32
      %79 = vector.broadcast %cst_50 : f32 to vector<4x1xf32>
      %80 = vector.extract_strided_slice %27 {offsets = [0, 0], sizes = [4, 255], strides = [1, 1]} : vector<4x256xf32> to vector<4x255xf32>
      %81 = tpu.concatenate %79, %80 in 1 : vector<4x1xf32>, vector<4x255xf32> -> vector<4x256xf32>
      %c3 = arith.constant 3 : index
      %c0_51 = arith.constant 0 : index
      %c0_52 = arith.constant 0 : index
      %82 = vector.load %arg8[%c3, %c0_51, %c0_52] : memref<9x1x256xf32, #tpu.memory_space<vmem>>, vector<1x1x256xf32>
      %83 = vector.shape_cast %82 : vector<1x1x256xf32> to vector<1x256xf32>
      %84 = vector.broadcast %83 : vector<1x256xf32> to vector<4x256xf32>
      %85 = arith.mulf %81, %84 : vector<4x256xf32>
      %c9_i32_53 = arith.constant 9 : i32
      %86 = arith.muli %arg2, %c9_i32_53 : i32
      %c3_i32 = arith.constant 3 : i32
      %87 = arith.addi %86, %c3_i32 : i32
      %88 = arith.index_cast %87 : i32 to index
      %c0_54 = arith.constant 0 : index
      %c0_55 = arith.constant 0 : index
      %89 = vector.load %arg6[%88, %c0_54, %c0_55] : memref<27x8x4xbf16, #tpu.memory_space<vmem>>, vector<1x8x4xbf16>
      %90 = vector.shape_cast %89 : vector<1x8x4xbf16> to vector<8x4xbf16>
      %c0_56 = arith.constant 0 : index
      %c0_57 = arith.constant 0 : index
      %91 = vector.load %arg10[%c0_56, %c0_57] : memref<8x256xf32, #tpu.memory_space<vmem>>, vector<8x256xf32>
      %92 = arith.truncf %85 : vector<4x256xf32> to vector<4x256xbf16>
      %cst_58 = arith.constant dense<0.000000e+00> : vector<8x256xf32>
      %93 = tpu.matmul %90, %92, %cst_58 {dimension_numbers = #tpu.dot_dimension_numbers<[1], [0], [0], [1], [0, 0, 1, 1], [], []>} : vector<8x4xbf16>, vector<4x256xbf16>, vector<8x256xf32> -> vector<8x256xf32>
      %94 = arith.addf %91, %93 : vector<8x256xf32>
      %c0_59 = arith.constant 0 : index
      %c0_60 = arith.constant 0 : index
      %95 = vector.load %arg10[%c0_59, %c0_60] : memref<8x256xf32, #tpu.memory_space<vmem>>, vector<8x256xf32>
      tpu.vector_store %arg10[%c0_59, %c0_60], %94 {strides = array<i32>} : memref<8x256xf32, #tpu.memory_space<vmem>>, vector<8x256xf32>,
      %c4 = arith.constant 4 : index
      %c0_61 = arith.constant 0 : index
      %c0_62 = arith.constant 0 : index
      %96 = vector.load %arg8[%c4, %c0_61, %c0_62] : memref<9x1x256xf32, #tpu.memory_space<vmem>>, vector<1x1x256xf32>
      %97 = vector.shape_cast %96 : vector<1x1x256xf32> to vector<1x256xf32>
      %98 = vector.broadcast %97 : vector<1x256xf32> to vector<4x256xf32>
      %99 = arith.mulf %27, %98 : vector<4x256xf32>
      %c9_i32_63 = arith.constant 9 : i32
      %100 = arith.muli %arg2, %c9_i32_63 : i32
      %c4_i32 = arith.constant 4 : i32
      %101 = arith.addi %100, %c4_i32 : i32
      %102 = arith.index_cast %101 : i32 to index
      %c0_64 = arith.constant 0 : index
      %c0_65 = arith.constant 0 : index
      %103 = vector.load %arg6[%102, %c0_64, %c0_65] : memref<27x8x4xbf16, #tpu.memory_space<vmem>>, vector<1x8x4xbf16>
      %104 = vector.shape_cast %103 : vector<1x8x4xbf16> to vector<8x4xbf16>
      %c0_66 = arith.constant 0 : index
      %c0_67 = arith.constant 0 : index
      %105 = vector.load %arg10[%c0_66, %c0_67] : memref<8x256xf32, #tpu.memory_space<vmem>>, vector<8x256xf32>
      %106 = arith.truncf %99 : vector<4x256xf32> to vector<4x256xbf16>
      %cst_68 = arith.constant dense<0.000000e+00> : vector<8x256xf32>
      %107 = tpu.matmul %104, %106, %cst_68 {dimension_numbers = #tpu.dot_dimension_numbers<[1], [0], [0], [1], [0, 0, 1, 1], [], []>} : vector<8x4xbf16>, vector<4x256xbf16>, vector<8x256xf32> -> vector<8x256xf32>
      %108 = arith.addf %105, %107 : vector<8x256xf32>
      %c0_69 = arith.constant 0 : index
      %c0_70 = arith.constant 0 : index
      %109 = vector.load %arg10[%c0_69, %c0_70] : memref<8x256xf32, #tpu.memory_space<vmem>>, vector<8x256xf32>
      tpu.vector_store %arg10[%c0_69, %c0_70], %108 {strides = array<i32>} : memref<8x256xf32, #tpu.memory_space<vmem>>, vector<8x256xf32>,
      %cst_71 = arith.constant 0.000000e+00 : f32
      %110 = vector.broadcast %cst_71 : f32 to vector<4x1xf32>
      %111 = vector.extract_strided_slice %27 {offsets = [0, 1], sizes = [4, 255], strides = [1, 1]} : vector<4x256xf32> to vector<4x255xf32>
      %112 = tpu.concatenate %111, %110 in 1 : vector<4x255xf32>, vector<4x1xf32> -> vector<4x256xf32>
      %c5 = arith.constant 5 : index
      %c0_72 = arith.constant 0 : index
      %c0_73 = arith.constant 0 : index
      %113 = vector.load %arg8[%c5, %c0_72, %c0_73] : memref<9x1x256xf32, #tpu.memory_space<vmem>>, vector<1x1x256xf32>
      %114 = vector.shape_cast %113 : vector<1x1x256xf32> to vector<1x256xf32>
      %115 = vector.broadcast %114 : vector<1x256xf32> to vector<4x256xf32>
      %116 = arith.mulf %112, %115 : vector<4x256xf32>
      %c9_i32_74 = arith.constant 9 : i32
      %117 = arith.muli %arg2, %c9_i32_74 : i32
      %c5_i32 = arith.constant 5 : i32
      %118 = arith.addi %117, %c5_i32 : i32
      %119 = arith.index_cast %118 : i32 to index
      %c0_75 = arith.constant 0 : index
      %c0_76 = arith.constant 0 : index
      %120 = vector.load %arg6[%119, %c0_75, %c0_76] : memref<27x8x4xbf16, #tpu.memory_space<vmem>>, vector<1x8x4xbf16>
      %121 = vector.shape_cast %120 : vector<1x8x4xbf16> to vector<8x4xbf16>
      %c0_77 = arith.constant 0 : index
      %c0_78 = arith.constant 0 : index
      %122 = vector.load %arg10[%c0_77, %c0_78] : memref<8x256xf32, #tpu.memory_space<vmem>>, vector<8x256xf32>
      %123 = arith.truncf %116 : vector<4x256xf32> to vector<4x256xbf16>
      %cst_79 = arith.constant dense<0.000000e+00> : vector<8x256xf32>
      %124 = tpu.matmul %121, %123, %cst_79 {dimension_numbers = #tpu.dot_dimension_numbers<[1], [0], [0], [1], [0, 0, 1, 1], [], []>} : vector<8x4xbf16>, vector<4x256xbf16>, vector<8x256xf32> -> vector<8x256xf32>
      %125 = arith.addf %122, %124 : vector<8x256xf32>
      %c0_80 = arith.constant 0 : index
      %c0_81 = arith.constant 0 : index
      %126 = vector.load %arg10[%c0_80, %c0_81] : memref<8x256xf32, #tpu.memory_space<vmem>>, vector<8x256xf32>
      tpu.vector_store %arg10[%c0_80, %c0_81], %125 {strides = array<i32>} : memref<8x256xf32, #tpu.memory_space<vmem>>, vector<8x256xf32>,
      %cst_82 = arith.constant 0.000000e+00 : f32
      %127 = vector.broadcast %cst_82 : f32 to vector<4x15xf32>
      %128 = vector.extract_strided_slice %27 {offsets = [0, 15], sizes = [4, 241], strides = [1, 1]} : vector<4x256xf32> to vector<4x241xf32>
      %129 = tpu.concatenate %128, %127 in 1 : vector<4x241xf32>, vector<4x15xf32> -> vector<4x256xf32>
      %c6 = arith.constant 6 : index
      %c0_83 = arith.constant 0 : index
      %c0_84 = arith.constant 0 : index
      %130 = vector.load %arg8[%c6, %c0_83, %c0_84] : memref<9x1x256xf32, #tpu.memory_space<vmem>>, vector<1x1x256xf32>
      %131 = vector.shape_cast %130 : vector<1x1x256xf32> to vector<1x256xf32>
      %132 = vector.broadcast %131 : vector<1x256xf32> to vector<4x256xf32>
      %133 = arith.mulf %129, %132 : vector<4x256xf32>
      %c9_i32_85 = arith.constant 9 : i32
      %134 = arith.muli %arg2, %c9_i32_85 : i32
      %c6_i32 = arith.constant 6 : i32
      %135 = arith.addi %134, %c6_i32 : i32
      %136 = arith.index_cast %135 : i32 to index
      %c0_86 = arith.constant 0 : index
      %c0_87 = arith.constant 0 : index
      %137 = vector.load %arg6[%136, %c0_86, %c0_87] : memref<27x8x4xbf16, #tpu.memory_space<vmem>>, vector<1x8x4xbf16>
      %138 = vector.shape_cast %137 : vector<1x8x4xbf16> to vector<8x4xbf16>
      %c0_88 = arith.constant 0 : index
      %c0_89 = arith.constant 0 : index
      %139 = vector.load %arg10[%c0_88, %c0_89] : memref<8x256xf32, #tpu.memory_space<vmem>>, vector<8x256xf32>
      %140 = arith.truncf %133 : vector<4x256xf32> to vector<4x256xbf16>
      %cst_90 = arith.constant dense<0.000000e+00> : vector<8x256xf32>
      %141 = tpu.matmul %138, %140, %cst_90 {dimension_numbers = #tpu.dot_dimension_numbers<[1], [0], [0], [1], [0, 0, 1, 1], [], []>} : vector<8x4xbf16>, vector<4x256xbf16>, vector<8x256xf32> -> vector<8x256xf32>
      %142 = arith.addf %139, %141 : vector<8x256xf32>
      %c0_91 = arith.constant 0 : index
      %c0_92 = arith.constant 0 : index
      %143 = vector.load %arg10[%c0_91, %c0_92] : memref<8x256xf32, #tpu.memory_space<vmem>>, vector<8x256xf32>
      tpu.vector_store %arg10[%c0_91, %c0_92], %142 {strides = array<i32>} : memref<8x256xf32, #tpu.memory_space<vmem>>, vector<8x256xf32>,
      %cst_93 = arith.constant 0.000000e+00 : f32
      %144 = vector.broadcast %cst_93 : f32 to vector<4x16xf32>
      %145 = vector.extract_strided_slice %27 {offsets = [0, 16], sizes = [4, 240], strides = [1, 1]} : vector<4x256xf32> to vector<4x240xf32>
      %146 = tpu.concatenate %145, %144 in 1 : vector<4x240xf32>, vector<4x16xf32> -> vector<4x256xf32>
      %c7 = arith.constant 7 : index
      %c0_94 = arith.constant 0 : index
      %c0_95 = arith.constant 0 : index
      %147 = vector.load %arg8[%c7, %c0_94, %c0_95] : memref<9x1x256xf32, #tpu.memory_space<vmem>>, vector<1x1x256xf32>
      %148 = vector.shape_cast %147 : vector<1x1x256xf32> to vector<1x256xf32>
      %149 = vector.broadcast %148 : vector<1x256xf32> to vector<4x256xf32>
      %150 = arith.mulf %146, %149 : vector<4x256xf32>
      %c9_i32_96 = arith.constant 9 : i32
      %151 = arith.muli %arg2, %c9_i32_96 : i32
      %c7_i32 = arith.constant 7 : i32
      %152 = arith.addi %151, %c7_i32 : i32
      %153 = arith.index_cast %152 : i32 to index
      %c0_97 = arith.constant 0 : index
      %c0_98 = arith.constant 0 : index
      %154 = vector.load %arg6[%153, %c0_97, %c0_98] : memref<27x8x4xbf16, #tpu.memory_space<vmem>>, vector<1x8x4xbf16>
      %155 = vector.shape_cast %154 : vector<1x8x4xbf16> to vector<8x4xbf16>
      %c0_99 = arith.constant 0 : index
      %c0_100 = arith.constant 0 : index
      %156 = vector.load %arg10[%c0_99, %c0_100] : memref<8x256xf32, #tpu.memory_space<vmem>>, vector<8x256xf32>
      %157 = arith.truncf %150 : vector<4x256xf32> to vector<4x256xbf16>
      %cst_101 = arith.constant dense<0.000000e+00> : vector<8x256xf32>
      %158 = tpu.matmul %155, %157, %cst_101 {dimension_numbers = #tpu.dot_dimension_numbers<[1], [0], [0], [1], [0, 0, 1, 1], [], []>} : vector<8x4xbf16>, vector<4x256xbf16>, vector<8x256xf32> -> vector<8x256xf32>
      %159 = arith.addf %156, %158 : vector<8x256xf32>
      %c0_102 = arith.constant 0 : index
      %c0_103 = arith.constant 0 : index
      %160 = vector.load %arg10[%c0_102, %c0_103] : memref<8x256xf32, #tpu.memory_space<vmem>>, vector<8x256xf32>
      tpu.vector_store %arg10[%c0_102, %c0_103], %159 {strides = array<i32>} : memref<8x256xf32, #tpu.memory_space<vmem>>, vector<8x256xf32>,
      %cst_104 = arith.constant 0.000000e+00 : f32
      %161 = vector.broadcast %cst_104 : f32 to vector<4x17xf32>
      %162 = vector.extract_strided_slice %27 {offsets = [0, 17], sizes = [4, 239], strides = [1, 1]} : vector<4x256xf32> to vector<4x239xf32>
      %163 = tpu.concatenate %162, %161 in 1 : vector<4x239xf32>, vector<4x17xf32> -> vector<4x256xf32>
      %c8 = arith.constant 8 : index
      %c0_105 = arith.constant 0 : index
      %c0_106 = arith.constant 0 : index
      %164 = vector.load %arg8[%c8, %c0_105, %c0_106] : memref<9x1x256xf32, #tpu.memory_space<vmem>>, vector<1x1x256xf32>
      %165 = vector.shape_cast %164 : vector<1x1x256xf32> to vector<1x256xf32>
      %166 = vector.broadcast %165 : vector<1x256xf32> to vector<4x256xf32>
      %167 = arith.mulf %163, %166 : vector<4x256xf32>
      %c9_i32_107 = arith.constant 9 : i32
      %168 = arith.muli %arg2, %c9_i32_107 : i32
      %c8_i32_108 = arith.constant 8 : i32
      %169 = arith.addi %168, %c8_i32_108 : i32
      %170 = arith.index_cast %169 : i32 to index
      %c0_109 = arith.constant 0 : index
      %c0_110 = arith.constant 0 : index
      %171 = vector.load %arg6[%170, %c0_109, %c0_110] : memref<27x8x4xbf16, #tpu.memory_space<vmem>>, vector<1x8x4xbf16>
      %172 = vector.shape_cast %171 : vector<1x8x4xbf16> to vector<8x4xbf16>
      %c0_111 = arith.constant 0 : index
      %c0_112 = arith.constant 0 : index
      %173 = vector.load %arg10[%c0_111, %c0_112] : memref<8x256xf32, #tpu.memory_space<vmem>>, vector<8x256xf32>
      %174 = arith.truncf %167 : vector<4x256xf32> to vector<4x256xbf16>
      %cst_113 = arith.constant dense<0.000000e+00> : vector<8x256xf32>
      %175 = tpu.matmul %172, %174, %cst_113 {dimension_numbers = #tpu.dot_dimension_numbers<[1], [0], [0], [1], [0, 0, 1, 1], [], []>} : vector<8x4xbf16>, vector<4x256xbf16>, vector<8x256xf32> -> vector<8x256xf32>
      %176 = arith.addf %173, %175 : vector<8x256xf32>
      %c0_114 = arith.constant 0 : index
      %c0_115 = arith.constant 0 : index
      %177 = vector.load %arg10[%c0_114, %c0_115] : memref<8x256xf32, #tpu.memory_space<vmem>>, vector<8x256xf32>
      tpu.vector_store %arg10[%c0_114, %c0_115], %176 {strides = array<i32>} : memref<8x256xf32, #tpu.memory_space<vmem>>, vector<8x256xf32>,
    } else {
    }
    %c2_i32 = arith.constant 2 : i32
    %10 = arith.cmpi eq, %arg2, %c2_i32 : i32
    %11 = arith.extui %10 : i1 to i32
    %c0_i32_3 = arith.constant 0 : i32
    %12 = arith.cmpi ne, %11, %c0_i32_3 : i32
    scf.if %12 {
      %c0 = arith.constant 0 : index
      %c0_4 = arith.constant 0 : index
      %13 = vector.load %arg10[%c0, %c0_4] : memref<8x256xf32, #tpu.memory_space<vmem>>, vector<8x256xf32>
      %c0_5 = arith.constant 0 : index
      %c0_6 = arith.constant 0 : index
      %14 = vector.load %arg7[%c0_5, %c0_6] : memref<8x1xf32, #tpu.memory_space<vmem>>, vector<8x1xf32>
      %15 = vector.broadcast %14 : vector<8x1xf32> to vector<8x256xf32>
      %16 = arith.addf %13, %15 : vector<8x256xf32>
      %c0_7 = arith.constant 0 : index
      %c0_8 = arith.constant 0 : index
      %c0_9 = arith.constant 0 : index
      %c0_10 = arith.constant 0 : index
      %17 = vector.load %arg9[%c0_7, %c0_8, %c0_9, %c0_10] : memref<1x1x8x256xf32, #tpu.memory_space<vmem>>, vector<1x1x8x256xf32>
      %18 = vector.shape_cast %17 : vector<1x1x8x256xf32> to vector<8x256xf32>
      %19 = vector.shape_cast %16 : vector<8x256xf32> to vector<1x1x8x256xf32>
      tpu.vector_store %arg9[%c0_7, %c0_8, %c0_9, %c0_10], %19 {strides = array<i32>} : memref<1x1x8x256xf32, #tpu.memory_space<vmem>>, vector<1x1x8x256xf32>,
    } else {
    }
    return
  }
  func.func @transform_0(%arg0: i32, %arg1: i32, %arg2: i32) -> (i32, i32, i32, i32) {
    %0 = arith.addi %arg1, %arg2 : i32
    %c1_i32 = arith.constant 1 : i32
    %1 = arith.subi %0, %c1_i32 : i32
    %c0_i32 = arith.constant 0 : i32
    %c7_i32 = arith.constant 7 : i32
    %2 = arith.maxsi %c0_i32, %1 : i32
    %3 = arith.minsi %c7_i32, %2 : i32
    %c0_i32_0 = arith.constant 0 : i32
    %c0_i32_1 = arith.constant 0 : i32
    %c0_i32_2 = arith.constant 0 : i32
    return %arg0, %3, %c0_i32_0, %c0_i32_1 : i32, i32, i32, i32
  }
  func.func @transform_1(%arg0: i32, %arg1: i32, %arg2: i32) -> (i32, i32, i32) {
    %c0_i32 = arith.constant 0 : i32
    %c0_i32_0 = arith.constant 0 : i32
    %c0_i32_1 = arith.constant 0 : i32
    return %arg0, %c0_i32, %c0_i32_0 : i32, i32, i32
  }
  func.func @transform_2(%arg0: i32, %arg1: i32, %arg2: i32) -> (i32, i32, i32) {
    %c0_i32 = arith.constant 0 : i32
    %c0_i32_0 = arith.constant 0 : i32
    %c0_i32_1 = arith.constant 0 : i32
    return %arg0, %c0_i32, %c0_i32_0 : i32, i32, i32
  }
  func.func @transform_3(%arg0: i32, %arg1: i32, %arg2: i32) -> (i32, i32, i32) {
    %c0_i32 = arith.constant 0 : i32
    %c0_i32_0 = arith.constant 0 : i32
    %c0_i32_1 = arith.constant 0 : i32
    %c0_i32_2 = arith.constant 0 : i32
    return %c0_i32, %c0_i32_0, %c0_i32_1 : i32, i32, i32
  }
  func.func @transform_4(%arg0: i32, %arg1: i32, %arg2: i32) -> (i32, i32) {
    %c0_i32 = arith.constant 0 : i32
    %c0_i32_0 = arith.constant 0 : i32
    %c0_i32_1 = arith.constant 0 : i32
    return %c0_i32, %c0_i32_0 : i32, i32
  }
  func.func @transform_5(%arg0: i32, %arg1: i32, %arg2: i32) -> (i32, i32, i32) {
    %c0_i32 = arith.constant 0 : i32
    %c0_i32_0 = arith.constant 0 : i32
    %c0_i32_1 = arith.constant 0 : i32
    %c0_i32_2 = arith.constant 0 : i32
    return %c0_i32, %c0_i32_0, %c0_i32_1 : i32, i32, i32
  }
  func.func @transform_6(%arg0: i32, %arg1: i32, %arg2: i32) -> (i32, i32, i32, i32) {
    %c0_i32 = arith.constant 0 : i32
    %c0_i32_0 = arith.constant 0 : i32
    %c0_i32_1 = arith.constant 0 : i32
    return %arg0, %arg1, %c0_i32, %c0_i32_0 : i32, i32, i32, i32
  }
}

module attributes {stable_mosaic.version = 11 : i64} {
  func.func @_conv2_kernel(%arg0: i32, %arg1: i32, %arg2: i32, %arg3: memref<1x1x8x256xf32, #tpu.memory_space<vmem>>, %arg4: memref<1x8x1xf32, #tpu.memory_space<vmem>>, %arg5: memref<1x8x1xf32, #tpu.memory_space<vmem>>, %arg6: memref<27x8x8xbf16, #tpu.memory_space<vmem>>, %arg7: memref<8x1xf32, #tpu.memory_space<vmem>>, %arg8: memref<9x1x256xf32, #tpu.memory_space<vmem>>, %arg9: memref<1x1x4x256xf32, #tpu.memory_space<vmem>>, %arg10: memref<8x4xbf16, #tpu.memory_space<vmem>>, %arg11: memref<1x1x8x256xf32, #tpu.memory_space<vmem>>, %arg12: memref<8x256xf32, #tpu.memory_space<vmem>>) attributes {dimension_semantics = [#tpu.dimension_semantics<parallel>, #tpu.dimension_semantics<parallel>, #tpu.dimension_semantics<arbitrary>], iteration_bounds = array<i64: 2, 8, 3>, scalar_prefetch = 0 : i64, scratch_operands = 1 : i64, tpu.core_type = #tpu.core_type<tc>, window_params = [{transform_indices = @transform_0, window_bounds = array<i64: 1, 1, 8, 256>}, {transform_indices = @transform_1, window_bounds = array<i64: 1, 8, 1>}, {transform_indices = @transform_2, window_bounds = array<i64: 1, 8, 1>}, {pipeline_mode = #tpu.pipeline_mode<synchronous>, transform_indices = @transform_3, window_bounds = array<i64: 27, 8, 8>}, {pipeline_mode = #tpu.pipeline_mode<synchronous>, transform_indices = @transform_4, window_bounds = array<i64: 8, 1>}, {pipeline_mode = #tpu.pipeline_mode<synchronous>, transform_indices = @transform_5, window_bounds = array<i64: 9, 1, 256>}, {transform_indices = @transform_6, window_bounds = array<i64: 1, 1, 4, 256>}, {pipeline_mode = #tpu.pipeline_mode<synchronous>, transform_indices = @transform_7, window_bounds = array<i64: 8, 4>}, {transform_indices = @transform_8, window_bounds = array<i64: 1, 1, 8, 256>}]} {
    %0 = arith.addi %arg1, %arg2 : i32
    %c1_i32 = arith.constant 1 : i32
    %1 = arith.subi %0, %c1_i32 : i32
    %c0_i32 = arith.constant 0 : i32
    %2 = arith.cmpi sge, %1, %c0_i32 : i32
    %c8_i32 = arith.constant 8 : i32
    %3 = arith.cmpi slt, %1, %c8_i32 : i32
    %4 = arith.andi %2, %3 : i1
    %c0_i32_0 = arith.constant 0 : i32
    %5 = arith.cmpi eq, %arg2, %c0_i32_0 : i32
    %6 = arith.extui %5 : i1 to i32
    %c0_i32_1 = arith.constant 0 : i32
    %7 = arith.cmpi ne, %6, %c0_i32_1 : i32
    scf.if %7 {
      %cst = arith.constant 0.000000e+00 : f32
      %13 = vector.broadcast %cst : f32 to vector<8x256xf32>
      %c0 = arith.constant 0 : index
      %c0_4 = arith.constant 0 : index
      %14 = vector.load %arg12[%c0, %c0_4] : memref<8x256xf32, #tpu.memory_space<vmem>>, vector<8x256xf32>
      tpu.vector_store %arg12[%c0, %c0_4], %13 {strides = array<i32>} : memref<8x256xf32, #tpu.memory_space<vmem>>, vector<8x256xf32>,
    } else {
    }
    %8 = arith.extui %4 : i1 to i32
    %c0_i32_2 = arith.constant 0 : i32
    %9 = arith.cmpi ne, %8, %c0_i32_2 : i32
    scf.if %9 {
      %c0 = arith.constant 0 : index
      %c0_4 = arith.constant 0 : index
      %c0_5 = arith.constant 0 : index
      %c0_6 = arith.constant 0 : index
      %13 = vector.load %arg3[%c0, %c0_4, %c0_5, %c0_6] : memref<1x1x8x256xf32, #tpu.memory_space<vmem>>, vector<1x1x8x256xf32>
      %14 = vector.shape_cast %13 : vector<1x1x8x256xf32> to vector<8x256xf32>
      %c0_7 = arith.constant 0 : index
      %c0_8 = arith.constant 0 : index
      %c0_9 = arith.constant 0 : index
      %15 = vector.load %arg4[%c0_7, %c0_8, %c0_9] : memref<1x8x1xf32, #tpu.memory_space<vmem>>, vector<1x8x1xf32>
      %16 = vector.shape_cast %15 : vector<1x8x1xf32> to vector<8x1xf32>
      %17 = vector.broadcast %16 : vector<8x1xf32> to vector<8x256xf32>
      %18 = arith.mulf %14, %17 : vector<8x256xf32>
      %c0_10 = arith.constant 0 : index
      %c0_11 = arith.constant 0 : index
      %c0_12 = arith.constant 0 : index
      %19 = vector.load %arg5[%c0_10, %c0_11, %c0_12] : memref<1x8x1xf32, #tpu.memory_space<vmem>>, vector<1x8x1xf32>
      %20 = vector.shape_cast %19 : vector<1x8x1xf32> to vector<8x1xf32>
      %21 = vector.broadcast %20 : vector<8x1xf32> to vector<8x256xf32>
      %22 = arith.addf %18, %21 : vector<8x256xf32>
      %cst = arith.constant 0.000000e+00 : f32
      %23 = vector.broadcast %cst : f32 to vector<8x256xf32>
      %24 = arith.cmpf oge, %22, %23 : vector<8x256xf32>
      %cst_13 = arith.constant 2.000000e-01 : f32
      %25 = vector.broadcast %cst_13 : f32 to vector<8x256xf32>
      %26 = arith.mulf %25, %22 : vector<8x256xf32>
      %27 = arith.select %24, %22, %26 : vector<8x256xi1>, vector<8x256xf32>
      %cst_14 = arith.constant 0.000000e+00 : f32
      %28 = vector.broadcast %cst_14 : f32 to vector<8x17xf32>
      %29 = vector.extract_strided_slice %27 {offsets = [0, 0], sizes = [8, 239], strides = [1, 1]} : vector<8x256xf32> to vector<8x239xf32>
      %30 = tpu.concatenate %28, %29 in 1 : vector<8x17xf32>, vector<8x239xf32> -> vector<8x256xf32>
      %c0_15 = arith.constant 0 : index
      %c0_16 = arith.constant 0 : index
      %c0_17 = arith.constant 0 : index
      %31 = vector.load %arg8[%c0_15, %c0_16, %c0_17] : memref<9x1x256xf32, #tpu.memory_space<vmem>>, vector<1x1x256xf32>
      %32 = vector.shape_cast %31 : vector<1x1x256xf32> to vector<1x256xf32>
      %33 = vector.broadcast %32 : vector<1x256xf32> to vector<8x256xf32>
      %34 = arith.mulf %30, %33 : vector<8x256xf32>
      %c9_i32 = arith.constant 9 : i32
      %35 = arith.muli %arg2, %c9_i32 : i32
      %c0_i32_18 = arith.constant 0 : i32
      %36 = arith.addi %35, %c0_i32_18 : i32
      %37 = arith.index_cast %36 : i32 to index
      %c0_19 = arith.constant 0 : index
      %c0_20 = arith.constant 0 : index
      %38 = vector.load %arg6[%37, %c0_19, %c0_20] : memref<27x8x8xbf16, #tpu.memory_space<vmem>>, vector<1x8x8xbf16>
      %39 = vector.shape_cast %38 : vector<1x8x8xbf16> to vector<8x8xbf16>
      %c0_21 = arith.constant 0 : index
      %c0_22 = arith.constant 0 : index
      %40 = vector.load %arg12[%c0_21, %c0_22] : memref<8x256xf32, #tpu.memory_space<vmem>>, vector<8x256xf32>
      %41 = arith.truncf %34 : vector<8x256xf32> to vector<8x256xbf16>
      %cst_23 = arith.constant dense<0.000000e+00> : vector<8x256xf32>
      %42 = tpu.matmul %39, %41, %cst_23 {dimension_numbers = #tpu.dot_dimension_numbers<[1], [0], [0], [1], [0, 0, 1, 1], [], []>} : vector<8x8xbf16>, vector<8x256xbf16>, vector<8x256xf32> -> vector<8x256xf32>
      %43 = arith.addf %40, %42 : vector<8x256xf32>
      %c0_24 = arith.constant 0 : index
      %c0_25 = arith.constant 0 : index
      %44 = vector.load %arg12[%c0_24, %c0_25] : memref<8x256xf32, #tpu.memory_space<vmem>>, vector<8x256xf32>
      tpu.vector_store %arg12[%c0_24, %c0_25], %43 {strides = array<i32>} : memref<8x256xf32, #tpu.memory_space<vmem>>, vector<8x256xf32>,
      %cst_26 = arith.constant 0.000000e+00 : f32
      %45 = vector.broadcast %cst_26 : f32 to vector<8x16xf32>
      %46 = vector.extract_strided_slice %27 {offsets = [0, 0], sizes = [8, 240], strides = [1, 1]} : vector<8x256xf32> to vector<8x240xf32>
      %47 = tpu.concatenate %45, %46 in 1 : vector<8x16xf32>, vector<8x240xf32> -> vector<8x256xf32>
      %c1 = arith.constant 1 : index
      %c0_27 = arith.constant 0 : index
      %c0_28 = arith.constant 0 : index
      %48 = vector.load %arg8[%c1, %c0_27, %c0_28] : memref<9x1x256xf32, #tpu.memory_space<vmem>>, vector<1x1x256xf32>
      %49 = vector.shape_cast %48 : vector<1x1x256xf32> to vector<1x256xf32>
      %50 = vector.broadcast %49 : vector<1x256xf32> to vector<8x256xf32>
      %51 = arith.mulf %47, %50 : vector<8x256xf32>
      %c9_i32_29 = arith.constant 9 : i32
      %52 = arith.muli %arg2, %c9_i32_29 : i32
      %c1_i32_30 = arith.constant 1 : i32
      %53 = arith.addi %52, %c1_i32_30 : i32
      %54 = arith.index_cast %53 : i32 to index
      %c0_31 = arith.constant 0 : index
      %c0_32 = arith.constant 0 : index
      %55 = vector.load %arg6[%54, %c0_31, %c0_32] : memref<27x8x8xbf16, #tpu.memory_space<vmem>>, vector<1x8x8xbf16>
      %56 = vector.shape_cast %55 : vector<1x8x8xbf16> to vector<8x8xbf16>
      %c0_33 = arith.constant 0 : index
      %c0_34 = arith.constant 0 : index
      %57 = vector.load %arg12[%c0_33, %c0_34] : memref<8x256xf32, #tpu.memory_space<vmem>>, vector<8x256xf32>
      %58 = arith.truncf %51 : vector<8x256xf32> to vector<8x256xbf16>
      %cst_35 = arith.constant dense<0.000000e+00> : vector<8x256xf32>
      %59 = tpu.matmul %56, %58, %cst_35 {dimension_numbers = #tpu.dot_dimension_numbers<[1], [0], [0], [1], [0, 0, 1, 1], [], []>} : vector<8x8xbf16>, vector<8x256xbf16>, vector<8x256xf32> -> vector<8x256xf32>
      %60 = arith.addf %57, %59 : vector<8x256xf32>
      %c0_36 = arith.constant 0 : index
      %c0_37 = arith.constant 0 : index
      %61 = vector.load %arg12[%c0_36, %c0_37] : memref<8x256xf32, #tpu.memory_space<vmem>>, vector<8x256xf32>
      tpu.vector_store %arg12[%c0_36, %c0_37], %60 {strides = array<i32>} : memref<8x256xf32, #tpu.memory_space<vmem>>, vector<8x256xf32>,
      %cst_38 = arith.constant 0.000000e+00 : f32
      %62 = vector.broadcast %cst_38 : f32 to vector<8x15xf32>
      %63 = vector.extract_strided_slice %27 {offsets = [0, 0], sizes = [8, 241], strides = [1, 1]} : vector<8x256xf32> to vector<8x241xf32>
      %64 = tpu.concatenate %62, %63 in 1 : vector<8x15xf32>, vector<8x241xf32> -> vector<8x256xf32>
      %c2 = arith.constant 2 : index
      %c0_39 = arith.constant 0 : index
      %c0_40 = arith.constant 0 : index
      %65 = vector.load %arg8[%c2, %c0_39, %c0_40] : memref<9x1x256xf32, #tpu.memory_space<vmem>>, vector<1x1x256xf32>
      %66 = vector.shape_cast %65 : vector<1x1x256xf32> to vector<1x256xf32>
      %67 = vector.broadcast %66 : vector<1x256xf32> to vector<8x256xf32>
      %68 = arith.mulf %64, %67 : vector<8x256xf32>
      %c9_i32_41 = arith.constant 9 : i32
      %69 = arith.muli %arg2, %c9_i32_41 : i32
      %c2_i32_42 = arith.constant 2 : i32
      %70 = arith.addi %69, %c2_i32_42 : i32
      %71 = arith.index_cast %70 : i32 to index
      %c0_43 = arith.constant 0 : index
      %c0_44 = arith.constant 0 : index
      %72 = vector.load %arg6[%71, %c0_43, %c0_44] : memref<27x8x8xbf16, #tpu.memory_space<vmem>>, vector<1x8x8xbf16>
      %73 = vector.shape_cast %72 : vector<1x8x8xbf16> to vector<8x8xbf16>
      %c0_45 = arith.constant 0 : index
      %c0_46 = arith.constant 0 : index
      %74 = vector.load %arg12[%c0_45, %c0_46] : memref<8x256xf32, #tpu.memory_space<vmem>>, vector<8x256xf32>
      %75 = arith.truncf %68 : vector<8x256xf32> to vector<8x256xbf16>
      %cst_47 = arith.constant dense<0.000000e+00> : vector<8x256xf32>
      %76 = tpu.matmul %73, %75, %cst_47 {dimension_numbers = #tpu.dot_dimension_numbers<[1], [0], [0], [1], [0, 0, 1, 1], [], []>} : vector<8x8xbf16>, vector<8x256xbf16>, vector<8x256xf32> -> vector<8x256xf32>
      %77 = arith.addf %74, %76 : vector<8x256xf32>
      %c0_48 = arith.constant 0 : index
      %c0_49 = arith.constant 0 : index
      %78 = vector.load %arg12[%c0_48, %c0_49] : memref<8x256xf32, #tpu.memory_space<vmem>>, vector<8x256xf32>
      tpu.vector_store %arg12[%c0_48, %c0_49], %77 {strides = array<i32>} : memref<8x256xf32, #tpu.memory_space<vmem>>, vector<8x256xf32>,
      %cst_50 = arith.constant 0.000000e+00 : f32
      %79 = vector.broadcast %cst_50 : f32 to vector<8x1xf32>
      %80 = vector.extract_strided_slice %27 {offsets = [0, 0], sizes = [8, 255], strides = [1, 1]} : vector<8x256xf32> to vector<8x255xf32>
      %81 = tpu.concatenate %79, %80 in 1 : vector<8x1xf32>, vector<8x255xf32> -> vector<8x256xf32>
      %c3 = arith.constant 3 : index
      %c0_51 = arith.constant 0 : index
      %c0_52 = arith.constant 0 : index
      %82 = vector.load %arg8[%c3, %c0_51, %c0_52] : memref<9x1x256xf32, #tpu.memory_space<vmem>>, vector<1x1x256xf32>
      %83 = vector.shape_cast %82 : vector<1x1x256xf32> to vector<1x256xf32>
      %84 = vector.broadcast %83 : vector<1x256xf32> to vector<8x256xf32>
      %85 = arith.mulf %81, %84 : vector<8x256xf32>
      %c9_i32_53 = arith.constant 9 : i32
      %86 = arith.muli %arg2, %c9_i32_53 : i32
      %c3_i32 = arith.constant 3 : i32
      %87 = arith.addi %86, %c3_i32 : i32
      %88 = arith.index_cast %87 : i32 to index
      %c0_54 = arith.constant 0 : index
      %c0_55 = arith.constant 0 : index
      %89 = vector.load %arg6[%88, %c0_54, %c0_55] : memref<27x8x8xbf16, #tpu.memory_space<vmem>>, vector<1x8x8xbf16>
      %90 = vector.shape_cast %89 : vector<1x8x8xbf16> to vector<8x8xbf16>
      %c0_56 = arith.constant 0 : index
      %c0_57 = arith.constant 0 : index
      %91 = vector.load %arg12[%c0_56, %c0_57] : memref<8x256xf32, #tpu.memory_space<vmem>>, vector<8x256xf32>
      %92 = arith.truncf %85 : vector<8x256xf32> to vector<8x256xbf16>
      %cst_58 = arith.constant dense<0.000000e+00> : vector<8x256xf32>
      %93 = tpu.matmul %90, %92, %cst_58 {dimension_numbers = #tpu.dot_dimension_numbers<[1], [0], [0], [1], [0, 0, 1, 1], [], []>} : vector<8x8xbf16>, vector<8x256xbf16>, vector<8x256xf32> -> vector<8x256xf32>
      %94 = arith.addf %91, %93 : vector<8x256xf32>
      %c0_59 = arith.constant 0 : index
      %c0_60 = arith.constant 0 : index
      %95 = vector.load %arg12[%c0_59, %c0_60] : memref<8x256xf32, #tpu.memory_space<vmem>>, vector<8x256xf32>
      tpu.vector_store %arg12[%c0_59, %c0_60], %94 {strides = array<i32>} : memref<8x256xf32, #tpu.memory_space<vmem>>, vector<8x256xf32>,
      %c4 = arith.constant 4 : index
      %c0_61 = arith.constant 0 : index
      %c0_62 = arith.constant 0 : index
      %96 = vector.load %arg8[%c4, %c0_61, %c0_62] : memref<9x1x256xf32, #tpu.memory_space<vmem>>, vector<1x1x256xf32>
      %97 = vector.shape_cast %96 : vector<1x1x256xf32> to vector<1x256xf32>
      %98 = vector.broadcast %97 : vector<1x256xf32> to vector<8x256xf32>
      %99 = arith.mulf %27, %98 : vector<8x256xf32>
      %c9_i32_63 = arith.constant 9 : i32
      %100 = arith.muli %arg2, %c9_i32_63 : i32
      %c4_i32 = arith.constant 4 : i32
      %101 = arith.addi %100, %c4_i32 : i32
      %102 = arith.index_cast %101 : i32 to index
      %c0_64 = arith.constant 0 : index
      %c0_65 = arith.constant 0 : index
      %103 = vector.load %arg6[%102, %c0_64, %c0_65] : memref<27x8x8xbf16, #tpu.memory_space<vmem>>, vector<1x8x8xbf16>
      %104 = vector.shape_cast %103 : vector<1x8x8xbf16> to vector<8x8xbf16>
      %c0_66 = arith.constant 0 : index
      %c0_67 = arith.constant 0 : index
      %105 = vector.load %arg12[%c0_66, %c0_67] : memref<8x256xf32, #tpu.memory_space<vmem>>, vector<8x256xf32>
      %106 = arith.truncf %99 : vector<8x256xf32> to vector<8x256xbf16>
      %cst_68 = arith.constant dense<0.000000e+00> : vector<8x256xf32>
      %107 = tpu.matmul %104, %106, %cst_68 {dimension_numbers = #tpu.dot_dimension_numbers<[1], [0], [0], [1], [0, 0, 1, 1], [], []>} : vector<8x8xbf16>, vector<8x256xbf16>, vector<8x256xf32> -> vector<8x256xf32>
      %108 = arith.addf %105, %107 : vector<8x256xf32>
      %c0_69 = arith.constant 0 : index
      %c0_70 = arith.constant 0 : index
      %109 = vector.load %arg12[%c0_69, %c0_70] : memref<8x256xf32, #tpu.memory_space<vmem>>, vector<8x256xf32>
      tpu.vector_store %arg12[%c0_69, %c0_70], %108 {strides = array<i32>} : memref<8x256xf32, #tpu.memory_space<vmem>>, vector<8x256xf32>,
      %cst_71 = arith.constant 0.000000e+00 : f32
      %110 = vector.broadcast %cst_71 : f32 to vector<8x1xf32>
      %111 = vector.extract_strided_slice %27 {offsets = [0, 1], sizes = [8, 255], strides = [1, 1]} : vector<8x256xf32> to vector<8x255xf32>
      %112 = tpu.concatenate %111, %110 in 1 : vector<8x255xf32>, vector<8x1xf32> -> vector<8x256xf32>
      %c5 = arith.constant 5 : index
      %c0_72 = arith.constant 0 : index
      %c0_73 = arith.constant 0 : index
      %113 = vector.load %arg8[%c5, %c0_72, %c0_73] : memref<9x1x256xf32, #tpu.memory_space<vmem>>, vector<1x1x256xf32>
      %114 = vector.shape_cast %113 : vector<1x1x256xf32> to vector<1x256xf32>
      %115 = vector.broadcast %114 : vector<1x256xf32> to vector<8x256xf32>
      %116 = arith.mulf %112, %115 : vector<8x256xf32>
      %c9_i32_74 = arith.constant 9 : i32
      %117 = arith.muli %arg2, %c9_i32_74 : i32
      %c5_i32 = arith.constant 5 : i32
      %118 = arith.addi %117, %c5_i32 : i32
      %119 = arith.index_cast %118 : i32 to index
      %c0_75 = arith.constant 0 : index
      %c0_76 = arith.constant 0 : index
      %120 = vector.load %arg6[%119, %c0_75, %c0_76] : memref<27x8x8xbf16, #tpu.memory_space<vmem>>, vector<1x8x8xbf16>
      %121 = vector.shape_cast %120 : vector<1x8x8xbf16> to vector<8x8xbf16>
      %c0_77 = arith.constant 0 : index
      %c0_78 = arith.constant 0 : index
      %122 = vector.load %arg12[%c0_77, %c0_78] : memref<8x256xf32, #tpu.memory_space<vmem>>, vector<8x256xf32>
      %123 = arith.truncf %116 : vector<8x256xf32> to vector<8x256xbf16>
      %cst_79 = arith.constant dense<0.000000e+00> : vector<8x256xf32>
      %124 = tpu.matmul %121, %123, %cst_79 {dimension_numbers = #tpu.dot_dimension_numbers<[1], [0], [0], [1], [0, 0, 1, 1], [], []>} : vector<8x8xbf16>, vector<8x256xbf16>, vector<8x256xf32> -> vector<8x256xf32>
      %125 = arith.addf %122, %124 : vector<8x256xf32>
      %c0_80 = arith.constant 0 : index
      %c0_81 = arith.constant 0 : index
      %126 = vector.load %arg12[%c0_80, %c0_81] : memref<8x256xf32, #tpu.memory_space<vmem>>, vector<8x256xf32>
      tpu.vector_store %arg12[%c0_80, %c0_81], %125 {strides = array<i32>} : memref<8x256xf32, #tpu.memory_space<vmem>>, vector<8x256xf32>,
      %cst_82 = arith.constant 0.000000e+00 : f32
      %127 = vector.broadcast %cst_82 : f32 to vector<8x15xf32>
      %128 = vector.extract_strided_slice %27 {offsets = [0, 15], sizes = [8, 241], strides = [1, 1]} : vector<8x256xf32> to vector<8x241xf32>
      %129 = tpu.concatenate %128, %127 in 1 : vector<8x241xf32>, vector<8x15xf32> -> vector<8x256xf32>
      %c6 = arith.constant 6 : index
      %c0_83 = arith.constant 0 : index
      %c0_84 = arith.constant 0 : index
      %130 = vector.load %arg8[%c6, %c0_83, %c0_84] : memref<9x1x256xf32, #tpu.memory_space<vmem>>, vector<1x1x256xf32>
      %131 = vector.shape_cast %130 : vector<1x1x256xf32> to vector<1x256xf32>
      %132 = vector.broadcast %131 : vector<1x256xf32> to vector<8x256xf32>
      %133 = arith.mulf %129, %132 : vector<8x256xf32>
      %c9_i32_85 = arith.constant 9 : i32
      %134 = arith.muli %arg2, %c9_i32_85 : i32
      %c6_i32 = arith.constant 6 : i32
      %135 = arith.addi %134, %c6_i32 : i32
      %136 = arith.index_cast %135 : i32 to index
      %c0_86 = arith.constant 0 : index
      %c0_87 = arith.constant 0 : index
      %137 = vector.load %arg6[%136, %c0_86, %c0_87] : memref<27x8x8xbf16, #tpu.memory_space<vmem>>, vector<1x8x8xbf16>
      %138 = vector.shape_cast %137 : vector<1x8x8xbf16> to vector<8x8xbf16>
      %c0_88 = arith.constant 0 : index
      %c0_89 = arith.constant 0 : index
      %139 = vector.load %arg12[%c0_88, %c0_89] : memref<8x256xf32, #tpu.memory_space<vmem>>, vector<8x256xf32>
      %140 = arith.truncf %133 : vector<8x256xf32> to vector<8x256xbf16>
      %cst_90 = arith.constant dense<0.000000e+00> : vector<8x256xf32>
      %141 = tpu.matmul %138, %140, %cst_90 {dimension_numbers = #tpu.dot_dimension_numbers<[1], [0], [0], [1], [0, 0, 1, 1], [], []>} : vector<8x8xbf16>, vector<8x256xbf16>, vector<8x256xf32> -> vector<8x256xf32>
      %142 = arith.addf %139, %141 : vector<8x256xf32>
      %c0_91 = arith.constant 0 : index
      %c0_92 = arith.constant 0 : index
      %143 = vector.load %arg12[%c0_91, %c0_92] : memref<8x256xf32, #tpu.memory_space<vmem>>, vector<8x256xf32>
      tpu.vector_store %arg12[%c0_91, %c0_92], %142 {strides = array<i32>} : memref<8x256xf32, #tpu.memory_space<vmem>>, vector<8x256xf32>,
      %cst_93 = arith.constant 0.000000e+00 : f32
      %144 = vector.broadcast %cst_93 : f32 to vector<8x16xf32>
      %145 = vector.extract_strided_slice %27 {offsets = [0, 16], sizes = [8, 240], strides = [1, 1]} : vector<8x256xf32> to vector<8x240xf32>
      %146 = tpu.concatenate %145, %144 in 1 : vector<8x240xf32>, vector<8x16xf32> -> vector<8x256xf32>
      %c7 = arith.constant 7 : index
      %c0_94 = arith.constant 0 : index
      %c0_95 = arith.constant 0 : index
      %147 = vector.load %arg8[%c7, %c0_94, %c0_95] : memref<9x1x256xf32, #tpu.memory_space<vmem>>, vector<1x1x256xf32>
      %148 = vector.shape_cast %147 : vector<1x1x256xf32> to vector<1x256xf32>
      %149 = vector.broadcast %148 : vector<1x256xf32> to vector<8x256xf32>
      %150 = arith.mulf %146, %149 : vector<8x256xf32>
      %c9_i32_96 = arith.constant 9 : i32
      %151 = arith.muli %arg2, %c9_i32_96 : i32
      %c7_i32 = arith.constant 7 : i32
      %152 = arith.addi %151, %c7_i32 : i32
      %153 = arith.index_cast %152 : i32 to index
      %c0_97 = arith.constant 0 : index
      %c0_98 = arith.constant 0 : index
      %154 = vector.load %arg6[%153, %c0_97, %c0_98] : memref<27x8x8xbf16, #tpu.memory_space<vmem>>, vector<1x8x8xbf16>
      %155 = vector.shape_cast %154 : vector<1x8x8xbf16> to vector<8x8xbf16>
      %c0_99 = arith.constant 0 : index
      %c0_100 = arith.constant 0 : index
      %156 = vector.load %arg12[%c0_99, %c0_100] : memref<8x256xf32, #tpu.memory_space<vmem>>, vector<8x256xf32>
      %157 = arith.truncf %150 : vector<8x256xf32> to vector<8x256xbf16>
      %cst_101 = arith.constant dense<0.000000e+00> : vector<8x256xf32>
      %158 = tpu.matmul %155, %157, %cst_101 {dimension_numbers = #tpu.dot_dimension_numbers<[1], [0], [0], [1], [0, 0, 1, 1], [], []>} : vector<8x8xbf16>, vector<8x256xbf16>, vector<8x256xf32> -> vector<8x256xf32>
      %159 = arith.addf %156, %158 : vector<8x256xf32>
      %c0_102 = arith.constant 0 : index
      %c0_103 = arith.constant 0 : index
      %160 = vector.load %arg12[%c0_102, %c0_103] : memref<8x256xf32, #tpu.memory_space<vmem>>, vector<8x256xf32>
      tpu.vector_store %arg12[%c0_102, %c0_103], %159 {strides = array<i32>} : memref<8x256xf32, #tpu.memory_space<vmem>>, vector<8x256xf32>,
      %cst_104 = arith.constant 0.000000e+00 : f32
      %161 = vector.broadcast %cst_104 : f32 to vector<8x17xf32>
      %162 = vector.extract_strided_slice %27 {offsets = [0, 17], sizes = [8, 239], strides = [1, 1]} : vector<8x256xf32> to vector<8x239xf32>
      %163 = tpu.concatenate %162, %161 in 1 : vector<8x239xf32>, vector<8x17xf32> -> vector<8x256xf32>
      %c8 = arith.constant 8 : index
      %c0_105 = arith.constant 0 : index
      %c0_106 = arith.constant 0 : index
      %164 = vector.load %arg8[%c8, %c0_105, %c0_106] : memref<9x1x256xf32, #tpu.memory_space<vmem>>, vector<1x1x256xf32>
      %165 = vector.shape_cast %164 : vector<1x1x256xf32> to vector<1x256xf32>
      %166 = vector.broadcast %165 : vector<1x256xf32> to vector<8x256xf32>
      %167 = arith.mulf %163, %166 : vector<8x256xf32>
      %c9_i32_107 = arith.constant 9 : i32
      %168 = arith.muli %arg2, %c9_i32_107 : i32
      %c8_i32_108 = arith.constant 8 : i32
      %169 = arith.addi %168, %c8_i32_108 : i32
      %170 = arith.index_cast %169 : i32 to index
      %c0_109 = arith.constant 0 : index
      %c0_110 = arith.constant 0 : index
      %171 = vector.load %arg6[%170, %c0_109, %c0_110] : memref<27x8x8xbf16, #tpu.memory_space<vmem>>, vector<1x8x8xbf16>
      %172 = vector.shape_cast %171 : vector<1x8x8xbf16> to vector<8x8xbf16>
      %c0_111 = arith.constant 0 : index
      %c0_112 = arith.constant 0 : index
      %173 = vector.load %arg12[%c0_111, %c0_112] : memref<8x256xf32, #tpu.memory_space<vmem>>, vector<8x256xf32>
      %174 = arith.truncf %167 : vector<8x256xf32> to vector<8x256xbf16>
      %cst_113 = arith.constant dense<0.000000e+00> : vector<8x256xf32>
      %175 = tpu.matmul %172, %174, %cst_113 {dimension_numbers = #tpu.dot_dimension_numbers<[1], [0], [0], [1], [0, 0, 1, 1], [], []>} : vector<8x8xbf16>, vector<8x256xbf16>, vector<8x256xf32> -> vector<8x256xf32>
      %176 = arith.addf %173, %175 : vector<8x256xf32>
      %c0_114 = arith.constant 0 : index
      %c0_115 = arith.constant 0 : index
      %177 = vector.load %arg12[%c0_114, %c0_115] : memref<8x256xf32, #tpu.memory_space<vmem>>, vector<8x256xf32>
      tpu.vector_store %arg12[%c0_114, %c0_115], %176 {strides = array<i32>} : memref<8x256xf32, #tpu.memory_space<vmem>>, vector<8x256xf32>,
    } else {
    }
    %c2_i32 = arith.constant 2 : i32
    %10 = arith.cmpi eq, %arg2, %c2_i32 : i32
    %11 = arith.extui %10 : i1 to i32
    %c0_i32_3 = arith.constant 0 : i32
    %12 = arith.cmpi ne, %11, %c0_i32_3 : i32
    scf.if %12 {
      %c0 = arith.constant 0 : index
      %c0_4 = arith.constant 0 : index
      %13 = vector.load %arg10[%c0, %c0_4] : memref<8x4xbf16, #tpu.memory_space<vmem>>, vector<8x4xbf16>
      %c0_5 = arith.constant 0 : index
      %c0_6 = arith.constant 0 : index
      %c0_7 = arith.constant 0 : index
      %c0_8 = arith.constant 0 : index
      %14 = vector.load %arg9[%c0_5, %c0_6, %c0_7, %c0_8] : memref<1x1x4x256xf32, #tpu.memory_space<vmem>>, vector<1x1x4x256xf32>
      %15 = vector.shape_cast %14 : vector<1x1x4x256xf32> to vector<4x256xf32>
      %16 = arith.truncf %15 : vector<4x256xf32> to vector<4x256xbf16>
      %cst = arith.constant dense<0.000000e+00> : vector<8x256xf32>
      %17 = tpu.matmul %13, %16, %cst {dimension_numbers = #tpu.dot_dimension_numbers<[1], [0], [0], [1], [0, 0, 1, 1], [], []>} : vector<8x4xbf16>, vector<4x256xbf16>, vector<8x256xf32> -> vector<8x256xf32>
      %c0_9 = arith.constant 0 : index
      %c0_10 = arith.constant 0 : index
      %18 = vector.load %arg12[%c0_9, %c0_10] : memref<8x256xf32, #tpu.memory_space<vmem>>, vector<8x256xf32>
      %c0_11 = arith.constant 0 : index
      %c0_12 = arith.constant 0 : index
      %19 = vector.load %arg7[%c0_11, %c0_12] : memref<8x1xf32, #tpu.memory_space<vmem>>, vector<8x1xf32>
      %20 = vector.broadcast %19 : vector<8x1xf32> to vector<8x256xf32>
      %21 = arith.addf %18, %20 : vector<8x256xf32>
      %22 = arith.addf %21, %17 : vector<8x256xf32>
      %cst_13 = arith.constant 0.707106769 : f32
      %23 = vector.broadcast %cst_13 : f32 to vector<8x256xf32>
      %24 = arith.mulf %22, %23 : vector<8x256xf32>
      %c0_14 = arith.constant 0 : index
      %c0_15 = arith.constant 0 : index
      %c0_16 = arith.constant 0 : index
      %c0_17 = arith.constant 0 : index
      %25 = vector.load %arg11[%c0_14, %c0_15, %c0_16, %c0_17] : memref<1x1x8x256xf32, #tpu.memory_space<vmem>>, vector<1x1x8x256xf32>
      %26 = vector.shape_cast %25 : vector<1x1x8x256xf32> to vector<8x256xf32>
      %27 = vector.shape_cast %24 : vector<8x256xf32> to vector<1x1x8x256xf32>
      tpu.vector_store %arg11[%c0_14, %c0_15, %c0_16, %c0_17], %27 {strides = array<i32>} : memref<1x1x8x256xf32, #tpu.memory_space<vmem>>, vector<1x1x8x256xf32>,
    } else {
    }
    return
  }
  func.func @transform_0(%arg0: i32, %arg1: i32, %arg2: i32) -> (i32, i32, i32, i32) {
    %0 = arith.addi %arg1, %arg2 : i32
    %c1_i32 = arith.constant 1 : i32
    %1 = arith.subi %0, %c1_i32 : i32
    %c0_i32 = arith.constant 0 : i32
    %c7_i32 = arith.constant 7 : i32
    %2 = arith.maxsi %c0_i32, %1 : i32
    %3 = arith.minsi %c7_i32, %2 : i32
    %c0_i32_0 = arith.constant 0 : i32
    %c0_i32_1 = arith.constant 0 : i32
    %c0_i32_2 = arith.constant 0 : i32
    return %arg0, %3, %c0_i32_0, %c0_i32_1 : i32, i32, i32, i32
  }
  func.func @transform_1(%arg0: i32, %arg1: i32, %arg2: i32) -> (i32, i32, i32) {
    %c0_i32 = arith.constant 0 : i32
    %c0_i32_0 = arith.constant 0 : i32
    %c0_i32_1 = arith.constant 0 : i32
    return %arg0, %c0_i32, %c0_i32_0 : i32, i32, i32
  }
  func.func @transform_2(%arg0: i32, %arg1: i32, %arg2: i32) -> (i32, i32, i32) {
    %c0_i32 = arith.constant 0 : i32
    %c0_i32_0 = arith.constant 0 : i32
    %c0_i32_1 = arith.constant 0 : i32
    return %arg0, %c0_i32, %c0_i32_0 : i32, i32, i32
  }
  func.func @transform_3(%arg0: i32, %arg1: i32, %arg2: i32) -> (i32, i32, i32) {
    %c0_i32 = arith.constant 0 : i32
    %c0_i32_0 = arith.constant 0 : i32
    %c0_i32_1 = arith.constant 0 : i32
    %c0_i32_2 = arith.constant 0 : i32
    return %c0_i32, %c0_i32_0, %c0_i32_1 : i32, i32, i32
  }
  func.func @transform_4(%arg0: i32, %arg1: i32, %arg2: i32) -> (i32, i32) {
    %c0_i32 = arith.constant 0 : i32
    %c0_i32_0 = arith.constant 0 : i32
    %c0_i32_1 = arith.constant 0 : i32
    return %c0_i32, %c0_i32_0 : i32, i32
  }
  func.func @transform_5(%arg0: i32, %arg1: i32, %arg2: i32) -> (i32, i32, i32) {
    %c0_i32 = arith.constant 0 : i32
    %c0_i32_0 = arith.constant 0 : i32
    %c0_i32_1 = arith.constant 0 : i32
    %c0_i32_2 = arith.constant 0 : i32
    return %c0_i32, %c0_i32_0, %c0_i32_1 : i32, i32, i32
  }
  func.func @transform_6(%arg0: i32, %arg1: i32, %arg2: i32) -> (i32, i32, i32, i32) {
    %c0_i32 = arith.constant 0 : i32
    %c0_i32_0 = arith.constant 0 : i32
    %c0_i32_1 = arith.constant 0 : i32
    return %arg0, %arg1, %c0_i32, %c0_i32_0 : i32, i32, i32, i32
  }
  func.func @transform_7(%arg0: i32, %arg1: i32, %arg2: i32) -> (i32, i32) {
    %c0_i32 = arith.constant 0 : i32
    %c0_i32_0 = arith.constant 0 : i32
    %c0_i32_1 = arith.constant 0 : i32
    return %c0_i32, %c0_i32_0 : i32, i32
  }
  func.func @transform_8(%arg0: i32, %arg1: i32, %arg2: i32) -> (i32, i32, i32, i32) {
    %c0_i32 = arith.constant 0 : i32
    %c0_i32_0 = arith.constant 0 : i32
    %c0_i32_1 = arith.constant 0 : i32
    return %arg0, %arg1, %c0_i32, %c0_i32_0 : i32, i32, i32, i32
  }
}

</mosaic_0001>

<llo_original>
// kernel: adain_resblk_forward.6
$region0: #{adain_resblk_forward.6}
  #allocation0 [shape = 'u32[]', space=smem, size = 0x4, offset = 0x4, fixed_abs, tag = 'smem constant byte address 0x4 - core index']
  #allocation1 [shape = 'u32[144,128]{1,0:T(1,128)}', space=vmem, size = 0x12000, scoped, tag = 'internal scratch']
  #allocation2 [shape = 'f32[8,1]{1,0:T(8,128)}', space=vmem, size = 0x1000, scoped, tag = 'scratch operand']
  #allocation3 [shape = 'f32[8,1]{1,0:T(8,128)}', space=vmem, size = 0x1000, scoped, tag = 'scratch operand']
  %s0 = inlined_call_operand.vmem [shape: f32[2,8,8,256], index: 0, kind: input, shape index: {}]
  %s1 = inlined_call_operand.vmem [shape: f32[2,8,1], index: 1, kind: input, shape index: {}]
  %s2 = inlined_call_operand.vmem [shape: f32[2,8,1], index: 2, kind: input, shape index: {}]
  %s3 = inlined_call_operand.vmem [shape: f32[2,8,1], index: 3, kind: output, shape index: {0}]
  %s4 = inlined_call_operand.vmem [shape: f32[2,8,1], index: 4, kind: output, shape index: {1}]
  %5 = xla_tuple %s3, %s4
  %s6 = sld [smem:[#allocation0]]
  $region61: #{adain_resblk_forward.6} parent=0
    _
  %s8 = ssub.s32 1, %s6
  %s9 = scalar_select 0, %s8, %s6
  loop: start=0, step=1, limit=4
  $region2: #{adain_resblk_forward.6} parent=0 // loop_pre_header
    _
  $region3: #{adain_resblk_forward.6} parent=0 // loop_header
    %s11 = sphi 0, %s15
    %p12 = scmp.ge.s32.totalorder %s11, 4
    %s18 = sphi 0, %s30
    %s19 = sphi 0, %s26
    %s20 = sphi 0, %s18
    %s21 = sphi 0, %s19
    %s22 = sphi 0, %s20
    %s23 = sphi 0, %s21
    %s35 = sphi 0, %s37
    %s38 = sphi 0, %s35
    %s39 = sphi 0, %s38
    %s55 = sphi 0, %s39
    %s61 = sphi 0, %s63
    %s64 = sphi 0, %s61
    %s65 = sphi 0, %s64
    %s81 = sphi 0, %s65
    %s87 = sphi 0, %s89
    %s90 = sphi 0, %s87
    %s91 = sphi 0, %s90
    %s107 = sphi 0, %s91
    %s113 = sphi 0, %s115
    %s116 = sphi 0, %s113
    %s117 = sphi 0, %s116
    %s133 = sphi 0, %s117
    %s139 = sphi 0, %s141
    %s142 = sphi 0, %s139
    %s143 = sphi 0, %s142
    %s159 = sphi 0, %s143
  $region4: #{adain_resblk_forward.6} parent=0 // loop_header_branch
    %14 = sbr.rel (%p12) target = $region8
  $region5: #{adain_resblk_forward.6} parent=0 // loop_body
    %s16 = ssub.s32 %s11, 1
    %s17 = ssub.s32 %s11, 2
    %s24 = sadd.s32 1, %s19
    %p25 = scmp.ge.s32.totalorder %s24, 1
    %s26 = scalar_select %p25, 0, %s24
    %s27 = sadd.s32 1, %s18
    %s28 = scalar_select %p25, %s27, %s18
    %p29 = scmp.ge.s32.totalorder %s28, 2
    %s30 = scalar_select %p29, 0, %s28
    %s31 = ssub.s32 %s18, %s30
    %s32 = ssub.s32 %s19, %s26
    %s33 = sor.u32 %s31, %s32
    %p34 = scmp.eq.s32.totalorder %s33, 0
    %s36 = sadd.s32 %s35, 1
    %s37 = scalar_select %p34, %s35, %s36
    %p40 = pneg %p34
    %p41 = scmp.eq.s32.totalorder %s11, 1
    %p42 = por %p40, %p41
    %p43 = scmp.ne.s32.totalorder %s35, %s38
    %p44 = scmp.eq.s32.totalorder %s11, 0
    %p45 = por %p43, %p44
    %p46 = scmp.ne.s32.totalorder %s35, %s38
    %p47 = scmp.eq.s32.totalorder %s16, 1
    %p48 = por %p46, %p47
    %p49 = scmp.ne.s32.totalorder %s38, %s39
    %p50 = scmp.eq.s32.totalorder %s16, 0
    %p51 = por %p49, %p50
    %p52 = scmp.ne.s32.totalorder %s38, %s39
    %p53 = scmp.eq.s32.totalorder %s17, 1
    %p54 = por %p52, %p53
    %p56 = scmp.ne.s32.totalorder %s39, %s55
    %p57 = scmp.eq.s32.totalorder %s17, 0
    %p58 = por %p56, %p57
    %s59 = ssub.s32 %s18, %s30
    %p60 = scmp.eq.s32.totalorder %s59, 0
    %s62 = sadd.s32 %s61, 1
    %s63 = scalar_select %p60, %s61, %s62
    %p66 = pneg %p60
    %p67 = scmp.eq.s32.totalorder %s11, 1
    %p68 = por %p66, %p67
    %p69 = scmp.ne.s32.totalorder %s61, %s64
    %p70 = scmp.eq.s32.totalorder %s11, 0
    %p71 = por %p69, %p70
    %p72 = scmp.ne.s32.totalorder %s61, %s64
    %p73 = scmp.eq.s32.totalorder %s16, 1
    %p74 = por %p72, %p73
    %p75 = scmp.ne.s32.totalorder %s64, %s65
    %p76 = scmp.eq.s32.totalorder %s16, 0
    %p77 = por %p75, %p76
    %p78 = scmp.ne.s32.totalorder %s64, %s65
    %p79 = scmp.eq.s32.totalorder %s17, 1
    %p80 = por %p78, %p79
    %p82 = scmp.ne.s32.totalorder %s65, %s81
    %p83 = scmp.eq.s32.totalorder %s17, 0
    %p84 = por %p82, %p83
    %s85 = ssub.s32 %s18, %s30
    %p86 = scmp.eq.s32.totalorder %s85, 0
    %s88 = sadd.s32 %s87, 1
    %s89 = scalar_select %p86, %s87, %s88
    %p92 = pneg %p86
    %p93 = scmp.eq.s32.totalorder %s11, 1
    %p94 = por %p92, %p93
    %p95 = scmp.ne.s32.totalorder %s87, %s90
    %p96 = scmp.eq.s32.totalorder %s11, 0
    %p97 = por %p95, %p96
    %p98 = scmp.ne.s32.totalorder %s87, %s90
    %p99 = scmp.eq.s32.totalorder %s16, 1
    %p100 = por %p98, %p99
    %p101 = scmp.ne.s32.totalorder %s90, %s91
    %p102 = scmp.eq.s32.totalorder %s16, 0
    %p103 = por %p101, %p102
    %p104 = scmp.ne.s32.totalorder %s90, %s91
    %p105 = scmp.eq.s32.totalorder %s17, 1
    %p106 = por %p104, %p105
    %p108 = scmp.ne.s32.totalorder %s91, %s107
    %p109 = scmp.eq.s32.totalorder %s17, 0
    %p110 = por %p108, %p109
    %s111 = ssub.s32 %s18, %s30
    %p112 = scmp.eq.s32.totalorder %s111, 0
    %s114 = sadd.s32 %s113, 1
    %s115 = scalar_select %p112, %s113, %s114
    %p118 = pneg %p112
    %p119 = scmp.eq.s32.totalorder %s11, 1
    %p120 = por %p118, %p119
    %p121 = scmp.ne.s32.totalorder %s113, %s116
    %p122 = scmp.eq.s32.totalorder %s11, 0
    %p123 = por %p121, %p122
    %p124 = scmp.ne.s32.totalorder %s113, %s116
    %p125 = scmp.eq.s32.totalorder %s16, 1
    %p126 = por %p124, %p125
    %p127 = scmp.ne.s32.totalorder %s116, %s117
    %p128 = scmp.eq.s32.totalorder %s16, 0
    %p129 = por %p127, %p128
    %p130 = scmp.ne.s32.totalorder %s116, %s117
    %p131 = scmp.eq.s32.totalorder %s17, 1
    %p132 = por %p130, %p131
    %p134 = scmp.ne.s32.totalorder %s117, %s133
    %p135 = scmp.eq.s32.totalorder %s17, 0
    %p136 = por %p134, %p135
    %s137 = ssub.s32 %s18, %s30
    %p138 = scmp.eq.s32.totalorder %s137, 0
    %s140 = sadd.s32 %s139, 1
    %s141 = scalar_select %p138, %s139, %s140
    %p144 = pneg %p138
    %p145 = scmp.eq.s32.totalorder %s11, 1
    %p146 = por %p144, %p145
    %p147 = scmp.ne.s32.totalorder %s139, %s142
    %p148 = scmp.eq.s32.totalorder %s11, 0
    %p149 = por %p147, %p148
    %p150 = scmp.ne.s32.totalorder %s139, %s142
    %p151 = scmp.eq.s32.totalorder %s16, 1
    %p152 = por %p150, %p151
    %p153 = scmp.ne.s32.totalorder %s142, %s143
    %p154 = scmp.eq.s32.totalorder %s16, 0
    %p155 = por %p153, %p154
    %p156 = scmp.ne.s32.totalorder %s142, %s143
    %p157 = scmp.eq.s32.totalorder %s17, 1
    %p158 = por %p156, %p157
    %p160 = scmp.ne.s32.totalorder %s143, %s159
    %p161 = scmp.eq.s32.totalorder %s17, 0
    %p162 = por %p160, %p161
    %p163 = scmp.le.s32.totalorder 1, %s11
    %p164 = scmp.lt.s32.totalorder %s11, 3
    %p165 = pnand %p163, %p164
    %p166 = pneg %p165
    // Predicated region
    $region9: #{adain_resblk_forward.6} parent=5 // pred_check
      _
    $region10: #{adain_resblk_forward.6} parent=5 // pred_check_branch
      %168 = sbr.rel (%p165) target = $region12
    $region11: #{adain_resblk_forward.6} parent=5 // pred_region
      %s169 = ssub.s32 %s11, 1
    $region12: #{adain_resblk_forward.6} parent=5 // pred_fallthru
      _
    %p170 = scmp.lt.s32.totalorder %s11, 2
    // Predicated region
    $region13: #{adain_resblk_forward.6} parent=5 // pred_check
      %p171 = pneg %p170
    $region14: #{adain_resblk_forward.6} parent=5 // pred_check_branch
      %173 = sbr.rel (%p171) target = $region16
    $region15: #{adain_resblk_forward.6} parent=5 // pred_region
      // Predicated region
      $region17: #{adain_resblk_forward.6} parent=15 // pred_check
        %p174 = pneg %p45
      $region18: #{adain_resblk_forward.6} parent=15 // pred_check_branch
        %176 = sbr.rel (%p174) target = $region20
      $region19: #{adain_resblk_forward.6} parent=15 // pred_region
        %s177 = smul.u32 8, %s19
        %p178 = scmp.lt.s32.totalorder %s18, 1
        %s179 = scalar_select %p178, %s18, 1
        %p180 = scmp.lt.s32.totalorder %s177, 7
        %s181 = scalar_select %p180, %s177, 7
        %s182 = smul.addr %s181, 2
        %s183 = smul.addr %s179, 16
        %s184 = sadd.s32 %s182, %s183
        %s185 = smul.addr %s184, 8
        %s186 = scalar_lea.vmem %s0, %s185
        %s187 = smul.u32 8, %s19
      $region20: #{adain_resblk_forward.6} parent=15 // pred_fallthru
        _
      // Predicated region
      $region21: #{adain_resblk_forward.6} parent=15 // pred_check
        %p188 = pneg %p71
      $region22: #{adain_resblk_forward.6} parent=15 // pred_check_branch
        %190 = sbr.rel (%p188) target = $region24
      $region23: #{adain_resblk_forward.6} parent=15 // pred_region
        %p191 = scmp.lt.s32.totalorder %s18, 1
        %s192 = scalar_select %p191, %s18, 1
        %s193 = smul.addr %s192, 8
        %s194 = scalar_lea.vmem %s1, %s193
      $region24: #{adain_resblk_forward.6} parent=15 // pred_fallthru
        _
      // Predicated region
      $region25: #{adain_resblk_forward.6} parent=15 // pred_check
        %p195 = pneg %p97
      $region26: #{adain_resblk_forward.6} parent=15 // pred_check_branch
        %197 = sbr.rel (%p195) target = $region28
      $region27: #{adain_resblk_forward.6} parent=15 // pred_region
        %p198 = scmp.lt.s32.totalorder %s18, 1
        %s199 = scalar_select %p198, %s18, 1
        %s200 = smul.addr %s199, 8
        %s201 = scalar_lea.vmem %s2, %s200
      $region28: #{adain_resblk_forward.6} parent=15 // pred_fallthru
        _
    $region16: #{adain_resblk_forward.6} parent=5 // pred_fallthru
      _
    %p202 = scmp.le.s32.totalorder 1, %s11
    %p203 = scmp.lt.s32.totalorder %s11, 3
    %p204 = pnand %p202, %p203
    %p205 = pneg %p204
    // Predicated region
    $region29: #{adain_resblk_forward.6} parent=5 // pred_check
      _
    $region30: #{adain_resblk_forward.6} parent=5 // pred_check_branch
      %207 = sbr.rel (%p204) target = $region32
    $region31: #{adain_resblk_forward.6} parent=5 // pred_region
      %s208 = ssub.s32 %s11, 1
      %s209 = smul.u32 8, %s21
      %p210 = scmp.lt.s32.totalorder %s20, 1
      %s211 = scalar_select %p210, %s20, 1
      %p212 = scmp.lt.s32.totalorder %s209, 7
      %s213 = scalar_select %p212, %s209, 7
      %s214 = smul.addr %s213, 2
      %s215 = smul.addr %s211, 16
      %s216 = sadd.s32 %s214, %s215
      %s217 = smul.addr %s216, 8
      %s218 = scalar_lea.vmem %s0, %s217
      %p219 = pneg %p51
      %p220 = pneg %p48
      %p221 = scmp.lt.s32.totalorder %s20, 1
      %s222 = scalar_select %p221, %s20, 1
      %s223 = smul.addr %s222, 8
      %s224 = scalar_lea.vmem %s1, %s223
      %p225 = pneg %p77
      %p226 = pneg %p74
      %p227 = scmp.lt.s32.totalorder %s20, 1
      %s228 = scalar_select %p227, %s20, 1
      %s229 = smul.addr %s228, 8
      %s230 = scalar_lea.vmem %s2, %s229
      %p231 = pneg %p103
      %p232 = pneg %p100
      %p233 = pneg %p129
      %p234 = pneg %p126
      %p235 = scmp.lt.s32.totalorder %s20, 1
      %s236 = scalar_select %p235, %s20, 1
      %s237 = smul.addr %s236, 8
      %s238 = scalar_lea.vmem %s3, %s237
      %p239 = pneg %p155
      %p240 = pneg %p152
      %p241 = scmp.lt.s32.totalorder %s20, 1
      %s242 = scalar_select %p241, %s20, 1
      %s243 = smul.addr %s242, 8
      %s244 = scalar_lea.vmem %s4, %s243
      %s245 = smul.u32 8, %s21
      %p246 = scmp.lt.s32.totalorder %s20, 1
      %s247 = scalar_select %p246, %s20, 1
      %p248 = scmp.lt.s32.totalorder %s245, 7
      %s249 = scalar_select %p248, %s245, 7
      %s250 = smul.addr %s249, 2
      %s251 = smul.addr %s247, 16
      %s252 = sadd.s32 %s250, %s251
      %s253 = smul.addr %s252, 8
      %s254 = scalar_lea.vmem %s0, %s253
      %s255 = smul.u32 8, %s21
      %p256 = scmp.lt.s32.totalorder %s20, 1
      %s257 = scalar_select %p256, %s20, 1
      %s258 = smul.addr %s257, 8
      %s259 = scalar_lea.vmem %s1, %s258
      %p260 = scmp.lt.s32.totalorder %s20, 1
      %s261 = scalar_select %p260, %s20, 1
      %s262 = smul.addr %s261, 8
      %s263 = scalar_lea.vmem %s2, %s262
      %p264 = scmp.lt.s32.totalorder %s20, 1
      %s265 = scalar_select %p264, %s20, 1
      %s266 = smul.addr %s265, 8
      %s267 = scalar_lea.vmem %s3, %s266
      %p268 = scmp.lt.s32.totalorder %s20, 1
      %s269 = scalar_select %p268, %s20, 1
      %s270 = smul.addr %s269, 8
      %s271 = scalar_lea.vmem %s4, %s270
      %p272 = scmp.eq.s32.totalorder %s21, 0
      // Predicated region
      $region33: #{adain_resblk_forward.6} parent=31 // pred_check
        %p273 = pneg %p272
      $region34: #{adain_resblk_forward.6} parent=31 // pred_check_branch
        %275 = sbr.rel (%p273) target = $region36
      $region35: #{adain_resblk_forward.6} parent=31 // pred_region
        %vm276 = vcmask 7168
        %277 = vst.msk [vmem:[#allocation2] sm:$0xff] %vm276, 0.0
        %278 = vst.msk [vmem:[#allocation3] sm:$0xff] %vm276, 0.0
      $region36: #{adain_resblk_forward.6} parent=31 // pred_fallthru
        _
      %v279 = vld [vmem:[%s254] sm:$0xff]
      %v280 = vld [vmem:[%s254 + $0x8] sm:$0xff]
      %v281 = vld [vmem:[%s254 + $0x10] sm:$0xff]
      %v282 = vld [vmem:[%s254 + $0x18] sm:$0xff]
      %v283 = vld [vmem:[%s254 + $0x20] sm:$0xff]
      %v284 = vld [vmem:[%s254 + $0x28] sm:$0xff]
      %v285 = vld [vmem:[%s254 + $0x30] sm:$0xff]
      %v286 = vld [vmem:[%s254 + $0x38] sm:$0xff]
      %v287 = vld [vmem:[%s254 + $0x40] sm:$0xff]
      %v288 = vld [vmem:[%s254 + $0x48] sm:$0xff]
      %v289 = vld [vmem:[%s254 + $0x50] sm:$0xff]
      %v290 = vld [vmem:[%s254 + $0x58] sm:$0xff]
      %v291 = vld [vmem:[%s254 + $0x60] sm:$0xff]
      %v292 = vld [vmem:[%s254 + $0x68] sm:$0xff]
      %v293 = vld [vmem:[%s254 + $0x70] sm:$0xff]
      %v294 = vld [vmem:[%s254 + $0x78] sm:$0xff]
      %v295 = vadd.f32 %v279, %v280
      %296 = vadd.xlane.f32.xlu0 %v295
      %v297 = vpop.xlane.xlu0 %296
      %v298 = vadd.f32 %v281, %v282
      %299 = vadd.xlane.f32.xlu0 %v298
      %v300 = vpop.xlane.xlu0 %299
      %v301 = vadd.f32 %v283, %v284
      %302 = vadd.xlane.f32.xlu0 %v301
      %v303 = vpop.xlane.xlu0 %302
      %v304 = vadd.f32 %v285, %v286
      %305 = vadd.xlane.f32.xlu0 %v304
      %v306 = vpop.xlane.xlu0 %305
      %v307 = vadd.f32 %v287, %v288
      %308 = vadd.xlane.f32.xlu0 %v307
      %v309 = vpop.xlane.xlu0 %308
      %v310 = vadd.f32 %v289, %v290
      %311 = vadd.xlane.f32.xlu0 %v310
      %v312 = vpop.xlane.xlu0 %311
      %v313 = vadd.f32 %v291, %v292
      %314 = vadd.xlane.f32.xlu0 %v313
      %v315 = vpop.xlane.xlu0 %314
      %v316 = vadd.f32 %v293, %v294
      %317 = vadd.xlane.f32.xlu0 %v316
      %v318 = vpop.xlane.xlu0 %317
      %v319 = vmul.f32 %v279, %v279
      %v320 = vmul.f32 %v280, %v280
      %v321 = vmul.f32 %v281, %v281
      %v322 = vmul.f32 %v282, %v282
      %v323 = vmul.f32 %v283, %v283
      %v324 = vmul.f32 %v284, %v284
      %v325 = vmul.f32 %v285, %v285
      %v326 = vmul.f32 %v286, %v286
      %v327 = vmul.f32 %v287, %v287
      %v328 = vmul.f32 %v288, %v288
      %v329 = vmul.f32 %v289, %v289
      %v330 = vmul.f32 %v290, %v290
      %v331 = vmul.f32 %v291, %v291
      %v332 = vmul.f32 %v292, %v292
      %v333 = vmul.f32 %v293, %v293
      %v334 = vmul.f32 %v294, %v294
      %v335 = vadd.f32 %v319, %v320
      %336 = vadd.xlane.f32.xlu0 %v335
      %v337 = vpop.xlane.xlu0 %336
      %v338 = vadd.f32 %v321, %v322
      %339 = vadd.xlane.f32.xlu0 %v338
      %v340 = vpop.xlane.xlu0 %339
      %v341 = vadd.f32 %v323, %v324
      %342 = vadd.xlane.f32.xlu0 %v341
      %v343 = vpop.xlane.xlu0 %342
      %v344 = vadd.f32 %v325, %v326
      %345 = vadd.xlane.f32.xlu0 %v344
      %v346 = vpop.xlane.xlu0 %345
      %v347 = vadd.f32 %v327, %v328
      %348 = vadd.xlane.f32.xlu0 %v347
      %v349 = vpop.xlane.xlu0 %348
      %v350 = vadd.f32 %v329, %v330
      %351 = vadd.xlane.f32.xlu0 %v350
      %v352 = vpop.xlane.xlu0 %351
      %v353 = vadd.f32 %v331, %v332
      %354 = vadd.xlane.f32.xlu0 %v353
      %v355 = vpop.xlane.xlu0 %354
      %v356 = vadd.f32 %v333, %v334
      %357 = vadd.xlane.f32.xlu0 %v356
      %v358 = vpop.xlane.xlu0 %357
      %v359 = vld [vmem:[#allocation2] sm:$0xff]
      %v360 = vadd.f32 %v297, %v300
      %v361 = vadd.f32 %v360, %v303
      %v362 = vadd.f32 %v361, %v306
      %v363 = vadd.f32 %v362, %v309
      %v364 = vadd.f32 %v363, %v312
      %v365 = vadd.f32 %v364, %v315
      %v366 = vadd.f32 %v365, %v318
      %v367 = vadd.f32 %v359, %v366
      %vm368 = vcmask 7168
      %369 = vst.msk [vmem:[#allocation2] sm:$0xff] %vm368, %v367
      %v370 = vld [vmem:[#allocation3] sm:$0xff]
      %v371 = vadd.f32 %v337, %v340
      %v372 = vadd.f32 %v371, %v343
      %v373 = vadd.f32 %v372, %v346
      %v374 = vadd.f32 %v373, %v349
      %v375 = vadd.f32 %v374, %v352
      %v376 = vadd.f32 %v375, %v355
      %v377 = vadd.f32 %v376, %v358
      %v378 = vadd.f32 %v370, %v377
      %379 = vst.msk [vmem:[#allocation3] sm:$0xff] %vm368, %v378
      // Predicated region
      $region37: #{adain_resblk_forward.6} parent=31 // pred_check
        %p380 = pneg %p272
      $region38: #{adain_resblk_forward.6} parent=31 // pred_check_branch
        %382 = sbr.rel (%p380) target = $region40
      $region39: #{adain_resblk_forward.6} parent=31 // pred_region
        %v383 = vld [vmem:[#allocation2] sm:$0xff]
        %v384 = vmul.f32 %v383, 0.00048828125
        %v385 = vld [vmem:[#allocation3] sm:$0xff]
        %v386 = vmul.f32 %v385, 0.00048828125
        %v387 = vmul.f32 %v384, %v384
        %v388 = vsub.f32 %v386, %v387
        %v389 = vadd.f32 %v388, 1e-05
        %v390 = vrsqrt.pop %v389
        %v391 = vld [vmem:[%s259] sm:$0xff]
        %v392 = vld [vmem:[%s263] sm:$0xff]
        %v393 = vadd.f32 %v391, 1.0
        %v394 = vmul.f32 %v393, %v390
        %395 = vst.msk [vmem:[%s267] sm:$0xff] %vm368, %v394
        %v396 = vmul.f32 %v394, %v384
        %v397 = vsub.f32 %v392, %v396
        %398 = vst.msk [vmem:[%s271] sm:$0xff] %vm368, %v397
      $region40: #{adain_resblk_forward.6} parent=31 // pred_fallthru
        _
      %p399 = scmp.lt.s32.totalorder %s20, 1
      %s400 = scalar_select %p399, %s20, 1
      %s401 = smul.addr %s400, 8
      %s402 = scalar_lea.vmem %s3, %s401
      %p403 = scmp.lt.s32.totalorder %s20, 1
      %s404 = scalar_select %p403, %s20, 1
      %s405 = smul.addr %s404, 8
      %s406 = scalar_lea.vmem %s4, %s405
      // Predicated region
      $region41: #{adain_resblk_forward.6} parent=31 // pred_check
        %p407 = pneg %p126
      $region42: #{adain_resblk_forward.6} parent=31 // pred_check_branch
        %409 = sbr.rel (%p407) target = $region44
      $region43: #{adain_resblk_forward.6} parent=31 // pred_region
        _
      $region44: #{adain_resblk_forward.6} parent=31 // pred_fallthru
        _
      // Predicated region
      $region45: #{adain_resblk_forward.6} parent=31 // pred_check
        %p410 = pneg %p152
      $region46: #{adain_resblk_forward.6} parent=31 // pred_check_branch
        %412 = sbr.rel (%p410) target = $region48
      $region47: #{adain_resblk_forward.6} parent=31 // pred_region
        _
      $region48: #{adain_resblk_forward.6} parent=31 // pred_fallthru
        _
    $region32: #{adain_resblk_forward.6} parent=5 // pred_fallthru
      _
    %p413 = scmp.le.s32.totalorder 2, %s11
    // Predicated region
    $region49: #{adain_resblk_forward.6} parent=5 // pred_check
      %p414 = pneg %p413
    $region50: #{adain_resblk_forward.6} parent=5 // pred_check_branch
      %416 = sbr.rel (%p414) target = $region52
    $region51: #{adain_resblk_forward.6} parent=5 // pred_region
      %s417 = ssub.s32 %s11, 2
      // Predicated region
      $region53: #{adain_resblk_forward.6} parent=51 // pred_check
        %p418 = pneg %p132
      $region54: #{adain_resblk_forward.6} parent=51 // pred_check_branch
        %420 = sbr.rel (%p418) target = $region56
      $region55: #{adain_resblk_forward.6} parent=51 // pred_region
        %p421 = scmp.lt.s32.totalorder %s22, 1
        %s422 = scalar_select %p421, %s22, 1
        %s423 = smul.addr %s422, 8
        %s424 = scalar_lea.vmem %s3, %s423
      $region56: #{adain_resblk_forward.6} parent=51 // pred_fallthru
        _
      // Predicated region
      $region57: #{adain_resblk_forward.6} parent=51 // pred_check
        %p425 = pneg %p158
      $region58: #{adain_resblk_forward.6} parent=51 // pred_check_branch
        %427 = sbr.rel (%p425) target = $region60
      $region59: #{adain_resblk_forward.6} parent=51 // pred_region
        %p428 = scmp.lt.s32.totalorder %s22, 1
        %s429 = scalar_select %p428, %s22, 1
        %s430 = smul.addr %s429, 8
        %s431 = scalar_lea.vmem %s4, %s430
      $region60: #{adain_resblk_forward.6} parent=51 // pred_fallthru
        _
    $region52: #{adain_resblk_forward.6} parent=5 // pred_fallthru
      _
  $region6: #{adain_resblk_forward.6} parent=0 // loop_footer
    %s15 = sadd.s32 1, %s11
  $region7: #{adain_resblk_forward.6} parent=0 // loop_footer_branch
    %10 = sbr.rel target = $region3
  $region8: #{adain_resblk_forward.6} parent=0 // loop_exit
    _

// kernel: adain_resblk_forward.4
$region0: #{adain_resblk_forward.4}
  #allocation0 [shape = 'u32[]', space=smem, size = 0x4, offset = 0x4, fixed_abs, tag = 'smem constant byte address 0x4 - core index']
  #allocation1 [shape = 'u32[144,128]{1,0:T(1,128)}', space=vmem, size = 0x12000, scoped, tag = 'internal scratch']
  #allocation2 [shape = 'f32[4,1]{1,0:T(4,128)}', space=vmem, size = 0x800, scoped, tag = 'scratch operand']
  #allocation3 [shape = 'f32[4,1]{1,0:T(4,128)}', space=vmem, size = 0x800, scoped, tag = 'scratch operand']
  %s0 = inlined_call_operand.vmem [shape: f32[2,8,4,256], index: 0, kind: input, shape index: {}]
  %s1 = inlined_call_operand.vmem [shape: f32[2,4,1], index: 1, kind: input, shape index: {}]
  %s2 = inlined_call_operand.vmem [shape: f32[2,4,1], index: 2, kind: input, shape index: {}]
  %s3 = inlined_call_operand.vmem [shape: f32[2,4,1], index: 3, kind: output, shape index: {0}]
  %s4 = inlined_call_operand.vmem [shape: f32[2,4,1], index: 4, kind: output, shape index: {1}]
  %5 = xla_tuple %s3, %s4
  %s6 = sld [smem:[#allocation0]]
  $region61: #{adain_resblk_forward.4} parent=0
    _
  %s8 = ssub.s32 1, %s6
  %s9 = scalar_select 0, %s8, %s6
  loop: start=0, step=1, limit=4
  $region2: #{adain_resblk_forward.4} parent=0 // loop_pre_header
    _
  $region3: #{adain_resblk_forward.4} parent=0 // loop_header
    %s11 = sphi 0, %s15
    %p12 = scmp.ge.s32.totalorder %s11, 4
    %s18 = sphi 0, %s30
    %s19 = sphi 0, %s26
    %s20 = sphi 0, %s18
    %s21 = sphi 0, %s19
    %s22 = sphi 0, %s20
    %s23 = sphi 0, %s21
    %s35 = sphi 0, %s37
    %s38 = sphi 0, %s35
    %s39 = sphi 0, %s38
    %s55 = sphi 0, %s39
    %s61 = sphi 0, %s63
    %s64 = sphi 0, %s61
    %s65 = sphi 0, %s64
    %s81 = sphi 0, %s65
    %s87 = sphi 0, %s89
    %s90 = sphi 0, %s87
    %s91 = sphi 0, %s90
    %s107 = sphi 0, %s91
    %s113 = sphi 0, %s115
    %s116 = sphi 0, %s113
    %s117 = sphi 0, %s116
    %s133 = sphi 0, %s117
    %s139 = sphi 0, %s141
    %s142 = sphi 0, %s139
    %s143 = sphi 0, %s142
    %s159 = sphi 0, %s143
  $region4: #{adain_resblk_forward.4} parent=0 // loop_header_branch
    %14 = sbr.rel (%p12) target = $region8
  $region5: #{adain_resblk_forward.4} parent=0 // loop_body
    %s16 = ssub.s32 %s11, 1
    %s17 = ssub.s32 %s11, 2
    %s24 = sadd.s32 1, %s19
    %p25 = scmp.ge.s32.totalorder %s24, 1
    %s26 = scalar_select %p25, 0, %s24
    %s27 = sadd.s32 1, %s18
    %s28 = scalar_select %p25, %s27, %s18
    %p29 = scmp.ge.s32.totalorder %s28, 2
    %s30 = scalar_select %p29, 0, %s28
    %s31 = ssub.s32 %s18, %s30
    %s32 = ssub.s32 %s19, %s26
    %s33 = sor.u32 %s31, %s32
    %p34 = scmp.eq.s32.totalorder %s33, 0
    %s36 = sadd.s32 %s35, 1
    %s37 = scalar_select %p34, %s35, %s36
    %p40 = pneg %p34
    %p41 = scmp.eq.s32.totalorder %s11, 1
    %p42 = por %p40, %p41
    %p43 = scmp.ne.s32.totalorder %s35, %s38
    %p44 = scmp.eq.s32.totalorder %s11, 0
    %p45 = por %p43, %p44
    %p46 = scmp.ne.s32.totalorder %s35, %s38
    %p47 = scmp.eq.s32.totalorder %s16, 1
    %p48 = por %p46, %p47
    %p49 = scmp.ne.s32.totalorder %s38, %s39
    %p50 = scmp.eq.s32.totalorder %s16, 0
    %p51 = por %p49, %p50
    %p52 = scmp.ne.s32.totalorder %s38, %s39
    %p53 = scmp.eq.s32.totalorder %s17, 1
    %p54 = por %p52, %p53
    %p56 = scmp.ne.s32.totalorder %s39, %s55
    %p57 = scmp.eq.s32.totalorder %s17, 0
    %p58 = por %p56, %p57
    %s59 = ssub.s32 %s18, %s30
    %p60 = scmp.eq.s32.totalorder %s59, 0
    %s62 = sadd.s32 %s61, 1
    %s63 = scalar_select %p60, %s61, %s62
    %p66 = pneg %p60
    %p67 = scmp.eq.s32.totalorder %s11, 1
    %p68 = por %p66, %p67
    %p69 = scmp.ne.s32.totalorder %s61, %s64
    %p70 = scmp.eq.s32.totalorder %s11, 0
    %p71 = por %p69, %p70
    %p72 = scmp.ne.s32.totalorder %s61, %s64
    %p73 = scmp.eq.s32.totalorder %s16, 1
    %p74 = por %p72, %p73
    %p75 = scmp.ne.s32.totalorder %s64, %s65
    %p76 = scmp.eq.s32.totalorder %s16, 0
    %p77 = por %p75, %p76
    %p78 = scmp.ne.s32.totalorder %s64, %s65
    %p79 = scmp.eq.s32.totalorder %s17, 1
    %p80 = por %p78, %p79
    %p82 = scmp.ne.s32.totalorder %s65, %s81
    %p83 = scmp.eq.s32.totalorder %s17, 0
    %p84 = por %p82, %p83
    %s85 = ssub.s32 %s18, %s30
    %p86 = scmp.eq.s32.totalorder %s85, 0
    %s88 = sadd.s32 %s87, 1
    %s89 = scalar_select %p86, %s87, %s88
    %p92 = pneg %p86
    %p93 = scmp.eq.s32.totalorder %s11, 1
    %p94 = por %p92, %p93
    %p95 = scmp.ne.s32.totalorder %s87, %s90
    %p96 = scmp.eq.s32.totalorder %s11, 0
    %p97 = por %p95, %p96
    %p98 = scmp.ne.s32.totalorder %s87, %s90
    %p99 = scmp.eq.s32.totalorder %s16, 1
    %p100 = por %p98, %p99
    %p101 = scmp.ne.s32.totalorder %s90, %s91
    %p102 = scmp.eq.s32.totalorder %s16, 0
    %p103 = por %p101, %p102
    %p104 = scmp.ne.s32.totalorder %s90, %s91
    %p105 = scmp.eq.s32.totalorder %s17, 1
    %p106 = por %p104, %p105
    %p108 = scmp.ne.s32.totalorder %s91, %s107
    %p109 = scmp.eq.s32.totalorder %s17, 0
    %p110 = por %p108, %p109
    %s111 = ssub.s32 %s18, %s30
    %p112 = scmp.eq.s32.totalorder %s111, 0
    %s114 = sadd.s32 %s113, 1
    %s115 = scalar_select %p112, %s113, %s114
    %p118 = pneg %p112
    %p119 = scmp.eq.s32.totalorder %s11, 1
    %p120 = por %p118, %p119
    %p121 = scmp.ne.s32.totalorder %s113, %s116
    %p122 = scmp.eq.s32.totalorder %s11, 0
    %p123 = por %p121, %p122
    %p124 = scmp.ne.s32.totalorder %s113, %s116
    %p125 = scmp.eq.s32.totalorder %s16, 1
    %p126 = por %p124, %p125
    %p127 = scmp.ne.s32.totalorder %s116, %s117
    %p128 = scmp.eq.s32.totalorder %s16, 0
    %p129 = por %p127, %p128
    %p130 = scmp.ne.s32.totalorder %s116, %s117
    %p131 = scmp.eq.s32.totalorder %s17, 1
    %p132 = por %p130, %p131
    %p134 = scmp.ne.s32.totalorder %s117, %s133
    %p135 = scmp.eq.s32.totalorder %s17, 0
    %p136 = por %p134, %p135
    %s137 = ssub.s32 %s18, %s30
    %p138 = scmp.eq.s32.totalorder %s137, 0
    %s140 = sadd.s32 %s139, 1
    %s141 = scalar_select %p138, %s139, %s140
    %p144 = pneg %p138
    %p145 = scmp.eq.s32.totalorder %s11, 1
    %p146 = por %p144, %p145
    %p147 = scmp.ne.s32.totalorder %s139, %s142
    %p148 = scmp.eq.s32.totalorder %s11, 0
    %p149 = por %p147, %p148
    %p150 = scmp.ne.s32.totalorder %s139, %s142
    %p151 = scmp.eq.s32.totalorder %s16, 1
    %p152 = por %p150, %p151
    %p153 = scmp.ne.s32.totalorder %s142, %s143
    %p154 = scmp.eq.s32.totalorder %s16, 0
    %p155 = por %p153, %p154
    %p156 = scmp.ne.s32.totalorder %s142, %s143
    %p157 = scmp.eq.s32.totalorder %s17, 1
    %p158 = por %p156, %p157
    %p160 = scmp.ne.s32.totalorder %s143, %s159
    %p161 = scmp.eq.s32.totalorder %s17, 0
    %p162 = por %p160, %p161
    %p163 = scmp.le.s32.totalorder 1, %s11
    %p164 = scmp.lt.s32.totalorder %s11, 3
    %p165 = pnand %p163, %p164
    %p166 = pneg %p165
    // Predicated region
    $region9: #{adain_resblk_forward.4} parent=5 // pred_check
      _
    $region10: #{adain_resblk_forward.4} parent=5 // pred_check_branch
      %168 = sbr.rel (%p165) target = $region12
    $region11: #{adain_resblk_forward.4} parent=5 // pred_region
      %s169 = ssub.s32 %s11, 1
    $region12: #{adain_resblk_forward.4} parent=5 // pred_fallthru
      _
    %p170 = scmp.lt.s32.totalorder %s11, 2
    // Predicated region
    $region13: #{adain_resblk_forward.4} parent=5 // pred_check
      %p171 = pneg %p170
    $region14: #{adain_resblk_forward.4} parent=5 // pred_check_branch
      %173 = sbr.rel (%p171) target = $region16
    $region15: #{adain_resblk_forward.4} parent=5 // pred_region
      // Predicated region
      $region17: #{adain_resblk_forward.4} parent=15 // pred_check
        %p174 = pneg %p45
      $region18: #{adain_resblk_forward.4} parent=15 // pred_check_branch
        %176 = sbr.rel (%p174) target = $region20
      $region19: #{adain_resblk_forward.4} parent=15 // pred_region
        %s177 = smul.u32 8, %s19
        %p178 = scmp.lt.s32.totalorder %s18, 1
        %s179 = scalar_select %p178, %s18, 1
        %p180 = scmp.lt.s32.totalorder %s177, 7
        %s181 = scalar_select %p180, %s177, 7
        %s182 = smul.addr %s181, 2
        %s183 = smul.addr %s179, 16
        %s184 = sadd.s32 %s182, %s183
        %s185 = smul.addr %s184, 4
        %s186 = scalar_lea.vmem %s0, %s185
        %s187 = smul.u32 8, %s19
      $region20: #{adain_resblk_forward.4} parent=15 // pred_fallthru
        _
      // Predicated region
      $region21: #{adain_resblk_forward.4} parent=15 // pred_check
        %p188 = pneg %p71
      $region22: #{adain_resblk_forward.4} parent=15 // pred_check_branch
        %190 = sbr.rel (%p188) target = $region24
      $region23: #{adain_resblk_forward.4} parent=15 // pred_region
        %p191 = scmp.lt.s32.totalorder %s18, 1
        %s192 = scalar_select %p191, %s18, 1
        %s193 = smul.addr %s192, 4
        %s194 = scalar_lea.vmem %s1, %s193
      $region24: #{adain_resblk_forward.4} parent=15 // pred_fallthru
        _
      // Predicated region
      $region25: #{adain_resblk_forward.4} parent=15 // pred_check
        %p195 = pneg %p97
      $region26: #{adain_resblk_forward.4} parent=15 // pred_check_branch
        %197 = sbr.rel (%p195) target = $region28
      $region27: #{adain_resblk_forward.4} parent=15 // pred_region
        %p198 = scmp.lt.s32.totalorder %s18, 1
        %s199 = scalar_select %p198, %s18, 1
        %s200 = smul.addr %s199, 4
        %s201 = scalar_lea.vmem %s2, %s200
      $region28: #{adain_resblk_forward.4} parent=15 // pred_fallthru
        _
    $region16: #{adain_resblk_forward.4} parent=5 // pred_fallthru
      _
    %p202 = scmp.le.s32.totalorder 1, %s11
    %p203 = scmp.lt.s32.totalorder %s11, 3
    %p204 = pnand %p202, %p203
    %p205 = pneg %p204
    // Predicated region
    $region29: #{adain_resblk_forward.4} parent=5 // pred_check
      _
    $region30: #{adain_resblk_forward.4} parent=5 // pred_check_branch
      %207 = sbr.rel (%p204) target = $region32
    $region31: #{adain_resblk_forward.4} parent=5 // pred_region
      %s208 = ssub.s32 %s11, 1
      %s209 = smul.u32 8, %s21
      %p210 = scmp.lt.s32.totalorder %s20, 1
      %s211 = scalar_select %p210, %s20, 1
      %p212 = scmp.lt.s32.totalorder %s209, 7
      %s213 = scalar_select %p212, %s209, 7
      %s214 = smul.addr %s213, 2
      %s215 = smul.addr %s211, 16
      %s216 = sadd.s32 %s214, %s215
      %s217 = smul.addr %s216, 4
      %s218 = scalar_lea.vmem %s0, %s217
      %p219 = pneg %p51
      %p220 = pneg %p48
      %p221 = scmp.lt.s32.totalorder %s20, 1
      %s222 = scalar_select %p221, %s20, 1
      %s223 = smul.addr %s222, 4
      %s224 = scalar_lea.vmem %s1, %s223
      %p225 = pneg %p77
      %p226 = pneg %p74
      %p227 = scmp.lt.s32.totalorder %s20, 1
      %s228 = scalar_select %p227, %s20, 1
      %s229 = smul.addr %s228, 4
      %s230 = scalar_lea.vmem %s2, %s229
      %p231 = pneg %p103
      %p232 = pneg %p100
      %p233 = pneg %p129
      %p234 = pneg %p126
      %p235 = scmp.lt.s32.totalorder %s20, 1
      %s236 = scalar_select %p235, %s20, 1
      %s237 = smul.addr %s236, 4
      %s238 = scalar_lea.vmem %s3, %s237
      %p239 = pneg %p155
      %p240 = pneg %p152
      %p241 = scmp.lt.s32.totalorder %s20, 1
      %s242 = scalar_select %p241, %s20, 1
      %s243 = smul.addr %s242, 4
      %s244 = scalar_lea.vmem %s4, %s243
      %s245 = smul.u32 8, %s21
      %p246 = scmp.lt.s32.totalorder %s20, 1
      %s247 = scalar_select %p246, %s20, 1
      %p248 = scmp.lt.s32.totalorder %s245, 7
      %s249 = scalar_select %p248, %s245, 7
      %s250 = smul.addr %s249, 2
      %s251 = smul.addr %s247, 16
      %s252 = sadd.s32 %s250, %s251
      %s253 = smul.addr %s252, 4
      %s254 = scalar_lea.vmem %s0, %s253
      %s255 = smul.u32 8, %s21
      %p256 = scmp.lt.s32.totalorder %s20, 1
      %s257 = scalar_select %p256, %s20, 1
      %s258 = smul.addr %s257, 4
      %s259 = scalar_lea.vmem %s1, %s258
      %p260 = scmp.lt.s32.totalorder %s20, 1
      %s261 = scalar_select %p260, %s20, 1
      %s262 = smul.addr %s261, 4
      %s263 = scalar_lea.vmem %s2, %s262
      %p264 = scmp.lt.s32.totalorder %s20, 1
      %s265 = scalar_select %p264, %s20, 1
      %s266 = smul.addr %s265, 4
      %s267 = scalar_lea.vmem %s3, %s266
      %p268 = scmp.lt.s32.totalorder %s20, 1
      %s269 = scalar_select %p268, %s20, 1
      %s270 = smul.addr %s269, 4
      %s271 = scalar_lea.vmem %s4, %s270
      %p272 = scmp.eq.s32.totalorder %s21, 0
      // Predicated region
      $region33: #{adain_resblk_forward.4} parent=31 // pred_check
        %p273 = pneg %p272
      $region34: #{adain_resblk_forward.4} parent=31 // pred_check_branch
        %275 = sbr.rel (%p273) target = $region36
      $region35: #{adain_resblk_forward.4} parent=31 // pred_region
        %vm276 = vcmask 3072
        %277 = vst.msk [vmem:[#allocation2] sm:$0xf] %vm276, 0.0
        %278 = vst.msk [vmem:[#allocation3] sm:$0xf] %vm276, 0.0
      $region36: #{adain_resblk_forward.4} parent=31 // pred_fallthru
        _
      %v279 = vld [vmem:[%s254] sm:$0xff]
      %v280 = vld [vmem:[%s254 + $0x8] sm:$0xff]
      %v281 = vld [vmem:[%s254 + $0x10] sm:$0xff]
      %v282 = vld [vmem:[%s254 + $0x18] sm:$0xff]
      %v283 = vld [vmem:[%s254 + $0x20] sm:$0xff]
      %v284 = vld [vmem:[%s254 + $0x28] sm:$0xff]
      %v285 = vld [vmem:[%s254 + $0x30] sm:$0xff]
      %v286 = vld [vmem:[%s254 + $0x38] sm:$0xff]
      %v295 = vcombine.high %v279, %v279
      %v296 = vcombine.high %v280, %v280
      %v297 = vcombine.high %v281, %v281
      %v298 = vcombine.high %v282, %v282
      %v299 = vcombine.high %v283, %v283
      %v300 = vcombine.high %v284, %v284
      %v301 = vcombine.high %v285, %v285
      %v302 = vcombine.high %v286, %v286
      %vm311 = vcmask 1043456
      %v312 = vsel %vm311, %v279, 0.0
      %v313 = vsel %vm311, %v295, 0.0
      %v314 = vadd.f32 %v312, %v313
      %315 = vadd.xlane.f32.xlu0 %v314
      %v316 = vpop.xlane.xlu0 %315
      %v317 = vsel %vm311, %v280, 0.0
      %v318 = vsel %vm311, %v296, 0.0
      %v319 = vadd.f32 %v317, %v318
      %320 = vadd.xlane.f32.xlu0 %v319
      %v321 = vpop.xlane.xlu0 %320
      %v322 = vsel %vm311, %v281, 0.0
      %v323 = vsel %vm311, %v297, 0.0
      %v324 = vadd.f32 %v322, %v323
      %325 = vadd.xlane.f32.xlu0 %v324
      %v326 = vpop.xlane.xlu0 %325
      %v327 = vsel %vm311, %v282, 0.0
      %v328 = vsel %vm311, %v298, 0.0
      %v329 = vadd.f32 %v327, %v328
      %330 = vadd.xlane.f32.xlu0 %v329
      %v331 = vpop.xlane.xlu0 %330
      %v332 = vsel %vm311, %v283, 0.0
      %v333 = vsel %vm311, %v299, 0.0
      %v334 = vadd.f32 %v332, %v333
      %335 = vadd.xlane.f32.xlu0 %v334
      %v336 = vpop.xlane.xlu0 %335
      %v337 = vsel %vm311, %v284, 0.0
      %v338 = vsel %vm311, %v300, 0.0
      %v339 = vadd.f32 %v337, %v338
      %340 = vadd.xlane.f32.xlu0 %v339
      %v341 = vpop.xlane.xlu0 %340
      %v342 = vsel %vm311, %v285, 0.0
      %v343 = vsel %vm311, %v301, 0.0
      %v344 = vadd.f32 %v342, %v343
      %345 = vadd.xlane.f32.xlu0 %v344
      %v346 = vpop.xlane.xlu0 %345
      %v347 = vsel %vm311, %v286, 0.0
      %v348 = vsel %vm311, %v302, 0.0
      %v349 = vadd.f32 %v347, %v348
      %350 = vadd.xlane.f32.xlu0 %v349
      %v351 = vpop.xlane.xlu0 %350
      %v352 = vmul.f32 %v279, %v279
      %v353 = vmul.f32 %v280, %v280
      %v354 = vmul.f32 %v281, %v281
      %v355 = vmul.f32 %v282, %v282
      %v356 = vmul.f32 %v283, %v283
      %v357 = vmul.f32 %v284, %v284
      %v358 = vmul.f32 %v285, %v285
      %v359 = vmul.f32 %v286, %v286
      %v368 = vcombine.high %v352, %v352
      %v369 = vcombine.high %v353, %v353
      %v370 = vcombine.high %v354, %v354
      %v371 = vcombine.high %v355, %v355
      %v372 = vcombine.high %v356, %v356
      %v373 = vcombine.high %v357, %v357
      %v374 = vcombine.high %v358, %v358
      %v375 = vcombine.high %v359, %v359
      %v384 = vsel %vm311, %v352, 0.0
      %v385 = vsel %vm311, %v368, 0.0
      %v386 = vadd.f32 %v384, %v385
      %387 = vadd.xlane.f32.xlu0 %v386
      %v388 = vpop.xlane.xlu0 %387
      %v389 = vsel %vm311, %v353, 0.0
      %v390 = vsel %vm311, %v369, 0.0
      %v391 = vadd.f32 %v389, %v390
      %392 = vadd.xlane.f32.xlu0 %v391
      %v393 = vpop.xlane.xlu0 %392
      %v394 = vsel %vm311, %v354, 0.0
      %v395 = vsel %vm311, %v370, 0.0
      %v396 = vadd.f32 %v394, %v395
      %397 = vadd.xlane.f32.xlu0 %v396
      %v398 = vpop.xlane.xlu0 %397
      %v399 = vsel %vm311, %v355, 0.0
      %v400 = vsel %vm311, %v371, 0.0
      %v401 = vadd.f32 %v399, %v400
      %402 = vadd.xlane.f32.xlu0 %v401
      %v403 = vpop.xlane.xlu0 %402
      %v404 = vsel %vm311, %v356, 0.0
      %v405 = vsel %vm311, %v372, 0.0
      %v406 = vadd.f32 %v404, %v405
      %407 = vadd.xlane.f32.xlu0 %v406
      %v408 = vpop.xlane.xlu0 %407
      %v409 = vsel %vm311, %v357, 0.0
      %v410 = vsel %vm311, %v373, 0.0
      %v411 = vadd.f32 %v409, %v410
      %412 = vadd.xlane.f32.xlu0 %v411
      %v413 = vpop.xlane.xlu0 %412
      %v414 = vsel %vm311, %v358, 0.0
      %v415 = vsel %vm311, %v374, 0.0
      %v416 = vadd.f32 %v414, %v415
      %417 = vadd.xlane.f32.xlu0 %v416
      %v418 = vpop.xlane.xlu0 %417
      %v419 = vsel %vm311, %v359, 0.0
      %v420 = vsel %vm311, %v375, 0.0
      %v421 = vadd.f32 %v419, %v420
      %422 = vadd.xlane.f32.xlu0 %v421
      %v423 = vpop.xlane.xlu0 %422
      %v424 = vld [vmem:[#allocation2] sm:$0xf]
      %v425 = vsel %vm311, %v316, 0.0
      %v426 = vsel %vm311, %v321, 0.0
      %v427 = vadd.f32 %v425, %v426
      %v428 = vsel %vm311, %v326, 0.0
      %v429 = vadd.f32 %v427, %v428
      %v430 = vsel %vm311, %v331, 0.0
      %v431 = vadd.f32 %v429, %v430
      %v432 = vsel %vm311, %v336, 0.0
      %v433 = vadd.f32 %v431, %v432
      %v434 = vsel %vm311, %v341, 0.0
      %v435 = vadd.f32 %v433, %v434
      %v436 = vsel %vm311, %v346, 0.0
      %v437 = vadd.f32 %v435, %v436
      %v438 = vsel %vm311, %v351, 0.0
      %v439 = vadd.f32 %v437, %v438
      %v440 = vadd.f32 %v424, %v439
      %vm441 = vcmask 3072
      %442 = vst.msk [vmem:[#allocation2] sm:$0xf] %vm441, %v440
      %v443 = vld [vmem:[#allocation3] sm:$0xf]
      %v444 = vsel %vm311, %v388, 0.0
      %v445 = vsel %vm311, %v393, 0.0
      %v446 = vadd.f32 %v444, %v445
      %v447 = vsel %vm311, %v398, 0.0
      %v448 = vadd.f32 %v446, %v447
      %v449 = vsel %vm311, %v403, 0.0
      %v450 = vadd.f32 %v448, %v449
      %v451 = vsel %vm311, %v408, 0.0
      %v452 = vadd.f32 %v450, %v451
      %v453 = vsel %vm311, %v413, 0.0
      %v454 = vadd.f32 %v452, %v453
      %v455 = vsel %vm311, %v418, 0.0
      %v456 = vadd.f32 %v454, %v455
      %v457 = vsel %vm311, %v423, 0.0
      %v458 = vadd.f32 %v456, %v457
      %v459 = vadd.f32 %v443, %v458
      %460 = vst.msk [vmem:[#allocation3] sm:$0xf] %vm441, %v459
      // Predicated region
      $region37: #{adain_resblk_forward.4} parent=31 // pred_check
        %p461 = pneg %p272
      $region38: #{adain_resblk_forward.4} parent=31 // pred_check_branch
        %463 = sbr.rel (%p461) target = $region40
      $region39: #{adain_resblk_forward.4} parent=31 // pred_region
        %v464 = vld [vmem:[#allocation2] sm:$0xf]
        %v465 = vmul.f32 %v464, 0.00048828125
        %v466 = vld [vmem:[#allocation3] sm:$0xf]
        %v467 = vmul.f32 %v466, 0.00048828125
        %v468 = vmul.f32 %v465, %v465
        %v469 = vsub.f32 %v467, %v468
        %v470 = vadd.f32 %v469, 1e-05
        %v471 = vrsqrt.pop %v470
        %v472 = vld [vmem:[%s259] sm:$0xf]
        %v473 = vld [vmem:[%s263] sm:$0xf]
        %v474 = vadd.f32 %v472, 1.0
        %v475 = vmul.f32 %v474, %v471
        %476 = vst.msk [vmem:[%s267] sm:$0xf] %vm441, %v475
        %v477 = vmul.f32 %v475, %v465
        %v478 = vsub.f32 %v473, %v477
        %479 = vst.msk [vmem:[%s271] sm:$0xf] %vm441, %v478
      $region40: #{adain_resblk_forward.4} parent=31 // pred_fallthru
        _
      %p480 = scmp.lt.s32.totalorder %s20, 1
      %s481 = scalar_select %p480, %s20, 1
      %s482 = smul.addr %s481, 4
      %s483 = scalar_lea.vmem %s3, %s482
      %p484 = scmp.lt.s32.totalorder %s20, 1
      %s485 = scalar_select %p484, %s20, 1
      %s486 = smul.addr %s485, 4
      %s487 = scalar_lea.vmem %s4, %s486
      // Predicated region
      $region41: #{adain_resblk_forward.4} parent=31 // pred_check
        %p488 = pneg %p126
      $region42: #{adain_resblk_forward.4} parent=31 // pred_check_branch
        %490 = sbr.rel (%p488) target = $region44
      $region43: #{adain_resblk_forward.4} parent=31 // pred_region
        _
      $region44: #{adain_resblk_forward.4} parent=31 // pred_fallthru
        _
      // Predicated region
      $region45: #{adain_resblk_forward.4} parent=31 // pred_check
        %p491 = pneg %p152
      $region46: #{adain_resblk_forward.4} parent=31 // pred_check_branch
        %493 = sbr.rel (%p491) target = $region48
      $region47: #{adain_resblk_forward.4} parent=31 // pred_region
        _
      $region48: #{adain_resblk_forward.4} parent=31 // pred_fallthru
        _
    $region32: #{adain_resblk_forward.4} parent=5 // pred_fallthru
      _
    %p494 = scmp.le.s32.totalorder 2, %s11
    // Predicated region
    $region49: #{adain_resblk_forward.4} parent=5 // pred_check
      %p495 = pneg %p494
    $region50: #{adain_resblk_forward.4} parent=5 // pred_check_branch
      %497 = sbr.rel (%p495) target = $region52
    $region51: #{adain_resblk_forward.4} parent=5 // pred_region
      %s498 = ssub.s32 %s11, 2
      // Predicated region
      $region53: #{adain_resblk_forward.4} parent=51 // pred_check
        %p499 = pneg %p132
      $region54: #{adain_resblk_forward.4} parent=51 // pred_check_branch
        %501 = sbr.rel (%p499) target = $region56
      $region55: #{adain_resblk_forward.4} parent=51 // pred_region
        %p502 = scmp.lt.s32.totalorder %s22, 1
        %s503 = scalar_select %p502, %s22, 1
        %s504 = smul.addr %s503, 4
        %s505 = scalar_lea.vmem %s3, %s504
      $region56: #{adain_resblk_forward.4} parent=51 // pred_fallthru
        _
      // Predicated region
      $region57: #{adain_resblk_forward.4} parent=51 // pred_check
        %p506 = pneg %p158
      $region58: #{adain_resblk_forward.4} parent=51 // pred_check_branch
        %508 = sbr.rel (%p506) target = $region60
      $region59: #{adain_resblk_forward.4} parent=51 // pred_region
        %p509 = scmp.lt.s32.totalorder %s22, 1
        %s510 = scalar_select %p509, %s22, 1
        %s511 = smul.addr %s510, 4
        %s512 = scalar_lea.vmem %s4, %s511
      $region60: #{adain_resblk_forward.4} parent=51 // pred_fallthru
        _
    $region52: #{adain_resblk_forward.4} parent=5 // pred_fallthru
      _
  $region6: #{adain_resblk_forward.4} parent=0 // loop_footer
    %s15 = sadd.s32 1, %s11
  $region7: #{adain_resblk_forward.4} parent=0 // loop_footer_branch
    %10 = sbr.rel target = $region3
  $region8: #{adain_resblk_forward.4} parent=0 // loop_exit
    _

// kernel: adain_resblk_forward.5
$region0: #{adain_resblk_forward.5}
  #allocation0 [shape = 'u32[]', space=smem, size = 0x4, offset = 0x4, fixed_abs, tag = 'smem constant byte address 0x4 - core index']
  #allocation1 [shape = 'u32[144,128]{1,0:T(1,128)}', space=vmem, size = 0x12000, scoped, tag = 'internal scratch']
  #allocation2 [shape = 'f32[8,256]{1,0:T(8,128)}', space=vmem, size = 0x2000, scoped, tag = 'scratch operand']
  %s0 = inlined_call_operand.vmem [shape: f32[2,8,4,256], index: 0, kind: input, shape index: {}]
  %s1 = inlined_call_operand.vmem [shape: f32[2,4,1], index: 1, kind: input, shape index: {}]
  %s2 = inlined_call_operand.vmem [shape: f32[2,4,1], index: 2, kind: input, shape index: {}]
  %s3 = inlined_call_operand.vmem [shape: bf16[27,8,4], index: 3, kind: input, shape index: {}]
  %s4 = inlined_call_operand.vmem [shape: f32[8,1], index: 4, kind: input, shape index: {}]
  %s5 = inlined_call_operand.vmem [shape: f32[9,1,256], index: 5, kind: input, shape index: {}]
  %s6 = inlined_call_operand.vmem [shape: f32[2,8,8,256], index: 6, kind: output, shape index: {}]
  %s7 = sld [smem:[#allocation0]]
  $region69: #{adain_resblk_forward.5} parent=0
    _
  %s9 = ssub.s32 1, %s7
  %s10 = scalar_select 0, %s9, %s7
  loop: start=0, step=1, limit=50
  $region2: #{adain_resblk_forward.5} parent=0 // loop_pre_header
    _
  $region3: #{adain_resblk_forward.5} parent=0 // loop_header
    %s12 = sphi 0, %s16
    %p13 = scmp.ge.s32.totalorder %s12, 50
    %s19 = sphi 0, %s38
    %s20 = sphi 0, %s34
    %s21 = sphi 0, %s30
    %s22 = sphi 0, %s19
    %s23 = sphi 0, %s20
    %s24 = sphi 0, %s21
    %s25 = sphi 0, %s22
    %s26 = sphi 0, %s23
    %s27 = sphi 0, %s24
    %s55 = sphi 0, %s57
    %s58 = sphi 0, %s55
    %s59 = sphi 0, %s58
    %s75 = sphi 0, %s59
    %s81 = sphi 0, %s83
    %s84 = sphi 0, %s81
    %s85 = sphi 0, %s84
    %s101 = sphi 0, %s85
    %s107 = sphi 0, %s109
    %s110 = sphi 0, %s107
    %s111 = sphi 0, %s110
    %s127 = sphi 0, %s111
    %s131 = sphi 0, %s131
    %s133 = sphi 0, %s131
    %s134 = sphi 0, %s133
    %s148 = sphi 0, %s134
    %s152 = sphi 0, %s152
    %s154 = sphi 0, %s152
    %s155 = sphi 0, %s154
    %s169 = sphi 0, %s155
    %s173 = sphi 0, %s173
    %s175 = sphi 0, %s173
    %s176 = sphi 0, %s175
    %s190 = sphi 0, %s176
    %s198 = sphi 0, %s200
    %s201 = sphi 0, %s198
    %s202 = sphi 0, %s201
    %s218 = sphi 0, %s202
  $region4: #{adain_resblk_forward.5} parent=0 // loop_header_branch
    %15 = sbr.rel (%p13) target = $region8
  $region5: #{adain_resblk_forward.5} parent=0 // loop_body
    %s17 = ssub.s32 %s12, 1
    %s18 = ssub.s32 %s12, 2
    %s28 = sadd.s32 1, %s21
    %p29 = scmp.ge.s32.totalorder %s28, 3
    %s30 = scalar_select %p29, 0, %s28
    %s31 = sadd.s32 1, %s20
    %s32 = scalar_select %p29, %s31, %s20
    %p33 = scmp.ge.s32.totalorder %s32, 8
    %s34 = scalar_select %p33, 0, %s32
    %s35 = sadd.s32 1, %s19
    %s36 = scalar_select %p33, %s35, %s19
    %p37 = scmp.ge.s32.totalorder %s36, 2
    %s38 = scalar_select %p37, 0, %s36
    %s39 = sadd.s32 %s20, %s21
    %s40 = ssub.s32 %s39, 1
    %p41 = scmp.gt.s32.totalorder %s40, 0
    %s42 = scalar_select %p41, %s40, 0
    %p43 = scmp.lt.s32.totalorder %s42, 7
    %s44 = scalar_select %p43, %s42, 7
    %s45 = sadd.s32 %s34, %s30
    %s46 = ssub.s32 %s45, 1
    %p47 = scmp.gt.s32.totalorder %s46, 0
    %s48 = scalar_select %p47, %s46, 0
    %p49 = scmp.lt.s32.totalorder %s48, 7
    %s50 = scalar_select %p49, %s48, 7
    %s51 = ssub.s32 %s19, %s38
    %s52 = ssub.s32 %s44, %s50
    %s53 = sor.u32 %s51, %s52
    %p54 = scmp.eq.s32.totalorder %s53, 0
    %s56 = sadd.s32 %s55, 1
    %s57 = scalar_select %p54, %s55, %s56
    %p60 = pneg %p54
    %p61 = scmp.eq.s32.totalorder %s12, 47
    %p62 = por %p60, %p61
    %p63 = scmp.ne.s32.totalorder %s55, %s58
    %p64 = scmp.eq.s32.totalorder %s12, 0
    %p65 = por %p63, %p64
    %p66 = scmp.ne.s32.totalorder %s55, %s58
    %p67 = scmp.eq.s32.totalorder %s17, 47
    %p68 = por %p66, %p67
    %p69 = scmp.ne.s32.totalorder %s58, %s59
    %p70 = scmp.eq.s32.totalorder %s17, 0
    %p71 = por %p69, %p70
    %p72 = scmp.ne.s32.totalorder %s58, %s59
    %p73 = scmp.eq.s32.totalorder %s18, 47
    %p74 = por %p72, %p73
    %p76 = scmp.ne.s32.totalorder %s59, %s75
    %p77 = scmp.eq.s32.totalorder %s18, 0
    %p78 = por %p76, %p77
    %s79 = ssub.s32 %s19, %s38
    %p80 = scmp.eq.s32.totalorder %s79, 0
    %s82 = sadd.s32 %s81, 1
    %s83 = scalar_select %p80, %s81, %s82
    %p86 = pneg %p80
    %p87 = scmp.eq.s32.totalorder %s12, 47
    %p88 = por %p86, %p87
    %p89 = scmp.ne.s32.totalorder %s81, %s84
    %p90 = scmp.eq.s32.totalorder %s12, 0
    %p91 = por %p89, %p90
    %p92 = scmp.ne.s32.totalorder %s81, %s84
    %p93 = scmp.eq.s32.totalorder %s17, 47
    %p94 = por %p92, %p93
    %p95 = scmp.ne.s32.totalorder %s84, %s85
    %p96 = scmp.eq.s32.totalorder %s17, 0
    %p97 = por %p95, %p96
    %p98 = scmp.ne.s32.totalorder %s84, %s85
    %p99 = scmp.eq.s32.totalorder %s18, 47
    %p100 = por %p98, %p99
    %p102 = scmp.ne.s32.totalorder %s85, %s101
    %p103 = scmp.eq.s32.totalorder %s18, 0
    %p104 = por %p102, %p103
    %s105 = ssub.s32 %s19, %s38
    %p106 = scmp.eq.s32.totalorder %s105, 0
    %s108 = sadd.s32 %s107, 1
    %s109 = scalar_select %p106, %s107, %s108
    %p112 = pneg %p106
    %p113 = scmp.eq.s32.totalorder %s12, 47
    %p114 = por %p112, %p113
    %p115 = scmp.ne.s32.totalorder %s107, %s110
    %p116 = scmp.eq.s32.totalorder %s12, 0
    %p117 = por %p115, %p116
    %p118 = scmp.ne.s32.totalorder %s107, %s110
    %p119 = scmp.eq.s32.totalorder %s17, 47
    %p120 = por %p118, %p119
    %p121 = scmp.ne.s32.totalorder %s110, %s111
    %p122 = scmp.eq.s32.totalorder %s17, 0
    %p123 = por %p121, %p122
    %p124 = scmp.ne.s32.totalorder %s110, %s111
    %p125 = scmp.eq.s32.totalorder %s18, 47
    %p126 = por %p124, %p125
    %p128 = scmp.ne.s32.totalorder %s111, %s127
    %p129 = scmp.eq.s32.totalorder %s18, 0
    %p130 = por %p128, %p129
    %s132 = sadd.s32 %s131, 1
    %p135 = scmp.eq.s32.totalorder %s12, 47
    %p136 = scmp.ne.s32.totalorder %s131, %s133
    %p137 = scmp.eq.s32.totalorder %s12, 0
    %p138 = por %p136, %p137
    %p139 = scmp.ne.s32.totalorder %s131, %s133
    %p140 = scmp.eq.s32.totalorder %s17, 47
    %p141 = por %p139, %p140
    %p142 = scmp.ne.s32.totalorder %s133, %s134
    %p143 = scmp.eq.s32.totalorder %s17, 0
    %p144 = por %p142, %p143
    %p145 = scmp.ne.s32.totalorder %s133, %s134
    %p146 = scmp.eq.s32.totalorder %s18, 47
    %p147 = por %p145, %p146
    %p149 = scmp.ne.s32.totalorder %s134, %s148
    %p150 = scmp.eq.s32.totalorder %s18, 0
    %p151 = por %p149, %p150
    %s153 = sadd.s32 %s152, 1
    %p156 = scmp.eq.s32.totalorder %s12, 47
    %p157 = scmp.ne.s32.totalorder %s152, %s154
    %p158 = scmp.eq.s32.totalorder %s12, 0
    %p159 = por %p157, %p158
    %p160 = scmp.ne.s32.totalorder %s152, %s154
    %p161 = scmp.eq.s32.totalorder %s17, 47
    %p162 = por %p160, %p161
    %p163 = scmp.ne.s32.totalorder %s154, %s155
    %p164 = scmp.eq.s32.totalorder %s17, 0
    %p165 = por %p163, %p164
    %p166 = scmp.ne.s32.totalorder %s154, %s155
    %p167 = scmp.eq.s32.totalorder %s18, 47
    %p168 = por %p166, %p167
    %p170 = scmp.ne.s32.totalorder %s155, %s169
    %p171 = scmp.eq.s32.totalorder %s18, 0
    %p172 = por %p170, %p171
    %s174 = sadd.s32 %s173, 1
    %p177 = scmp.eq.s32.totalorder %s12, 47
    %p178 = scmp.ne.s32.totalorder %s173, %s175
    %p179 = scmp.eq.s32.totalorder %s12, 0
    %p180 = por %p178, %p179
    %p181 = scmp.ne.s32.totalorder %s173, %s175
    %p182 = scmp.eq.s32.totalorder %s17, 47
    %p183 = por %p181, %p182
    %p184 = scmp.ne.s32.totalorder %s175, %s176
    %p185 = scmp.eq.s32.totalorder %s17, 0
    %p186 = por %p184, %p185
    %p187 = scmp.ne.s32.totalorder %s175, %s176
    %p188 = scmp.eq.s32.totalorder %s18, 47
    %p189 = por %p187, %p188
    %p191 = scmp.ne.s32.totalorder %s176, %s190
    %p192 = scmp.eq.s32.totalorder %s18, 0
    %p193 = por %p191, %p192
    %s194 = ssub.s32 %s19, %s38
    %s195 = ssub.s32 %s20, %s34
    %s196 = sor.u32 %s194, %s195
    %p197 = scmp.eq.s32.totalorder %s196, 0
    %s199 = sadd.s32 %s198, 1
    %s200 = scalar_select %p197, %s198, %s199
    %p203 = pneg %p197
    %p204 = scmp.eq.s32.totalorder %s12, 47
    %p205 = por %p203, %p204
    %p206 = scmp.ne.s32.totalorder %s198, %s201
    %p207 = scmp.eq.s32.totalorder %s12, 0
    %p208 = por %p206, %p207
    %p209 = scmp.ne.s32.totalorder %s198, %s201
    %p210 = scmp.eq.s32.totalorder %s17, 47
    %p211 = por %p209, %p210
    %p212 = scmp.ne.s32.totalorder %s201, %s202
    %p213 = scmp.eq.s32.totalorder %s17, 0
    %p214 = por %p212, %p213
    %p215 = scmp.ne.s32.totalorder %s201, %s202
    %p216 = scmp.eq.s32.totalorder %s18, 47
    %p217 = por %p215, %p216
    %p219 = scmp.ne.s32.totalorder %s202, %s218
    %p220 = scmp.eq.s32.totalorder %s18, 0
    %p221 = por %p219, %p220
    %p222 = scmp.le.s32.totalorder 1, %s12
    %p223 = scmp.lt.s32.totalorder %s12, 49
    %p224 = pnand %p222, %p223
    %p225 = pneg %p224
    // Predicated region
    $region9: #{adain_resblk_forward.5} parent=5 // pred_check
      _
    $region10: #{adain_resblk_forward.5} parent=5 // pred_check_branch
      %227 = sbr.rel (%p224) target = $region12
    $region11: #{adain_resblk_forward.5} parent=5 // pred_region
      %s228 = ssub.s32 %s12, 1
      // Predicated region
      $region13: #{adain_resblk_forward.5} parent=11 // pred_check
        %p229 = pneg %p144
      $region14: #{adain_resblk_forward.5} parent=11 // pred_check_branch
        %231 = sbr.rel (%p229) target = $region16
      $region15: #{adain_resblk_forward.5} parent=11 // pred_region
        _
      $region16: #{adain_resblk_forward.5} parent=11 // pred_fallthru
        _
      // Predicated region
      $region17: #{adain_resblk_forward.5} parent=11 // pred_check
        %p232 = pneg %p165
      $region18: #{adain_resblk_forward.5} parent=11 // pred_check_branch
        %234 = sbr.rel (%p232) target = $region20
      $region19: #{adain_resblk_forward.5} parent=11 // pred_region
        _
      $region20: #{adain_resblk_forward.5} parent=11 // pred_fallthru
        _
      // Predicated region
      $region21: #{adain_resblk_forward.5} parent=11 // pred_check
        %p235 = pneg %p186
      $region22: #{adain_resblk_forward.5} parent=11 // pred_check_branch
        %237 = sbr.rel (%p235) target = $region24
      $region23: #{adain_resblk_forward.5} parent=11 // pred_region
        _
      $region24: #{adain_resblk_forward.5} parent=11 // pred_fallthru
        _
    $region12: #{adain_resblk_forward.5} parent=5 // pred_fallthru
      _
    %p238 = scmp.lt.s32.totalorder %s12, 48
    // Predicated region
    $region25: #{adain_resblk_forward.5} parent=5 // pred_check
      %p239 = pneg %p238
    $region26: #{adain_resblk_forward.5} parent=5 // pred_check_branch
      %241 = sbr.rel (%p239) target = $region28
    $region27: #{adain_resblk_forward.5} parent=5 // pred_region
      // Predicated region
      $region29: #{adain_resblk_forward.5} parent=27 // pred_check
        %p242 = pneg %p65
      $region30: #{adain_resblk_forward.5} parent=27 // pred_check_branch
        %244 = sbr.rel (%p242) target = $region32
      $region31: #{adain_resblk_forward.5} parent=27 // pred_region
        %s245 = sadd.s32 %s20, %s21
        %s246 = ssub.s32 %s245, 1
        %p247 = scmp.gt.s32.totalorder %s246, 0
        %s248 = scalar_select %p247, %s246, 0
        %p249 = scmp.lt.s32.totalorder %s248, 7
        %s250 = scalar_select %p249, %s248, 7
        %p251 = scmp.lt.s32.totalorder %s19, 1
        %s252 = scalar_select %p251, %s19, 1
        %p253 = scmp.lt.s32.totalorder %s250, 7
        %s254 = scalar_select %p253, %s250, 7
        %s255 = smul.addr %s254, 2
        %s256 = smul.addr %s252, 16
        %s257 = sadd.s32 %s255, %s256
        %s258 = smul.addr %s257, 4
        %s259 = scalar_lea.vmem %s0, %s258
        %s260 = sadd.s32 %s20, %s21
        %s261 = ssub.s32 %s260, 1
        %p262 = scmp.gt.s32.totalorder %s261, 0
        %s263 = scalar_select %p262, %s261, 0
        %p264 = scmp.lt.s32.totalorder %s263, 7
        %s265 = scalar_select %p264, %s263, 7
      $region32: #{adain_resblk_forward.5} parent=27 // pred_fallthru
        _
      // Predicated region
      $region33: #{adain_resblk_forward.5} parent=27 // pred_check
        %p266 = pneg %p91
      $region34: #{adain_resblk_forward.5} parent=27 // pred_check_branch
        %268 = sbr.rel (%p266) target = $region36
      $region35: #{adain_resblk_forward.5} parent=27 // pred_region
        %p269 = scmp.lt.s32.totalorder %s19, 1
        %s270 = scalar_select %p269, %s19, 1
        %s271 = smul.addr %s270, 4
        %s272 = scalar_lea.vmem %s1, %s271
      $region36: #{adain_resblk_forward.5} parent=27 // pred_fallthru
        _
      // Predicated region
      $region37: #{adain_resblk_forward.5} parent=27 // pred_check
        %p273 = pneg %p117
      $region38: #{adain_resblk_forward.5} parent=27 // pred_check_branch
        %275 = sbr.rel (%p273) target = $region40
      $region39: #{adain_resblk_forward.5} parent=27 // pred_region
        %p276 = scmp.lt.s32.totalorder %s19, 1
        %s277 = scalar_select %p276, %s19, 1
        %s278 = smul.addr %s277, 4
        %s279 = scalar_lea.vmem %s2, %s278
      $region40: #{adain_resblk_forward.5} parent=27 // pred_fallthru
        _
    $region28: #{adain_resblk_forward.5} parent=5 // pred_fallthru
      _
    %p280 = scmp.le.s32.totalorder 1, %s12
    %p281 = scmp.lt.s32.totalorder %s12, 49
    %p282 = pnand %p280, %p281
    %p283 = pneg %p282
    // Predicated region
    $region41: #{adain_resblk_forward.5} parent=5 // pred_check
      _
    $region42: #{adain_resblk_forward.5} parent=5 // pred_check_branch
      %285 = sbr.rel (%p282) target = $region44
    $region43: #{adain_resblk_forward.5} parent=5 // pred_region
      %s286 = ssub.s32 %s12, 1
      %s287 = sadd.s32 %s23, %s24
      %s288 = ssub.s32 %s287, 1
      %p289 = scmp.gt.s32.totalorder %s288, 0
      %s290 = scalar_select %p289, %s288, 0
      %p291 = scmp.lt.s32.totalorder %s290, 7
      %s292 = scalar_select %p291, %s290, 7
      %p293 = scmp.lt.s32.totalorder %s22, 1
      %s294 = scalar_select %p293, %s22, 1
      %p295 = scmp.lt.s32.totalorder %s292, 7
      %s296 = scalar_select %p295, %s292, 7
      %s297 = smul.addr %s296, 2
      %s298 = smul.addr %s294, 16
      %s299 = sadd.s32 %s297, %s298
      %s300 = smul.addr %s299, 4
      %s301 = scalar_lea.vmem %s0, %s300
      %p302 = pneg %p71
      %p303 = pneg %p68
      %p304 = scmp.lt.s32.totalorder %s22, 1
      %s305 = scalar_select %p304, %s22, 1
      %s306 = smul.addr %s305, 4
      %s307 = scalar_lea.vmem %s1, %s306
      %p308 = pneg %p97
      %p309 = pneg %p94
      %p310 = scmp.lt.s32.totalorder %s22, 1
      %s311 = scalar_select %p310, %s22, 1
      %s312 = smul.addr %s311, 4
      %s313 = scalar_lea.vmem %s2, %s312
      %p314 = pneg %p123
      %p315 = pneg %p120
      %p316 = pneg %p144
      %p317 = pneg %p141
      %p318 = pneg %p165
      %p319 = pneg %p162
      %p320 = pneg %p186
      %p321 = pneg %p183
      %p322 = pneg %p214
      %p323 = pneg %p211
      %p324 = scmp.lt.s32.totalorder %s22, 1
      %s325 = scalar_select %p324, %s22, 1
      %p326 = scmp.lt.s32.totalorder %s23, 7
      %s327 = scalar_select %p326, %s23, 7
      %s328 = smul.addr %s327, 2
      %s329 = smul.addr %s325, 16
      %s330 = sadd.s32 %s328, %s329
      %s331 = smul.addr %s330, 8
      %s332 = scalar_lea.vmem %s6, %s331
      %s333 = sadd.s32 %s23, %s24
      %s334 = ssub.s32 %s333, 1
      %p335 = scmp.gt.s32.totalorder %s334, 0
      %s336 = scalar_select %p335, %s334, 0
      %p337 = scmp.lt.s32.totalorder %s336, 7
      %s338 = scalar_select %p337, %s336, 7
      %p339 = scmp.lt.s32.totalorder %s22, 1
      %s340 = scalar_select %p339, %s22, 1
      %p341 = scmp.lt.s32.totalorder %s338, 7
      %s342 = scalar_select %p341, %s338, 7
      %s343 = smul.addr %s342, 2
      %s344 = smul.addr %s340, 16
      %s345 = sadd.s32 %s343, %s344
      %s346 = smul.addr %s345, 4
      %s347 = scalar_lea.vmem %s0, %s346
      %s348 = sadd.s32 %s23, %s24
      %s349 = ssub.s32 %s348, 1
      %p350 = scmp.gt.s32.totalorder %s349, 0
      %s351 = scalar_select %p350, %s349, 0
      %p352 = scmp.lt.s32.totalorder %s351, 7
      %s353 = scalar_select %p352, %s351, 7
      %p354 = scmp.lt.s32.totalorder %s22, 1
      %s355 = scalar_select %p354, %s22, 1
      %s356 = smul.addr %s355, 4
      %s357 = scalar_lea.vmem %s1, %s356
      %p358 = scmp.lt.s32.totalorder %s22, 1
      %s359 = scalar_select %p358, %s22, 1
      %s360 = smul.addr %s359, 4
      %s361 = scalar_lea.vmem %s2, %s360
      %p362 = scmp.lt.s32.totalorder %s22, 1
      %s363 = scalar_select %p362, %s22, 1
      %p364 = scmp.lt.s32.totalorder %s23, 7
      %s365 = scalar_select %p364, %s23, 7
      %s366 = smul.addr %s365, 2
      %s367 = smul.addr %s363, 16
      %s368 = sadd.s32 %s366, %s367
      %s369 = smul.addr %s368, 8
      %s370 = scalar_lea.vmem %s6, %s369
      %s372 = sadd.s32 %s23, %s24
      %s373 = ssub.s32 %s372, 1
      %p374 = scmp.ge.s32.totalorder %s373, 0
      %p375 = scmp.lt.s32.totalorder %s373, 8
      %p376 = pnand %p374, %p375
      %p377 = pneg %p376
      %p378 = scmp.eq.s32.totalorder %s24, 0
      // Predicated region
      $region45: #{adain_resblk_forward.5} parent=43 // pred_check
        %p379 = pneg %p378
      $region46: #{adain_resblk_forward.5} parent=43 // pred_check_branch
        %381 = sbr.rel (%p379) target = $region48
      $region47: #{adain_resblk_forward.5} parent=43 // pred_region
        %382 = vst [vmem:[#allocation2] sm:$0xff] 0.0
        %383 = vst [vmem:[#allocation2 + $0x8] sm:$0xff] 0.0
      $region48: #{adain_resblk_forward.5} parent=43 // pred_fallthru
        _
      // Predicated region
      $region49: #{adain_resblk_forward.5} parent=43 // pred_check
        _
      $region50: #{adain_resblk_forward.5} parent=43 // pred_check_branch
        %385 = sbr.rel (%p376) target = $region52
      $region51: #{adain_resblk_forward.5} parent=43 // pred_region
        %v386 = vld [vmem:[%s347] sm:$0xff]
        %v387 = vld [vmem:[%s357] sm:$0xf]
        %389 = vset.pattern.permute.xlu0 0
        %390 = vperm.xlu0 %389, %v387
        %v391 = vpop.permute.xlu0 %390
        %v393 = vunpack.c.l.s4 839922192
        %v394 = vunpack.c.0.s8 %v393
        %v395 = vlaneseq
        %v396 = vshrl.u32 %v395, 7
        %v397 = vsub.s32 %v394, %v396
        %v398 = vrot.slane %v391, %v397
        %v400 = vmul.f32 %v386, %v398
        %v401 = vld [vmem:[%s361] sm:$0xf]
        %403 = vset.pattern.permute.xlu0 0
        %404 = vperm.xlu0 %403, %v401
        %v405 = vpop.permute.xlu0 %404
        %v407 = vunpack.c.l.s4 839922192
        %v408 = vunpack.c.0.s8 %v407
        %v409 = vlaneseq
        %v410 = vshrl.u32 %v409, 7
        %v411 = vsub.s32 %v408, %v410
        %v412 = vrot.slane %v405, %v411
        %v414 = vadd.f32 %v400, %v412
        %vm415 = vcmp.ge.f32.partialorder %v414, 0.0
        %v416 = vmul.f32 %v414, 0.2
        %v417 = vsel %vm415, %v414, %v416
        %v419 = vcombine.high %v417, %v417
        %420 = vrot.lane.b32.xlu0 %v417, 17
        %v421 = vpop.permute.xlu0 %420
        %422 = vrot.lane.b32.xlu0 %v419, 17
        %v423 = vpop.permute.xlu0 %422
        %vm424 = vcmask 138240
        %v425 = vsel %vm424, %v421, %v423
        %v428 = vsel %vm424, 0.0, %v421
        %v429 = vld [vmem:[%s5] sm:$0x3]
        %v431 = vlaneseq
        %v432 = vshrl.u32 %v431, 7
        %v433 = vsub.s32 0, %v432
        %v434 = vrot.slane %v429, %v433
        %v435 = vlaneseq
        %v436 = vshrl.u32 %v435, 7
        %v437 = vsub.s32 1, %v436
        %v438 = vrot.slane %v429, %v437
        %v441 = vmul.f32 %v428, %v434
        %v442 = vmul.f32 %v425, %v438
        %s443 = smul.u32 %s24, 9
        %s444 = smul.addr %s443, 4
        %s445 = scalar_lea.vmem %s3, %s444
        %v446 = vld [vmem:[%s445] sm:$0xf]
        %v447 = vld [vmem:[#allocation2] sm:$0xff]
        %v448 = vld [vmem:[#allocation2 + $0x8] sm:$0xff]
        %v449 = vpack.c.bf16 %v441, %v441
        %v450 = vpack.c.bf16 %v442, %v442
        %vm451 = vcmask 31744
        %v453 = vsel %vm451, %v446, 0
        %vm455 = vcmask 1041408
        %v457 = vsel %vm455, %v449, 0
        %v460 = vsel %vm455, %v450, 0
        %462 = vmatprep.subr.bf16.mxu0 0
        %463 = vmatpush1.bf16.msra.mxu0 0
        %464 = vmatprep.subr.bf16.mxu0 0
        %465 = vmatpush1.bf16.msra.mxu0 0
        %466 = vmatprep.subr.bf16.mxu0 0
        %467 = vmatpush1.bf16.msra.mxu0 0
        %468 = vmatprep.subr.bf16.mxu0 0
        %469 = vmatpush1.bf16.msra.mxu0 0
        %470 = vmatprep.subr.bf16.mxu0 0
        %471 = vmatpush1.bf16.msra.mxu0 0
        %472 = vmatprep.subr.bf16.mxu0 0
        %473 = vmatpush1.bf16.msra.mxu0 0
        %474 = vmatprep.subr.bf16.mxu0 0
        %475 = vmatpush1.bf16.msra.mxu0 0
        %476 = vmatprep.subr.bf16.mxu0 %v460
        %477 = vmatpush1.bf16.msra.mxu0 %v457
        %478 = vmatprep.subr.bf16.mxu0 0
        %479 = vmatpush2.bf16.msra.mxu0 0
        %480 = vmatprep.subr.bf16.mxu0 0
        %481 = vmatpush2.bf16.msra.mxu0 0
        %482 = vmatprep.subr.bf16.mxu0 0
        %483 = vmatpush2.bf16.msra.mxu0 0
        %484 = vmatprep.subr.bf16.mxu0 0
        %485 = vmatpush2.bf16.msra.mxu0 0
        %486 = vmatprep.subr.bf16.mxu0 0
        %487 = vmatpush2.bf16.msra.mxu0 0
        %488 = vmatprep.subr.bf16.mxu0 0
        %489 = vmatpush2.bf16.msra.mxu0 0
        %490 = vmatprep.subr.bf16.mxu0 0
        %491 = vmatpush2.bf16.msra.mxu0 0
        %492 = vmatprep.subr.bf16.mxu0 0
        %493 = vmatpush2.bf16.msra.mxu0 0
        %494 = vmatprep.mubr.bf16.mxu0 0
        %495 = vmatmul.mubr.bf16.gmra.mxu0 %v453
        %v496 = vpop.f32.mrf.mxu0
        %v497 = vadd.f32 0.0, %v496
        %v498 = vpop.f32.mrf.mxu0
        %v499 = vadd.f32 0.0, %v498
        %v500 = vpop.f32.mrf.mxu0
        %v501 = vpop.f32.mrf.mxu0
        %502 = vdwg.mxu0
        %v503 = vadd.f32 %v447, %v497
        %v504 = vadd.f32 %v448, %v499
        %505 = vst [vmem:[#allocation2] sm:$0xff] %v503
        %506 = vst [vmem:[#allocation2 + $0x8] sm:$0xff] %v504
        %507 = vrot.lane.b32.xlu0 %v417, 16
        %v508 = vpop.permute.xlu0 %507
        %509 = vrot.lane.b32.xlu0 %v419, 16
        %v510 = vpop.permute.xlu0 %509
        %vm511 = vcmask 130048
        %v512 = vsel %vm511, %v508, %v510
        %v515 = vsel %vm511, 0.0, %v508
        %s516 = scalar_lea.vmem %s5, 2
        %v517 = vld [vmem:[%s516] sm:$0x3]
        %v519 = vlaneseq
        %v520 = vshrl.u32 %v519, 7
        %v521 = vsub.s32 0, %v520
        %v522 = vrot.slane %v517, %v521
        %v523 = vlaneseq
        %v524 = vshrl.u32 %v523, 7
        %v525 = vsub.s32 1, %v524
        %v526 = vrot.slane %v517, %v525
        %v529 = vmul.f32 %v515, %v522
        %v530 = vmul.f32 %v512, %v526
        %s531 = sadd.s32 %s443, 1
        %s532 = smul.addr %s531, 4
        %s533 = scalar_lea.vmem %s3, %s532
        %v534 = vld [vmem:[%s533] sm:$0xf]
        %v535 = vld [vmem:[#allocation2] sm:$0xff]
        %v536 = vld [vmem:[#allocation2 + $0x8] sm:$0xff]
        %v537 = vpack.c.bf16 %v529, %v529
        %v538 = vpack.c.bf16 %v530, %v530
        %v540 = vsel %vm451, %v534, 0
        %v543 = vsel %vm455, %v537, 0
        %v546 = vsel %vm455, %v538, 0
        %548 = vmatprep.subr.bf16.mxu0 0
        %549 = vmatpush1.bf16.msra.mxu0 0
        %550 = vmatprep.subr.bf16.mxu0 0
        %551 = vmatpush1.bf16.msra.mxu0 0
        %552 = vmatprep.subr.bf16.mxu0 0
        %553 = vmatpush1.bf16.msra.mxu0 0
        %554 = vmatprep.subr.bf16.mxu0 0
        %555 = vmatpush1.bf16.msra.mxu0 0
        %556 = vmatprep.subr.bf16.mxu0 0
        %557 = vmatpush1.bf16.msra.mxu0 0
        %558 = vmatprep.subr.bf16.mxu0 0
        %559 = vmatpush1.bf16.msra.mxu0 0
        %560 = vmatprep.subr.bf16.mxu0 0
        %561 = vmatpush1.bf16.msra.mxu0 0
        %562 = vmatprep.subr.bf16.mxu0 %v546
        %563 = vmatpush1.bf16.msra.mxu0 %v543
        %564 = vmatprep.subr.bf16.mxu0 0
        %565 = vmatpush2.bf16.msra.mxu0 0
        %566 = vmatprep.subr.bf16.mxu0 0
        %567 = vmatpush2.bf16.msra.mxu0 0
        %568 = vmatprep.subr.bf16.mxu0 0
        %569 = vmatpush2.bf16.msra.mxu0 0
        %570 = vmatprep.subr.bf16.mxu0 0
        %571 = vmatpush2.bf16.msra.mxu0 0
        %572 = vmatprep.subr.bf16.mxu0 0
        %573 = vmatpush2.bf16.msra.mxu0 0
        %574 = vmatprep.subr.bf16.mxu0 0
        %575 = vmatpush2.bf16.msra.mxu0 0
        %576 = vmatprep.subr.bf16.mxu0 0
        %577 = vmatpush2.bf16.msra.mxu0 0
        %578 = vmatprep.subr.bf16.mxu0 0
        %579 = vmatpush2.bf16.msra.mxu0 0
        %580 = vmatprep.mubr.bf16.mxu0 0
        %581 = vmatmul.mubr.bf16.gmra.mxu0 %v540
        %v582 = vpop.f32.mrf.mxu0
        %v583 = vadd.f32 0.0, %v582
        %v584 = vpop.f32.mrf.mxu0
        %v585 = vadd.f32 0.0, %v584
        %v586 = vpop.f32.mrf.mxu0
        %v587 = vpop.f32.mrf.mxu0
        %588 = vdwg.mxu0
        %v589 = vadd.f32 %v535, %v583
        %v590 = vadd.f32 %v536, %v585
        %591 = vst [vmem:[#allocation2] sm:$0xff] %v589
        %592 = vst [vmem:[#allocation2 + $0x8] sm:$0xff] %v590
        %593 = vrot.lane.b32.xlu0 %v417, 15
        %v594 = vpop.permute.xlu0 %593
        %595 = vrot.lane.b32.xlu0 %v419, 15
        %v596 = vpop.permute.xlu0 %595
        %vm597 = vcmask 121856
        %v598 = vsel %vm597, %v594, %v596
        %v601 = vsel %vm597, 0.0, %v594
        %s602 = scalar_lea.vmem %s5, 4
        %v603 = vld [vmem:[%s602] sm:$0x3]
        %v605 = vlaneseq
        %v606 = vshrl.u32 %v605, 7
        %v607 = vsub.s32 0, %v606
        %v608 = vrot.slane %v603, %v607
        %v609 = vlaneseq
        %v610 = vshrl.u32 %v609, 7
        %v611 = vsub.s32 1, %v610
        %v612 = vrot.slane %v603, %v611
        %v615 = vmul.f32 %v601, %v608
        %v616 = vmul.f32 %v598, %v612
        %s617 = sadd.s32 %s443, 2
        %s618 = smul.addr %s617, 4
        %s619 = scalar_lea.vmem %s3, %s618
        %v620 = vld [vmem:[%s619] sm:$0xf]
        %v621 = vld [vmem:[#allocation2] sm:$0xff]
        %v622 = vld [vmem:[#allocation2 + $0x8] sm:$0xff]
        %v623 = vpack.c.bf16 %v615, %v615
        %v624 = vpack.c.bf16 %v616, %v616
        %v626 = vsel %vm451, %v620, 0
        %v629 = vsel %vm455, %v623, 0
        %v632 = vsel %vm455, %v624, 0
        %634 = vmatprep.subr.bf16.mxu0 0
        %635 = vmatpush1.bf16.msra.mxu0 0
        %636 = vmatprep.subr.bf16.mxu0 0
        %637 = vmatpush1.bf16.msra.mxu0 0
        %638 = vmatprep.subr.bf16.mxu0 0
        %639 = vmatpush1.bf16.msra.mxu0 0
        %640 = vmatprep.subr.bf16.mxu0 0
        %641 = vmatpush1.bf16.msra.mxu0 0
        %642 = vmatprep.subr.bf16.mxu0 0
        %643 = vmatpush1.bf16.msra.mxu0 0
        %644 = vmatprep.subr.bf16.mxu0 0
        %645 = vmatpush1.bf16.msra.mxu0 0
        %646 = vmatprep.subr.bf16.mxu0 0
        %647 = vmatpush1.bf16.msra.mxu0 0
        %648 = vmatprep.subr.bf16.mxu0 %v632
        %649 = vmatpush1.bf16.msra.mxu0 %v629
        %650 = vmatprep.subr.bf16.mxu0 0
        %651 = vmatpush2.bf16.msra.mxu0 0
        %652 = vmatprep.subr.bf16.mxu0 0
        %653 = vmatpush2.bf16.msra.mxu0 0
        %654 = vmatprep.subr.bf16.mxu0 0
        %655 = vmatpush2.bf16.msra.mxu0 0
        %656 = vmatprep.subr.bf16.mxu0 0
        %657 = vmatpush2.bf16.msra.mxu0 0
        %658 = vmatprep.subr.bf16.mxu0 0
        %659 = vmatpush2.bf16.msra.mxu0 0
        %660 = vmatprep.subr.bf16.mxu0 0
        %661 = vmatpush2.bf16.msra.mxu0 0
        %662 = vmatprep.subr.bf16.mxu0 0
        %663 = vmatpush2.bf16.msra.mxu0 0
        %664 = vmatprep.subr.bf16.mxu0 0
        %665 = vmatpush2.bf16.msra.mxu0 0
        %666 = vmatprep.mubr.bf16.mxu0 0
        %667 = vmatmul.mubr.bf16.gmra.mxu0 %v626
        %v668 = vpop.f32.mrf.mxu0
        %v669 = vadd.f32 0.0, %v668
        %v670 = vpop.f32.mrf.mxu0
        %v671 = vadd.f32 0.0, %v670
        %v672 = vpop.f32.mrf.mxu0
        %v673 = vpop.f32.mrf.mxu0
        %674 = vdwg.mxu0
        %v675 = vadd.f32 %v621, %v669
        %v676 = vadd.f32 %v622, %v671
        %677 = vst [vmem:[#allocation2] sm:$0xff] %v675
        %678 = vst [vmem:[#allocation2 + $0x8] sm:$0xff] %v676
        %679 = vrot.lane.b32.xlu0 %v417, 1
        %v680 = vpop.permute.xlu0 %679
        %681 = vrot.lane.b32.xlu0 %v419, 1
        %v682 = vpop.permute.xlu0 %681
        %vm683 = vcmask 7168
        %v684 = vsel %vm683, %v680, %v682
        %v687 = vsel %vm683, 0.0, %v680
        %s688 = scalar_lea.vmem %s5, 6
        %v689 = vld [vmem:[%s688] sm:$0x3]
        %v691 = vlaneseq
        %v692 = vshrl.u32 %v691, 7
        %v693 = vsub.s32 0, %v692
        %v694 = vrot.slane %v689, %v693
        %v695 = vlaneseq
        %v696 = vshrl.u32 %v695, 7
        %v697 = vsub.s32 1, %v696
        %v698 = vrot.slane %v689, %v697
        %v701 = vmul.f32 %v687, %v694
        %v702 = vmul.f32 %v684, %v698
        %s703 = sadd.s32 %s443, 3
        %s704 = smul.addr %s703, 4
        %s705 = scalar_lea.vmem %s3, %s704
        %v706 = vld [vmem:[%s705] sm:$0xf]
        %v707 = vld [vmem:[#allocation2] sm:$0xff]
        %v708 = vld [vmem:[#allocation2 + $0x8] sm:$0xff]
        %v709 = vpack.c.bf16 %v701, %v701
        %v710 = vpack.c.bf16 %v702, %v702
        %v712 = vsel %vm451, %v706, 0
        %v715 = vsel %vm455, %v709, 0
        %v718 = vsel %vm455, %v710, 0
        %720 = vmatprep.subr.bf16.mxu0 0
        %721 = vmatpush1.bf16.msra.mxu0 0
        %722 = vmatprep.subr.bf16.mxu0 0
        %723 = vmatpush1.bf16.msra.mxu0 0
        %724 = vmatprep.subr.bf16.mxu0 0
        %725 = vmatpush1.bf16.msra.mxu0 0
        %726 = vmatprep.subr.bf16.mxu0 0
        %727 = vmatpush1.bf16.msra.mxu0 0
        %728 = vmatprep.subr.bf16.mxu0 0
        %729 = vmatpush1.bf16.msra.mxu0 0
        %730 = vmatprep.subr.bf16.mxu0 0
        %731 = vmatpush1.bf16.msra.mxu0 0
        %732 = vmatprep.subr.bf16.mxu0 0
        %733 = vmatpush1.bf16.msra.mxu0 0
        %734 = vmatprep.subr.bf16.mxu0 %v718
        %735 = vmatpush1.bf16.msra.mxu0 %v715
        %736 = vmatprep.subr.bf16.mxu0 0
        %737 = vmatpush2.bf16.msra.mxu0 0
        %738 = vmatprep.subr.bf16.mxu0 0
        %739 = vmatpush2.bf16.msra.mxu0 0
        %740 = vmatprep.subr.bf16.mxu0 0
        %741 = vmatpush2.bf16.msra.mxu0 0
        %742 = vmatprep.subr.bf16.mxu0 0
        %743 = vmatpush2.bf16.msra.mxu0 0
        %744 = vmatprep.subr.bf16.mxu0 0
        %745 = vmatpush2.bf16.msra.mxu0 0
        %746 = vmatprep.subr.bf16.mxu0 0
        %747 = vmatpush2.bf16.msra.mxu0 0
        %748 = vmatprep.subr.bf16.mxu0 0
        %749 = vmatpush2.bf16.msra.mxu0 0
        %750 = vmatprep.subr.bf16.mxu0 0
        %751 = vmatpush2.bf16.msra.mxu0 0
        %752 = vmatprep.mubr.bf16.mxu0 0
        %753 = vmatmul.mubr.bf16.gmra.mxu0 %v712
        %v754 = vpop.f32.mrf.mxu0
        %v755 = vadd.f32 0.0, %v754
        %v756 = vpop.f32.mrf.mxu0
        %v757 = vadd.f32 0.0, %v756
        %v758 = vpop.f32.mrf.mxu0
        %v759 = vpop.f32.mrf.mxu0
        %760 = vdwg.mxu0
        %v761 = vadd.f32 %v707, %v755
        %v762 = vadd.f32 %v708, %v757
        %763 = vst [vmem:[#allocation2] sm:$0xff] %v761
        %764 = vst [vmem:[#allocation2 + $0x8] sm:$0xff] %v762
        %s765 = scalar_lea.vmem %s5, 8
        %v766 = vld [vmem:[%s765] sm:$0x3]
        %v768 = vlaneseq
        %v769 = vshrl.u32 %v768, 7
        %v770 = vsub.s32 0, %v769
        %v771 = vrot.slane %v766, %v770
        %v772 = vlaneseq
        %v773 = vshrl.u32 %v772, 7
        %v774 = vsub.s32 1, %v773
        %v775 = vrot.slane %v766, %v774
        %v776 = vcombine.low %v771, %v775
        %v778 = vmul.f32 %v417, %v776
        %s779 = sadd.s32 %s443, 4
        %s780 = smul.addr %s779, 4
        %s781 = scalar_lea.vmem %s3, %s780
        %v782 = vld [vmem:[%s781] sm:$0xf]
        %v783 = vld [vmem:[#allocation2] sm:$0xff]
        %v784 = vld [vmem:[#allocation2 + $0x8] sm:$0xff]
        %v786 = vcombine.high %v778, %v778
        %v788 = vpack.c.bf16 %v778, %v778
        %v789 = vpack.c.bf16 %v786, %v786
        %v791 = vsel %vm451, %v782, 0
        %v794 = vsel %vm455, %v788, 0
        %v797 = vsel %vm455, %v789, 0
        %799 = vmatprep.subr.bf16.mxu0 0
        %800 = vmatpush1.bf16.msra.mxu0 0
        %801 = vmatprep.subr.bf16.mxu0 0
        %802 = vmatpush1.bf16.msra.mxu0 0
        %803 = vmatprep.subr.bf16.mxu0 0
        %804 = vmatpush1.bf16.msra.mxu0 0
        %805 = vmatprep.subr.bf16.mxu0 0
        %806 = vmatpush1.bf16.msra.mxu0 0
        %807 = vmatprep.subr.bf16.mxu0 0
        %808 = vmatpush1.bf16.msra.mxu0 0
        %809 = vmatprep.subr.bf16.mxu0 0
        %810 = vmatpush1.bf16.msra.mxu0 0
        %811 = vmatprep.subr.bf16.mxu0 0
        %812 = vmatpush1.bf16.msra.mxu0 0
        %813 = vmatprep.subr.bf16.mxu0 %v797
        %814 = vmatpush1.bf16.msra.mxu0 %v794
        %815 = vmatprep.subr.bf16.mxu0 0
        %816 = vmatpush2.bf16.msra.mxu0 0
        %817 = vmatprep.subr.bf16.mxu0 0
        %818 = vmatpush2.bf16.msra.mxu0 0
        %819 = vmatprep.subr.bf16.mxu0 0
        %820 = vmatpush2.bf16.msra.mxu0 0
        %821 = vmatprep.subr.bf16.mxu0 0
        %822 = vmatpush2.bf16.msra.mxu0 0
        %823 = vmatprep.subr.bf16.mxu0 0
        %824 = vmatpush2.bf16.msra.mxu0 0
        %825 = vmatprep.subr.bf16.mxu0 0
        %826 = vmatpush2.bf16.msra.mxu0 0
        %827 = vmatprep.subr.bf16.mxu0 0
        %828 = vmatpush2.bf16.msra.mxu0 0
        %829 = vmatprep.subr.bf16.mxu0 0
        %830 = vmatpush2.bf16.msra.mxu0 0
        %831 = vmatprep.mubr.bf16.mxu0 0
        %832 = vmatmul.mubr.bf16.gmra.mxu0 %v791
        %v833 = vpop.f32.mrf.mxu0
        %v834 = vadd.f32 0.0, %v833
        %v835 = vpop.f32.mrf.mxu0
        %v836 = vadd.f32 0.0, %v835
        %v837 = vpop.f32.mrf.mxu0
        %v838 = vpop.f32.mrf.mxu0
        %839 = vdwg.mxu0
        %v840 = vadd.f32 %v783, %v834
        %v841 = vadd.f32 %v784, %v836
        %842 = vst [vmem:[#allocation2] sm:$0xff] %v840
        %843 = vst [vmem:[#allocation2 + $0x8] sm:$0xff] %v841
        %844 = vrot.lane.b32.xlu0 %v417, 127
        %v845 = vpop.permute.xlu0 %844
        %846 = vrot.lane.b32.xlu0 %v419, 127
        %v847 = vpop.permute.xlu0 %846
        %vm848 = vcmask 1039360
        %v849 = vsel %vm848, %v845, %v847
        %v852 = vsel %vm848, %v847, 0.0
        %s853 = scalar_lea.vmem %s5, 10
        %v854 = vld [vmem:[%s853] sm:$0x3]
        %v856 = vlaneseq
        %v857 = vshrl.u32 %v856, 7
        %v858 = vsub.s32 0, %v857
        %v859 = vrot.slane %v854, %v858
        %v860 = vlaneseq
        %v861 = vshrl.u32 %v860, 7
        %v862 = vsub.s32 1, %v861
        %v863 = vrot.slane %v854, %v862
        %v866 = vmul.f32 %v849, %v859
        %v867 = vmul.f32 %v852, %v863
        %s868 = sadd.s32 %s443, 5
        %s869 = smul.addr %s868, 4
        %s870 = scalar_lea.vmem %s3, %s869
        %v871 = vld [vmem:[%s870] sm:$0xf]
        %v872 = vld [vmem:[#allocation2] sm:$0xff]
        %v873 = vld [vmem:[#allocation2 + $0x8] sm:$0xff]
        %v874 = vpack.c.bf16 %v866, %v866
        %v875 = vpack.c.bf16 %v867, %v867
        %v877 = vsel %vm451, %v871, 0
        %v880 = vsel %vm455, %v874, 0
        %v883 = vsel %vm455, %v875, 0
        %885 = vmatprep.subr.bf16.mxu0 0
        %886 = vmatpush1.bf16.msra.mxu0 0
        %887 = vmatprep.subr.bf16.mxu0 0
        %888 = vmatpush1.bf16.msra.mxu0 0
        %889 = vmatprep.subr.bf16.mxu0 0
        %890 = vmatpush1.bf16.msra.mxu0 0
        %891 = vmatprep.subr.bf16.mxu0 0
        %892 = vmatpush1.bf16.msra.mxu0 0
        %893 = vmatprep.subr.bf16.mxu0 0
        %894 = vmatpush1.bf16.msra.mxu0 0
        %895 = vmatprep.subr.bf16.mxu0 0
        %896 = vmatpush1.bf16.msra.mxu0 0
        %897 = vmatprep.subr.bf16.mxu0 0
        %898 = vmatpush1.bf16.msra.mxu0 0
        %899 = vmatprep.subr.bf16.mxu0 %v883
        %900 = vmatpush1.bf16.msra.mxu0 %v880
        %901 = vmatprep.subr.bf16.mxu0 0
        %902 = vmatpush2.bf16.msra.mxu0 0
        %903 = vmatprep.subr.bf16.mxu0 0
        %904 = vmatpush2.bf16.msra.mxu0 0
        %905 = vmatprep.subr.bf16.mxu0 0
        %906 = vmatpush2.bf16.msra.mxu0 0
        %907 = vmatprep.subr.bf16.mxu0 0
        %908 = vmatpush2.bf16.msra.mxu0 0
        %909 = vmatprep.subr.bf16.mxu0 0
        %910 = vmatpush2.bf16.msra.mxu0 0
        %911 = vmatprep.subr.bf16.mxu0 0
        %912 = vmatpush2.bf16.msra.mxu0 0
        %913 = vmatprep.subr.bf16.mxu0 0
        %914 = vmatpush2.bf16.msra.mxu0 0
        %915 = vmatprep.subr.bf16.mxu0 0
        %916 = vmatpush2.bf16.msra.mxu0 0
        %917 = vmatprep.mubr.bf16.mxu0 0
        %918 = vmatmul.mubr.bf16.gmra.mxu0 %v877
        %v919 = vpop.f32.mrf.mxu0
        %v920 = vadd.f32 0.0, %v919
        %v921 = vpop.f32.mrf.mxu0
        %v922 = vadd.f32 0.0, %v921
        %v923 = vpop.f32.mrf.mxu0
        %v924 = vpop.f32.mrf.mxu0
        %925 = vdwg.mxu0
        %v926 = vadd.f32 %v872, %v920
        %v927 = vadd.f32 %v873, %v922
        %928 = vst [vmem:[#allocation2] sm:$0xff] %v926
        %929 = vst [vmem:[#allocation2 + $0x8] sm:$0xff] %v927
        %930 = vrot.lane.b32.xlu0 %v417, 113
        %v931 = vpop.permute.xlu0 %930
        %932 = vrot.lane.b32.xlu0 %v419, 113
        %v933 = vpop.permute.xlu0 %932
        %vm934 = vcmask 924672
        %v935 = vsel %vm934, %v931, %v933
        %v938 = vsel %vm934, %v933, 0.0
        %s939 = scalar_lea.vmem %s5, 12
        %v940 = vld [vmem:[%s939] sm:$0x3]
        %v942 = vlaneseq
        %v943 = vshrl.u32 %v942, 7
        %v944 = vsub.s32 0, %v943
        %v945 = vrot.slane %v940, %v944
        %v946 = vlaneseq
        %v947 = vshrl.u32 %v946, 7
        %v948 = vsub.s32 1, %v947
        %v949 = vrot.slane %v940, %v948
        %v952 = vmul.f32 %v935, %v945
        %v953 = vmul.f32 %v938, %v949
        %s954 = sadd.s32 %s443, 6
        %s955 = smul.addr %s954, 4
        %s956 = scalar_lea.vmem %s3, %s955
        %v957 = vld [vmem:[%s956] sm:$0xf]
        %v958 = vld [vmem:[#allocation2] sm:$0xff]
        %v959 = vld [vmem:[#allocation2 + $0x8] sm:$0xff]
        %v960 = vpack.c.bf16 %v952, %v952
        %v961 = vpack.c.bf16 %v953, %v953
        %v963 = vsel %vm451, %v957, 0
        %v966 = vsel %vm455, %v960, 0
        %v969 = vsel %vm455, %v961, 0
        %971 = vmatprep.subr.bf16.mxu0 0
        %972 = vmatpush1.bf16.msra.mxu0 0
        %973 = vmatprep.subr.bf16.mxu0 0
        %974 = vmatpush1.bf16.msra.mxu0 0
        %975 = vmatprep.subr.bf16.mxu0 0
        %976 = vmatpush1.bf16.msra.mxu0 0
        %977 = vmatprep.subr.bf16.mxu0 0
        %978 = vmatpush1.bf16.msra.mxu0 0
        %979 = vmatprep.subr.bf16.mxu0 0
        %980 = vmatpush1.bf16.msra.mxu0 0
        %981 = vmatprep.subr.bf16.mxu0 0
        %982 = vmatpush1.bf16.msra.mxu0 0
        %983 = vmatprep.subr.bf16.mxu0 0
        %984 = vmatpush1.bf16.msra.mxu0 0
        %985 = vmatprep.subr.bf16.mxu0 %v969
        %986 = vmatpush1.bf16.msra.mxu0 %v966
        %987 = vmatprep.subr.bf16.mxu0 0
        %988 = vmatpush2.bf16.msra.mxu0 0
        %989 = vmatprep.subr.bf16.mxu0 0
        %990 = vmatpush2.bf16.msra.mxu0 0
        %991 = vmatprep.subr.bf16.mxu0 0
        %992 = vmatpush2.bf16.msra.mxu0 0
        %993 = vmatprep.subr.bf16.mxu0 0
        %994 = vmatpush2.bf16.msra.mxu0 0
        %995 = vmatprep.subr.bf16.mxu0 0
        %996 = vmatpush2.bf16.msra.mxu0 0
        %997 = vmatprep.subr.bf16.mxu0 0
        %998 = vmatpush2.bf16.msra.mxu0 0
        %999 = vmatprep.subr.bf16.mxu0 0
        %1000 = vmatpush2.bf16.msra.mxu0 0
        %1001 = vmatprep.subr.bf16.mxu0 0
        %1002 = vmatpush2.bf16.msra.mxu0 0
        %1003 = vmatprep.mubr.bf16.mxu0 0
        %1004 = vmatmul.mubr.bf16.gmra.mxu0 %v963
        %v1005 = vpop.f32.mrf.mxu0
        %v1006 = vadd.f32 0.0, %v1005
        %v1007 = vpop.f32.mrf.mxu0
        %v1008 = vadd.f32 0.0, %v1007
        %v1009 = vpop.f32.mrf.mxu0
        %v1010 = vpop.f32.mrf.mxu0
        %1011 = vdwg.mxu0
        %v1012 = vadd.f32 %v958, %v1006
        %v1013 = vadd.f32 %v959, %v1008
        %1014 = vst [vmem:[#allocation2] sm:$0xff] %v1012
        %1015 = vst [vmem:[#allocation2 + $0x8] sm:$0xff] %v1013
        %1016 = vrot.lane.b32.xlu0 %v417, 112
        %v1017 = vpop.permute.xlu0 %1016
        %1018 = vrot.lane.b32.xlu0 %v419, 112
        %v1019 = vpop.permute.xlu0 %1018
        %vm1020 = vcmask 916480
        %v1021 = vsel %vm1020, %v1017, %v1019
        %v1024 = vsel %vm1020, %v1019, 0.0
        %s1025 = scalar_lea.vmem %s5, 14
        %v1026 = vld [vmem:[%s1025] sm:$0x3]
        %v1028 = vlaneseq
        %v1029 = vshrl.u32 %v1028, 7
        %v1030 = vsub.s32 0, %v1029
        %v1031 = vrot.slane %v1026, %v1030
        %v1032 = vlaneseq
        %v1033 = vshrl.u32 %v1032, 7
        %v1034 = vsub.s32 1, %v1033
        %v1035 = vrot.slane %v1026, %v1034
        %v1038 = vmul.f32 %v1021, %v1031
        %v1039 = vmul.f32 %v1024, %v1035
        %s1040 = sadd.s32 %s443, 7
        %s1041 = smul.addr %s1040, 4
        %s1042 = scalar_lea.vmem %s3, %s1041
        %v1043 = vld [vmem:[%s1042] sm:$0xf]
        %v1044 = vld [vmem:[#allocation2] sm:$0xff]
        %v1045 = vld [vmem:[#allocation2 + $0x8] sm:$0xff]
        %v1046 = vpack.c.bf16 %v1038, %v1038
        %v1047 = vpack.c.bf16 %v1039, %v1039
        %v1049 = vsel %vm451, %v1043, 0
        %v1052 = vsel %vm455, %v1046, 0
        %v1055 = vsel %vm455, %v1047, 0
        %1057 = vmatprep.subr.bf16.mxu0 0
        %1058 = vmatpush1.bf16.msra.mxu0 0
        %1059 = vmatprep.subr.bf16.mxu0 0
        %1060 = vmatpush1.bf16.msra.mxu0 0
        %1061 = vmatprep.subr.bf16.mxu0 0
        %1062 = vmatpush1.bf16.msra.mxu0 0
        %1063 = vmatprep.subr.bf16.mxu0 0
        %1064 = vmatpush1.bf16.msra.mxu0 0
        %1065 = vmatprep.subr.bf16.mxu0 0
        %1066 = vmatpush1.bf16.msra.mxu0 0
        %1067 = vmatprep.subr.bf16.mxu0 0
        %1068 = vmatpush1.bf16.msra.mxu0 0
        %1069 = vmatprep.subr.bf16.mxu0 0
        %1070 = vmatpush1.bf16.msra.mxu0 0
        %1071 = vmatprep.subr.bf16.mxu0 %v1055
        %1072 = vmatpush1.bf16.msra.mxu0 %v1052
        %1073 = vmatprep.subr.bf16.mxu0 0
        %1074 = vmatpush2.bf16.msra.mxu0 0
        %1075 = vmatprep.subr.bf16.mxu0 0
        %1076 = vmatpush2.bf16.msra.mxu0 0
        %1077 = vmatprep.subr.bf16.mxu0 0
        %1078 = vmatpush2.bf16.msra.mxu0 0
        %1079 = vmatprep.subr.bf16.mxu0 0
        %1080 = vmatpush2.bf16.msra.mxu0 0
        %1081 = vmatprep.subr.bf16.mxu0 0
        %1082 = vmatpush2.bf16.msra.mxu0 0
        %1083 = vmatprep.subr.bf16.mxu0 0
        %1084 = vmatpush2.bf16.msra.mxu0 0
        %1085 = vmatprep.subr.bf16.mxu0 0
        %1086 = vmatpush2.bf16.msra.mxu0 0
        %1087 = vmatprep.subr.bf16.mxu0 0
        %1088 = vmatpush2.bf16.msra.mxu0 0
        %1089 = vmatprep.mubr.bf16.mxu0 0
        %1090 = vmatmul.mubr.bf16.gmra.mxu0 %v1049
        %v1091 = vpop.f32.mrf.mxu0
        %v1092 = vadd.f32 0.0, %v1091
        %v1093 = vpop.f32.mrf.mxu0
        %v1094 = vadd.f32 0.0, %v1093
        %v1095 = vpop.f32.mrf.mxu0
        %v1096 = vpop.f32.mrf.mxu0
        %1097 = vdwg.mxu0
        %v1098 = vadd.f32 %v1044, %v1092
        %v1099 = vadd.f32 %v1045, %v1094
        %1100 = vst [vmem:[#allocation2] sm:$0xff] %v1098
        %1101 = vst [vmem:[#allocation2 + $0x8] sm:$0xff] %v1099
        %1102 = vrot.lane.b32.xlu0 %v417, 111
        %v1103 = vpop.permute.xlu0 %1102
        %1104 = vrot.lane.b32.xlu0 %v419, 111
        %v1105 = vpop.permute.xlu0 %1104
        %vm1106 = vcmask 908288
        %v1107 = vsel %vm1106, %v1103, %v1105
        %v1110 = vsel %vm1106, %v1105, 0.0
        %s1111 = scalar_lea.vmem %s5, 16
        %v1112 = vld [vmem:[%s1111] sm:$0x3]
        %v1114 = vlaneseq
        %v1115 = vshrl.u32 %v1114, 7
        %v1116 = vsub.s32 0, %v1115
        %v1117 = vrot.slane %v1112, %v1116
        %v1118 = vlaneseq
        %v1119 = vshrl.u32 %v1118, 7
        %v1120 = vsub.s32 1, %v1119
        %v1121 = vrot.slane %v1112, %v1120
        %v1124 = vmul.f32 %v1107, %v1117
        %v1125 = vmul.f32 %v1110, %v1121
        %s1126 = sadd.s32 %s443, 8
        %s1127 = smul.addr %s1126, 4
        %s1128 = scalar_lea.vmem %s3, %s1127
        %v1129 = vld [vmem:[%s1128] sm:$0xf]
        %v1130 = vld [vmem:[#allocation2] sm:$0xff]
        %v1131 = vld [vmem:[#allocation2 + $0x8] sm:$0xff]
        %v1132 = vpack.c.bf16 %v1124, %v1124
        %v1133 = vpack.c.bf16 %v1125, %v1125
        %v1135 = vsel %vm451, %v1129, 0
        %v1138 = vsel %vm455, %v1132, 0
        %v1141 = vsel %vm455, %v1133, 0
        %1143 = vmatprep.subr.bf16.mxu0 0
        %1144 = vmatpush1.bf16.msra.mxu0 0
        %1145 = vmatprep.subr.bf16.mxu0 0
        %1146 = vmatpush1.bf16.msra.mxu0 0
        %1147 = vmatprep.subr.bf16.mxu0 0
        %1148 = vmatpush1.bf16.msra.mxu0 0
        %1149 = vmatprep.subr.bf16.mxu0 0
        %1150 = vmatpush1.bf16.msra.mxu0 0
        %1151 = vmatprep.subr.bf16.mxu0 0
        %1152 = vmatpush1.bf16.msra.mxu0 0
        %1153 = vmatprep.subr.bf16.mxu0 0
        %1154 = vmatpush1.bf16.msra.mxu0 0
        %1155 = vmatprep.subr.bf16.mxu0 0
        %1156 = vmatpush1.bf16.msra.mxu0 0
        %1157 = vmatprep.subr.bf16.mxu0 %v1141
        %1158 = vmatpush1.bf16.msra.mxu0 %v1138
        %1159 = vmatprep.subr.bf16.mxu0 0
        %1160 = vmatpush2.bf16.msra.mxu0 0
        %1161 = vmatprep.subr.bf16.mxu0 0
        %1162 = vmatpush2.bf16.msra.mxu0 0
        %1163 = vmatprep.subr.bf16.mxu0 0
        %1164 = vmatpush2.bf16.msra.mxu0 0
        %1165 = vmatprep.subr.bf16.mxu0 0
        %1166 = vmatpush2.bf16.msra.mxu0 0
        %1167 = vmatprep.subr.bf16.mxu0 0
        %1168 = vmatpush2.bf16.msra.mxu0 0
        %1169 = vmatprep.subr.bf16.mxu0 0
        %1170 = vmatpush2.bf16.msra.mxu0 0
        %1171 = vmatprep.subr.bf16.mxu0 0
        %1172 = vmatpush2.bf16.msra.mxu0 0
        %1173 = vmatprep.subr.bf16.mxu0 0
        %1174 = vmatpush2.bf16.msra.mxu0 0
        %1175 = vmatprep.mubr.bf16.mxu0 0
        %1176 = vmatmul.mubr.bf16.gmra.mxu0 %v1135
        %v1177 = vpop.f32.mrf.mxu0
        %v1178 = vadd.f32 0.0, %v1177
        %v1179 = vpop.f32.mrf.mxu0
        %v1180 = vadd.f32 0.0, %v1179
        %v1181 = vpop.f32.mrf.mxu0
        %v1182 = vpop.f32.mrf.mxu0
        %1183 = vdwg.mxu0
        %v1184 = vadd.f32 %v1130, %v1178
        %v1185 = vadd.f32 %v1131, %v1180
        %1186 = vst [vmem:[#allocation2] sm:$0xff] %v1184
        %1187 = vst [vmem:[#allocation2 + $0x8] sm:$0xff] %v1185
      $region52: #{adain_resblk_forward.5} parent=43 // pred_fallthru
        _
      %p1188 = scmp.eq.s32.totalorder %s24, 2
      // Predicated region
      $region53: #{adain_resblk_forward.5} parent=43 // pred_check
        %p1189 = pneg %p1188
      $region54: #{adain_resblk_forward.5} parent=43 // pred_check_branch
        %1191 = sbr.rel (%p1189) target = $region56
      $region55: #{adain_resblk_forward.5} parent=43 // pred_region
        %v1192 = vld [vmem:[#allocation2] sm:$0xff]
        %v1193 = vld [vmem:[#allocation2 + $0x8] sm:$0xff]
        %v1194 = vld [vmem:[%s4] sm:$0xff]
        %1196 = vset.pattern.permute.xlu0 0
        %1197 = vperm.xlu0 %1196, %v1194
        %v1198 = vpop.permute.xlu0 %1197
        %v1200 = vadd.f32 %v1192, %v1198
        %v1201 = vadd.f32 %v1193, %v1198
        %1202 = vst [vmem:[%s370] sm:$0xff] %v1200
        %1203 = vst [vmem:[%s370 + $0x8] sm:$0xff] %v1201
      $region56: #{adain_resblk_forward.5} parent=43 // pred_fallthru
        _
      %p1204 = scmp.lt.s32.totalorder %s22, 1
      %s1205 = scalar_select %p1204, %s22, 1
      %p1206 = scmp.lt.s32.totalorder %s23, 7
      %s1207 = scalar_select %p1206, %s23, 7
      %s1208 = smul.addr %s1207, 2
      %s1209 = smul.addr %s1205, 16
      %s1210 = sadd.s32 %s1208, %s1209
      %s1211 = smul.addr %s1210, 8
      %s1212 = scalar_lea.vmem %s6, %s1211
      // Predicated region
      $region57: #{adain_resblk_forward.5} parent=43 // pred_check
        %p1213 = pneg %p211
      $region58: #{adain_resblk_forward.5} parent=43 // pred_check_branch
        %1215 = sbr.rel (%p1213) target = $region60
      $region59: #{adain_resblk_forward.5} parent=43 // pred_region
        _
      $region60: #{adain_resblk_forward.5} parent=43 // pred_fallthru
        _
    $region44: #{adain_resblk_forward.5} parent=5 // pred_fallthru
      _
    %p1216 = scmp.le.s32.totalorder 2, %s12
    // Predicated region
    $region61: #{adain_resblk_forward.5} parent=5 // pred_check
      %p1217 = pneg %p1216
    $region62: #{adain_resblk_forward.5} parent=5 // pred_check_branch
      %1219 = sbr.rel (%p1217) target = $region64
    $region63: #{adain_resblk_forward.5} parent=5 // pred_region
      %s1220 = ssub.s32 %s12, 2
      // Predicated region
      $region65: #{adain_resblk_forward.5} parent=63 // pred_check
        %p1221 = pneg %p217
      $region66: #{adain_resblk_forward.5} parent=63 // pred_check_branch
        %1223 = sbr.rel (%p1221) target = $region68
      $region67: #{adain_resblk_forward.5} parent=63 // pred_region
        %p1224 = scmp.lt.s32.totalorder %s25, 1
        %s1225 = scalar_select %p1224, %s25, 1
        %p1226 = scmp.lt.s32.totalorder %s26, 7
        %s1227 = scalar_select %p1226, %s26, 7
        %s1228 = smul.addr %s1227, 2
        %s1229 = smul.addr %s1225, 16
        %s1230 = sadd.s32 %s1228, %s1229
        %s1231 = smul.addr %s1230, 8
        %s1232 = scalar_lea.vmem %s6, %s1231
      $region68: #{adain_resblk_forward.5} parent=63 // pred_fallthru
        _
    $region64: #{adain_resblk_forward.5} parent=5 // pred_fallthru
      _
  $region6: #{adain_resblk_forward.5} parent=0 // loop_footer
    %s16 = sadd.s32 1, %s12
  $region7: #{adain_resblk_forward.5} parent=0 // loop_footer_branch
    %11 = sbr.rel target = $region3
  $region8: #{adain_resblk_forward.5} parent=0 // loop_exit
    _

// kernel: adain_resblk_forward.7
$region0: #{adain_resblk_forward.7}
  #allocation0 [shape = 'u32[]', space=smem, size = 0x4, offset = 0x4, fixed_abs, tag = 'smem constant byte address 0x4 - core index']
  #allocation1 [shape = 'u32[144,128]{1,0:T(1,128)}', space=vmem, size = 0x12000, scoped, tag = 'internal scratch']
  #allocation2 [shape = 'f32[8,256]{1,0:T(8,128)}', space=vmem, size = 0x2000, scoped, tag = 'scratch operand']
  %s0 = inlined_call_operand.vmem [shape: f32[2,8,8,256], index: 0, kind: input, shape index: {}]
  %s1 = inlined_call_operand.vmem [shape: f32[2,8,1], index: 1, kind: input, shape index: {}]
  %s2 = inlined_call_operand.vmem [shape: f32[2,8,1], index: 2, kind: input, shape index: {}]
  %s3 = inlined_call_operand.vmem [shape: bf16[27,8,8], index: 3, kind: input, shape index: {}]
  %s4 = inlined_call_operand.vmem [shape: f32[8,1], index: 4, kind: input, shape index: {}]
  %s5 = inlined_call_operand.vmem [shape: f32[9,1,256], index: 5, kind: input, shape index: {}]
  %s6 = inlined_call_operand.vmem [shape: f32[2,8,4,256], index: 6, kind: input, shape index: {}]
  %s7 = inlined_call_operand.vmem [shape: bf16[8,4], index: 7, kind: input, shape index: {}]
  %s8 = inlined_call_operand.vmem [shape: f32[2,8,8,256], index: 8, kind: output, shape index: {}]
  %s9 = sld [smem:[#allocation0]]
  $region77: #{adain_resblk_forward.7} parent=0
    _
  %s11 = ssub.s32 1, %s9
  %s12 = scalar_select 0, %s11, %s9
  loop: start=0, step=1, limit=50
  $region2: #{adain_resblk_forward.7} parent=0 // loop_pre_header
    _
  $region3: #{adain_resblk_forward.7} parent=0 // loop_header
    %s14 = sphi 0, %s18
    %p15 = scmp.ge.s32.totalorder %s14, 50
    %s21 = sphi 0, %s40
    %s22 = sphi 0, %s36
    %s23 = sphi 0, %s32
    %s24 = sphi 0, %s21
    %s25 = sphi 0, %s22
    %s26 = sphi 0, %s23
    %s27 = sphi 0, %s24
    %s28 = sphi 0, %s25
    %s29 = sphi 0, %s26
    %s57 = sphi 0, %s59
    %s60 = sphi 0, %s57
    %s61 = sphi 0, %s60
    %s77 = sphi 0, %s61
    %s83 = sphi 0, %s85
    %s86 = sphi 0, %s83
    %s87 = sphi 0, %s86
    %s103 = sphi 0, %s87
    %s109 = sphi 0, %s111
    %s112 = sphi 0, %s109
    %s113 = sphi 0, %s112
    %s129 = sphi 0, %s113
    %s133 = sphi 0, %s133
    %s135 = sphi 0, %s133
    %s136 = sphi 0, %s135
    %s150 = sphi 0, %s136
    %s154 = sphi 0, %s154
    %s156 = sphi 0, %s154
    %s157 = sphi 0, %s156
    %s171 = sphi 0, %s157
    %s175 = sphi 0, %s175
    %s177 = sphi 0, %s175
    %s178 = sphi 0, %s177
    %s192 = sphi 0, %s178
    %s200 = sphi 0, %s202
    %s203 = sphi 0, %s200
    %s204 = sphi 0, %s203
    %s220 = sphi 0, %s204
    %s224 = sphi 0, %s224
    %s226 = sphi 0, %s224
    %s227 = sphi 0, %s226
    %s241 = sphi 0, %s227
    %s249 = sphi 0, %s251
    %s252 = sphi 0, %s249
    %s253 = sphi 0, %s252
    %s269 = sphi 0, %s253
  $region4: #{adain_resblk_forward.7} parent=0 // loop_header_branch
    %17 = sbr.rel (%p15) target = $region8
  $region5: #{adain_resblk_forward.7} parent=0 // loop_body
    %s19 = ssub.s32 %s14, 1
    %s20 = ssub.s32 %s14, 2
    %s30 = sadd.s32 1, %s23
    %p31 = scmp.ge.s32.totalorder %s30, 3
    %s32 = scalar_select %p31, 0, %s30
    %s33 = sadd.s32 1, %s22
    %s34 = scalar_select %p31, %s33, %s22
    %p35 = scmp.ge.s32.totalorder %s34, 8
    %s36 = scalar_select %p35, 0, %s34
    %s37 = sadd.s32 1, %s21
    %s38 = scalar_select %p35, %s37, %s21
    %p39 = scmp.ge.s32.totalorder %s38, 2
    %s40 = scalar_select %p39, 0, %s38
    %s41 = sadd.s32 %s22, %s23
    %s42 = ssub.s32 %s41, 1
    %p43 = scmp.gt.s32.totalorder %s42, 0
    %s44 = scalar_select %p43, %s42, 0
    %p45 = scmp.lt.s32.totalorder %s44, 7
    %s46 = scalar_select %p45, %s44, 7
    %s47 = sadd.s32 %s36, %s32
    %s48 = ssub.s32 %s47, 1
    %p49 = scmp.gt.s32.totalorder %s48, 0
    %s50 = scalar_select %p49, %s48, 0
    %p51 = scmp.lt.s32.totalorder %s50, 7
    %s52 = scalar_select %p51, %s50, 7
    %s53 = ssub.s32 %s21, %s40
    %s54 = ssub.s32 %s46, %s52
    %s55 = sor.u32 %s53, %s54
    %p56 = scmp.eq.s32.totalorder %s55, 0
    %s58 = sadd.s32 %s57, 1
    %s59 = scalar_select %p56, %s57, %s58
    %p62 = pneg %p56
    %p63 = scmp.eq.s32.totalorder %s14, 47
    %p64 = por %p62, %p63
    %p65 = scmp.ne.s32.totalorder %s57, %s60
    %p66 = scmp.eq.s32.totalorder %s14, 0
    %p67 = por %p65, %p66
    %p68 = scmp.ne.s32.totalorder %s57, %s60
    %p69 = scmp.eq.s32.totalorder %s19, 47
    %p70 = por %p68, %p69
    %p71 = scmp.ne.s32.totalorder %s60, %s61
    %p72 = scmp.eq.s32.totalorder %s19, 0
    %p73 = por %p71, %p72
    %p74 = scmp.ne.s32.totalorder %s60, %s61
    %p75 = scmp.eq.s32.totalorder %s20, 47
    %p76 = por %p74, %p75
    %p78 = scmp.ne.s32.totalorder %s61, %s77
    %p79 = scmp.eq.s32.totalorder %s20, 0
    %p80 = por %p78, %p79
    %s81 = ssub.s32 %s21, %s40
    %p82 = scmp.eq.s32.totalorder %s81, 0
    %s84 = sadd.s32 %s83, 1
    %s85 = scalar_select %p82, %s83, %s84
    %p88 = pneg %p82
    %p89 = scmp.eq.s32.totalorder %s14, 47
    %p90 = por %p88, %p89
    %p91 = scmp.ne.s32.totalorder %s83, %s86
    %p92 = scmp.eq.s32.totalorder %s14, 0
    %p93 = por %p91, %p92
    %p94 = scmp.ne.s32.totalorder %s83, %s86
    %p95 = scmp.eq.s32.totalorder %s19, 47
    %p96 = por %p94, %p95
    %p97 = scmp.ne.s32.totalorder %s86, %s87
    %p98 = scmp.eq.s32.totalorder %s19, 0
    %p99 = por %p97, %p98
    %p100 = scmp.ne.s32.totalorder %s86, %s87
    %p101 = scmp.eq.s32.totalorder %s20, 47
    %p102 = por %p100, %p101
    %p104 = scmp.ne.s32.totalorder %s87, %s103
    %p105 = scmp.eq.s32.totalorder %s20, 0
    %p106 = por %p104, %p105
    %s107 = ssub.s32 %s21, %s40
    %p108 = scmp.eq.s32.totalorder %s107, 0
    %s110 = sadd.s32 %s109, 1
    %s111 = scalar_select %p108, %s109, %s110
    %p114 = pneg %p108
    %p115 = scmp.eq.s32.totalorder %s14, 47
    %p116 = por %p114, %p115
    %p117 = scmp.ne.s32.totalorder %s109, %s112
    %p118 = scmp.eq.s32.totalorder %s14, 0
    %p119 = por %p117, %p118
    %p120 = scmp.ne.s32.totalorder %s109, %s112
    %p121 = scmp.eq.s32.totalorder %s19, 47
    %p122 = por %p120, %p121
    %p123 = scmp.ne.s32.totalorder %s112, %s113
    %p124 = scmp.eq.s32.totalorder %s19, 0
    %p125 = por %p123, %p124
    %p126 = scmp.ne.s32.totalorder %s112, %s113
    %p127 = scmp.eq.s32.totalorder %s20, 47
    %p128 = por %p126, %p127
    %p130 = scmp.ne.s32.totalorder %s113, %s129
    %p131 = scmp.eq.s32.totalorder %s20, 0
    %p132 = por %p130, %p131
    %s134 = sadd.s32 %s133, 1
    %p137 = scmp.eq.s32.totalorder %s14, 47
    %p138 = scmp.ne.s32.totalorder %s133, %s135
    %p139 = scmp.eq.s32.totalorder %s14, 0
    %p140 = por %p138, %p139
    %p141 = scmp.ne.s32.totalorder %s133, %s135
    %p142 = scmp.eq.s32.totalorder %s19, 47
    %p143 = por %p141, %p142
    %p144 = scmp.ne.s32.totalorder %s135, %s136
    %p145 = scmp.eq.s32.totalorder %s19, 0
    %p146 = por %p144, %p145
    %p147 = scmp.ne.s32.totalorder %s135, %s136
    %p148 = scmp.eq.s32.totalorder %s20, 47
    %p149 = por %p147, %p148
    %p151 = scmp.ne.s32.totalorder %s136, %s150
    %p152 = scmp.eq.s32.totalorder %s20, 0
    %p153 = por %p151, %p152
    %s155 = sadd.s32 %s154, 1
    %p158 = scmp.eq.s32.totalorder %s14, 47
    %p159 = scmp.ne.s32.totalorder %s154, %s156
    %p160 = scmp.eq.s32.totalorder %s14, 0
    %p161 = por %p159, %p160
    %p162 = scmp.ne.s32.totalorder %s154, %s156
    %p163 = scmp.eq.s32.totalorder %s19, 47
    %p164 = por %p162, %p163
    %p165 = scmp.ne.s32.totalorder %s156, %s157
    %p166 = scmp.eq.s32.totalorder %s19, 0
    %p167 = por %p165, %p166
    %p168 = scmp.ne.s32.totalorder %s156, %s157
    %p169 = scmp.eq.s32.totalorder %s20, 47
    %p170 = por %p168, %p169
    %p172 = scmp.ne.s32.totalorder %s157, %s171
    %p173 = scmp.eq.s32.totalorder %s20, 0
    %p174 = por %p172, %p173
    %s176 = sadd.s32 %s175, 1
    %p179 = scmp.eq.s32.totalorder %s14, 47
    %p180 = scmp.ne.s32.totalorder %s175, %s177
    %p181 = scmp.eq.s32.totalorder %s14, 0
    %p182 = por %p180, %p181
    %p183 = scmp.ne.s32.totalorder %s175, %s177
    %p184 = scmp.eq.s32.totalorder %s19, 47
    %p185 = por %p183, %p184
    %p186 = scmp.ne.s32.totalorder %s177, %s178
    %p187 = scmp.eq.s32.totalorder %s19, 0
    %p188 = por %p186, %p187
    %p189 = scmp.ne.s32.totalorder %s177, %s178
    %p190 = scmp.eq.s32.totalorder %s20, 47
    %p191 = por %p189, %p190
    %p193 = scmp.ne.s32.totalorder %s178, %s192
    %p194 = scmp.eq.s32.totalorder %s20, 0
    %p195 = por %p193, %p194
    %s196 = ssub.s32 %s21, %s40
    %s197 = ssub.s32 %s22, %s36
    %s198 = sor.u32 %s196, %s197
    %p199 = scmp.eq.s32.totalorder %s198, 0
    %s201 = sadd.s32 %s200, 1
    %s202 = scalar_select %p199, %s200, %s201
    %p205 = pneg %p199
    %p206 = scmp.eq.s32.totalorder %s14, 47
    %p207 = por %p205, %p206
    %p208 = scmp.ne.s32.totalorder %s200, %s203
    %p209 = scmp.eq.s32.totalorder %s14, 0
    %p210 = por %p208, %p209
    %p211 = scmp.ne.s32.totalorder %s200, %s203
    %p212 = scmp.eq.s32.totalorder %s19, 47
    %p213 = por %p211, %p212
    %p214 = scmp.ne.s32.totalorder %s203, %s204
    %p215 = scmp.eq.s32.totalorder %s19, 0
    %p216 = por %p214, %p215
    %p217 = scmp.ne.s32.totalorder %s203, %s204
    %p218 = scmp.eq.s32.totalorder %s20, 47
    %p219 = por %p217, %p218
    %p221 = scmp.ne.s32.totalorder %s204, %s220
    %p222 = scmp.eq.s32.totalorder %s20, 0
    %p223 = por %p221, %p222
    %s225 = sadd.s32 %s224, 1
    %p228 = scmp.eq.s32.totalorder %s14, 47
    %p229 = scmp.ne.s32.totalorder %s224, %s226
    %p230 = scmp.eq.s32.totalorder %s14, 0
    %p231 = por %p229, %p230
    %p232 = scmp.ne.s32.totalorder %s224, %s226
    %p233 = scmp.eq.s32.totalorder %s19, 47
    %p234 = por %p232, %p233
    %p235 = scmp.ne.s32.totalorder %s226, %s227
    %p236 = scmp.eq.s32.totalorder %s19, 0
    %p237 = por %p235, %p236
    %p238 = scmp.ne.s32.totalorder %s226, %s227
    %p239 = scmp.eq.s32.totalorder %s20, 47
    %p240 = por %p238, %p239
    %p242 = scmp.ne.s32.totalorder %s227, %s241
    %p243 = scmp.eq.s32.totalorder %s20, 0
    %p244 = por %p242, %p243
    %s245 = ssub.s32 %s21, %s40
    %s246 = ssub.s32 %s22, %s36
    %s247 = sor.u32 %s245, %s246
    %p248 = scmp.eq.s32.totalorder %s247, 0
    %s250 = sadd.s32 %s249, 1
    %s251 = scalar_select %p248, %s249, %s250
    %p254 = pneg %p248
    %p255 = scmp.eq.s32.totalorder %s14, 47
    %p256 = por %p254, %p255
    %p257 = scmp.ne.s32.totalorder %s249, %s252
    %p258 = scmp.eq.s32.totalorder %s14, 0
    %p259 = por %p257, %p258
    %p260 = scmp.ne.s32.totalorder %s249, %s252
    %p261 = scmp.eq.s32.totalorder %s19, 47
    %p262 = por %p260, %p261
    %p263 = scmp.ne.s32.totalorder %s252, %s253
    %p264 = scmp.eq.s32.totalorder %s19, 0
    %p265 = por %p263, %p264
    %p266 = scmp.ne.s32.totalorder %s252, %s253
    %p267 = scmp.eq.s32.totalorder %s20, 47
    %p268 = por %p266, %p267
    %p270 = scmp.ne.s32.totalorder %s253, %s269
    %p271 = scmp.eq.s32.totalorder %s20, 0
    %p272 = por %p270, %p271
    %p273 = scmp.le.s32.totalorder 1, %s14
    %p274 = scmp.lt.s32.totalorder %s14, 49
    %p275 = pnand %p273, %p274
    %p276 = pneg %p275
    // Predicated region
    $region9: #{adain_resblk_forward.7} parent=5 // pred_check
      _
    $region10: #{adain_resblk_forward.7} parent=5 // pred_check_branch
      %278 = sbr.rel (%p275) target = $region12
    $region11: #{adain_resblk_forward.7} parent=5 // pred_region
      %s279 = ssub.s32 %s14, 1
      // Predicated region
      $region13: #{adain_resblk_forward.7} parent=11 // pred_check
        %p280 = pneg %p146
      $region14: #{adain_resblk_forward.7} parent=11 // pred_check_branch
        %282 = sbr.rel (%p280) target = $region16
      $region15: #{adain_resblk_forward.7} parent=11 // pred_region
        _
      $region16: #{adain_resblk_forward.7} parent=11 // pred_fallthru
        _
      // Predicated region
      $region17: #{adain_resblk_forward.7} parent=11 // pred_check
        %p283 = pneg %p167
      $region18: #{adain_resblk_forward.7} parent=11 // pred_check_branch
        %285 = sbr.rel (%p283) target = $region20
      $region19: #{adain_resblk_forward.7} parent=11 // pred_region
        _
      $region20: #{adain_resblk_forward.7} parent=11 // pred_fallthru
        _
      // Predicated region
      $region21: #{adain_resblk_forward.7} parent=11 // pred_check
        %p286 = pneg %p188
      $region22: #{adain_resblk_forward.7} parent=11 // pred_check_branch
        %288 = sbr.rel (%p286) target = $region24
      $region23: #{adain_resblk_forward.7} parent=11 // pred_region
        _
      $region24: #{adain_resblk_forward.7} parent=11 // pred_fallthru
        _
      // Predicated region
      $region25: #{adain_resblk_forward.7} parent=11 // pred_check
        %p289 = pneg %p237
      $region26: #{adain_resblk_forward.7} parent=11 // pred_check_branch
        %291 = sbr.rel (%p289) target = $region28
      $region27: #{adain_resblk_forward.7} parent=11 // pred_region
        _
      $region28: #{adain_resblk_forward.7} parent=11 // pred_fallthru
        _
    $region12: #{adain_resblk_forward.7} parent=5 // pred_fallthru
      _
    %p292 = scmp.lt.s32.totalorder %s14, 48
    // Predicated region
    $region29: #{adain_resblk_forward.7} parent=5 // pred_check
      %p293 = pneg %p292
    $region30: #{adain_resblk_forward.7} parent=5 // pred_check_branch
      %295 = sbr.rel (%p293) target = $region32
    $region31: #{adain_resblk_forward.7} parent=5 // pred_region
      // Predicated region
      $region33: #{adain_resblk_forward.7} parent=31 // pred_check
        %p296 = pneg %p67
      $region34: #{adain_resblk_forward.7} parent=31 // pred_check_branch
        %298 = sbr.rel (%p296) target = $region36
      $region35: #{adain_resblk_forward.7} parent=31 // pred_region
        %s299 = sadd.s32 %s22, %s23
        %s300 = ssub.s32 %s299, 1
        %p301 = scmp.gt.s32.totalorder %s300, 0
        %s302 = scalar_select %p301, %s300, 0
        %p303 = scmp.lt.s32.totalorder %s302, 7
        %s304 = scalar_select %p303, %s302, 7
        %p305 = scmp.lt.s32.totalorder %s21, 1
        %s306 = scalar_select %p305, %s21, 1
        %p307 = scmp.lt.s32.totalorder %s304, 7
        %s308 = scalar_select %p307, %s304, 7
        %s309 = smul.addr %s308, 2
        %s310 = smul.addr %s306, 16
        %s311 = sadd.s32 %s309, %s310
        %s312 = smul.addr %s311, 8
        %s313 = scalar_lea.vmem %s0, %s312
        %s314 = sadd.s32 %s22, %s23
        %s315 = ssub.s32 %s314, 1
        %p316 = scmp.gt.s32.totalorder %s315, 0
        %s317 = scalar_select %p316, %s315, 0
        %p318 = scmp.lt.s32.totalorder %s317, 7
        %s319 = scalar_select %p318, %s317, 7
      $region36: #{adain_resblk_forward.7} parent=31 // pred_fallthru
        _
      // Predicated region
      $region37: #{adain_resblk_forward.7} parent=31 // pred_check
        %p320 = pneg %p93
      $region38: #{adain_resblk_forward.7} parent=31 // pred_check_branch
        %322 = sbr.rel (%p320) target = $region40
      $region39: #{adain_resblk_forward.7} parent=31 // pred_region
        %p323 = scmp.lt.s32.totalorder %s21, 1
        %s324 = scalar_select %p323, %s21, 1
        %s325 = smul.addr %s324, 8
        %s326 = scalar_lea.vmem %s1, %s325
      $region40: #{adain_resblk_forward.7} parent=31 // pred_fallthru
        _
      // Predicated region
      $region41: #{adain_resblk_forward.7} parent=31 // pred_check
        %p327 = pneg %p119
      $region42: #{adain_resblk_forward.7} parent=31 // pred_check_branch
        %329 = sbr.rel (%p327) target = $region44
      $region43: #{adain_resblk_forward.7} parent=31 // pred_region
        %p330 = scmp.lt.s32.totalorder %s21, 1
        %s331 = scalar_select %p330, %s21, 1
        %s332 = smul.addr %s331, 8
        %s333 = scalar_lea.vmem %s2, %s332
      $region44: #{adain_resblk_forward.7} parent=31 // pred_fallthru
        _
      // Predicated region
      $region45: #{adain_resblk_forward.7} parent=31 // pred_check
        %p334 = pneg %p210
      $region46: #{adain_resblk_forward.7} parent=31 // pred_check_branch
        %336 = sbr.rel (%p334) target = $region48
      $region47: #{adain_resblk_forward.7} parent=31 // pred_region
        %p337 = scmp.lt.s32.totalorder %s21, 1
        %s338 = scalar_select %p337, %s21, 1
        %p339 = scmp.lt.s32.totalorder %s22, 7
        %s340 = scalar_select %p339, %s22, 7
        %s341 = smul.addr %s340, 2
        %s342 = smul.addr %s338, 16
        %s343 = sadd.s32 %s341, %s342
        %s344 = smul.addr %s343, 4
        %s345 = scalar_lea.vmem %s6, %s344
      $region48: #{adain_resblk_forward.7} parent=31 // pred_fallthru
        _
    $region32: #{adain_resblk_forward.7} parent=5 // pred_fallthru
      _
    %p346 = scmp.le.s32.totalorder 1, %s14
    %p347 = scmp.lt.s32.totalorder %s14, 49
    %p348 = pnand %p346, %p347
    %p349 = pneg %p348
    // Predicated region
    $region49: #{adain_resblk_forward.7} parent=5 // pred_check
      _
    $region50: #{adain_resblk_forward.7} parent=5 // pred_check_branch
      %351 = sbr.rel (%p348) target = $region52
    $region51: #{adain_resblk_forward.7} parent=5 // pred_region
      %s352 = ssub.s32 %s14, 1
      %s353 = sadd.s32 %s25, %s26
      %s354 = ssub.s32 %s353, 1
      %p355 = scmp.gt.s32.totalorder %s354, 0
      %s356 = scalar_select %p355, %s354, 0
      %p357 = scmp.lt.s32.totalorder %s356, 7
      %s358 = scalar_select %p357, %s356, 7
      %p359 = scmp.lt.s32.totalorder %s24, 1
      %s360 = scalar_select %p359, %s24, 1
      %p361 = scmp.lt.s32.totalorder %s358, 7
      %s362 = scalar_select %p361, %s358, 7
      %s363 = smul.addr %s362, 2
      %s364 = smul.addr %s360, 16
      %s365 = sadd.s32 %s363, %s364
      %s366 = smul.addr %s365, 8
      %s367 = scalar_lea.vmem %s0, %s366
      %p368 = pneg %p73
      %p369 = pneg %p70
      %p370 = scmp.lt.s32.totalorder %s24, 1
      %s371 = scalar_select %p370, %s24, 1
      %s372 = smul.addr %s371, 8
      %s373 = scalar_lea.vmem %s1, %s372
      %p374 = pneg %p99
      %p375 = pneg %p96
      %p376 = scmp.lt.s32.totalorder %s24, 1
      %s377 = scalar_select %p376, %s24, 1
      %s378 = smul.addr %s377, 8
      %s379 = scalar_lea.vmem %s2, %s378
      %p380 = pneg %p125
      %p381 = pneg %p122
      %p382 = pneg %p146
      %p383 = pneg %p143
      %p384 = pneg %p167
      %p385 = pneg %p164
      %p386 = pneg %p188
      %p387 = pneg %p185
      %p388 = scmp.lt.s32.totalorder %s24, 1
      %s389 = scalar_select %p388, %s24, 1
      %p390 = scmp.lt.s32.totalorder %s25, 7
      %s391 = scalar_select %p390, %s25, 7
      %s392 = smul.addr %s391, 2
      %s393 = smul.addr %s389, 16
      %s394 = sadd.s32 %s392, %s393
      %s395 = smul.addr %s394, 4
      %s396 = scalar_lea.vmem %s6, %s395
      %p397 = pneg %p216
      %p398 = pneg %p213
      %p399 = pneg %p237
      %p400 = pneg %p234
      %p401 = pneg %p265
      %p402 = pneg %p262
      %p403 = scmp.lt.s32.totalorder %s24, 1
      %s404 = scalar_select %p403, %s24, 1
      %p405 = scmp.lt.s32.totalorder %s25, 7
      %s406 = scalar_select %p405, %s25, 7
      %s407 = smul.addr %s406, 2
      %s408 = smul.addr %s404, 16
      %s409 = sadd.s32 %s407, %s408
      %s410 = smul.addr %s409, 8
      %s411 = scalar_lea.vmem %s8, %s410
      %s412 = sadd.s32 %s25, %s26
      %s413 = ssub.s32 %s412, 1
      %p414 = scmp.gt.s32.totalorder %s413, 0
      %s415 = scalar_select %p414, %s413, 0
      %p416 = scmp.lt.s32.totalorder %s415, 7
      %s417 = scalar_select %p416, %s415, 7
      %p418 = scmp.lt.s32.totalorder %s24, 1
      %s419 = scalar_select %p418, %s24, 1
      %p420 = scmp.lt.s32.totalorder %s417, 7
      %s421 = scalar_select %p420, %s417, 7
      %s422 = smul.addr %s421, 2
      %s423 = smul.addr %s419, 16
      %s424 = sadd.s32 %s422, %s423
      %s425 = smul.addr %s424, 8
      %s426 = scalar_lea.vmem %s0, %s425
      %s427 = sadd.s32 %s25, %s26
      %s428 = ssub.s32 %s427, 1
      %p429 = scmp.gt.s32.totalorder %s428, 0
      %s430 = scalar_select %p429, %s428, 0
      %p431 = scmp.lt.s32.totalorder %s430, 7
      %s432 = scalar_select %p431, %s430, 7
      %p433 = scmp.lt.s32.totalorder %s24, 1
      %s434 = scalar_select %p433, %s24, 1
      %s435 = smul.addr %s434, 8
      %s436 = scalar_lea.vmem %s1, %s435
      %p437 = scmp.lt.s32.totalorder %s24, 1
      %s438 = scalar_select %p437, %s24, 1
      %s439 = smul.addr %s438, 8
      %s440 = scalar_lea.vmem %s2, %s439
      %p441 = scmp.lt.s32.totalorder %s24, 1
      %s442 = scalar_select %p441, %s24, 1
      %p443 = scmp.lt.s32.totalorder %s25, 7
      %s444 = scalar_select %p443, %s25, 7
      %s445 = smul.addr %s444, 2
      %s446 = smul.addr %s442, 16
      %s447 = sadd.s32 %s445, %s446
      %s448 = smul.addr %s447, 4
      %s449 = scalar_lea.vmem %s6, %s448
      %p450 = scmp.lt.s32.totalorder %s24, 1
      %s451 = scalar_select %p450, %s24, 1
      %p452 = scmp.lt.s32.totalorder %s25, 7
      %s453 = scalar_select %p452, %s25, 7
      %s454 = smul.addr %s453, 2
      %s455 = smul.addr %s451, 16
      %s456 = sadd.s32 %s454, %s455
      %s457 = smul.addr %s456, 8
      %s458 = scalar_lea.vmem %s8, %s457
      %s460 = sadd.s32 %s25, %s26
      %s461 = ssub.s32 %s460, 1
      %p462 = scmp.ge.s32.totalorder %s461, 0
      %p463 = scmp.lt.s32.totalorder %s461, 8
      %p464 = pnand %p462, %p463
      %p465 = pneg %p464
      %p466 = scmp.eq.s32.totalorder %s26, 0
      // Predicated region
      $region53: #{adain_resblk_forward.7} parent=51 // pred_check
        %p467 = pneg %p466
      $region54: #{adain_resblk_forward.7} parent=51 // pred_check_branch
        %469 = sbr.rel (%p467) target = $region56
      $region55: #{adain_resblk_forward.7} parent=51 // pred_region
        %470 = vst [vmem:[#allocation2] sm:$0xff] 0.0
        %471 = vst [vmem:[#allocation2 + $0x8] sm:$0xff] 0.0
      $region56: #{adain_resblk_forward.7} parent=51 // pred_fallthru
        _
      // Predicated region
      $region57: #{adain_resblk_forward.7} parent=51 // pred_check
        _
      $region58: #{adain_resblk_forward.7} parent=51 // pred_check_branch
        %473 = sbr.rel (%p464) target = $region60
      $region59: #{adain_resblk_forward.7} parent=51 // pred_region
        %v474 = vld [vmem:[%s426] sm:$0xff]
        %v475 = vld [vmem:[%s426 + $0x8] sm:$0xff]
        %v476 = vld [vmem:[%s436] sm:$0xff]
        %478 = vset.pattern.permute.xlu0 0
        %479 = vperm.xlu0 %478, %v476
        %v480 = vpop.permute.xlu0 %479
        %v482 = vmul.f32 %v474, %v480
        %v483 = vmul.f32 %v475, %v480
        %v484 = vld [vmem:[%s440] sm:$0xff]
        %486 = vset.pattern.permute.xlu0 0
        %487 = vperm.xlu0 %486, %v484
        %v488 = vpop.permute.xlu0 %487
        %v490 = vadd.f32 %v482, %v488
        %v491 = vadd.f32 %v483, %v488
        %vm492 = vcmp.ge.f32.partialorder %v490, 0.0
        %vm493 = vcmp.ge.f32.partialorder %v491, 0.0
        %v494 = vmul.f32 %v490, 0.2
        %v495 = vmul.f32 %v491, 0.2
        %v496 = vsel %vm492, %v490, %v494
        %v497 = vsel %vm493, %v491, %v495
        %500 = vrot.lane.b32.xlu0 %v496, 17
        %v501 = vpop.permute.xlu0 %500
        %502 = vrot.lane.b32.xlu0 %v497, 17
        %v503 = vpop.permute.xlu0 %502
        %vm504 = vcmask 138240
        %v505 = vsel %vm504, %v501, %v503
        %v508 = vsel %vm504, 0.0, %v501
        %v509 = vld [vmem:[%s5] sm:$0x3]
        %v511 = vlaneseq
        %v512 = vshrl.u32 %v511, 7
        %v513 = vsub.s32 0, %v512
        %v514 = vrot.slane %v509, %v513
        %v515 = vlaneseq
        %v516 = vshrl.u32 %v515, 7
        %v517 = vsub.s32 1, %v516
        %v518 = vrot.slane %v509, %v517
        %v521 = vmul.f32 %v508, %v514
        %v522 = vmul.f32 %v505, %v518
        %s523 = smul.u32 %s26, 9
        %s524 = smul.addr %s523, 4
        %s525 = scalar_lea.vmem %s3, %s524
        %v526 = vld [vmem:[%s525] sm:$0xf]
        %v527 = vld [vmem:[#allocation2] sm:$0xff]
        %v528 = vld [vmem:[#allocation2 + $0x8] sm:$0xff]
        %v529 = vpack.c.bf16 %v521, %v521
        %v530 = vpack.c.bf16 %v522, %v522
        %vm531 = vcmask 64512
        %v533 = vsel %vm531, %v526, 0
        %vm535 = vcmask 1043456
        %v537 = vsel %vm535, %v529, 0
        %v540 = vsel %vm535, %v530, 0
        %542 = vmatprep.subr.bf16.mxu0 0
        %543 = vmatpush1.bf16.msra.mxu0 0
        %544 = vmatprep.subr.bf16.mxu0 0
        %545 = vmatpush1.bf16.msra.mxu0 0
        %546 = vmatprep.subr.bf16.mxu0 0
        %547 = vmatpush1.bf16.msra.mxu0 0
        %548 = vmatprep.subr.bf16.mxu0 0
        %549 = vmatpush1.bf16.msra.mxu0 0
        %550 = vmatprep.subr.bf16.mxu0 0
        %551 = vmatpush1.bf16.msra.mxu0 0
        %552 = vmatprep.subr.bf16.mxu0 0
        %553 = vmatpush1.bf16.msra.mxu0 0
        %554 = vmatprep.subr.bf16.mxu0 0
        %555 = vmatpush1.bf16.msra.mxu0 0
        %556 = vmatprep.subr.bf16.mxu0 %v540
        %557 = vmatpush1.bf16.msra.mxu0 %v537
        %558 = vmatprep.subr.bf16.mxu0 0
        %559 = vmatpush2.bf16.msra.mxu0 0
        %560 = vmatprep.subr.bf16.mxu0 0
        %561 = vmatpush2.bf16.msra.mxu0 0
        %562 = vmatprep.subr.bf16.mxu0 0
        %563 = vmatpush2.bf16.msra.mxu0 0
        %564 = vmatprep.subr.bf16.mxu0 0
        %565 = vmatpush2.bf16.msra.mxu0 0
        %566 = vmatprep.subr.bf16.mxu0 0
        %567 = vmatpush2.bf16.msra.mxu0 0
        %568 = vmatprep.subr.bf16.mxu0 0
        %569 = vmatpush2.bf16.msra.mxu0 0
        %570 = vmatprep.subr.bf16.mxu0 0
        %571 = vmatpush2.bf16.msra.mxu0 0
        %572 = vmatprep.subr.bf16.mxu0 0
        %573 = vmatpush2.bf16.msra.mxu0 0
        %574 = vmatprep.mubr.bf16.mxu0 0
        %575 = vmatmul.mubr.bf16.gmra.mxu0 %v533
        %v576 = vpop.f32.mrf.mxu0
        %v577 = vadd.f32 0.0, %v576
        %v578 = vpop.f32.mrf.mxu0
        %v579 = vadd.f32 0.0, %v578
        %v580 = vpop.f32.mrf.mxu0
        %v581 = vpop.f32.mrf.mxu0
        %582 = vdwg.mxu0
        %v583 = vadd.f32 %v527, %v577
        %v584 = vadd.f32 %v528, %v579
        %585 = vst [vmem:[#allocation2] sm:$0xff] %v583
        %586 = vst [vmem:[#allocation2 + $0x8] sm:$0xff] %v584
        %587 = vrot.lane.b32.xlu0 %v496, 16
        %v588 = vpop.permute.xlu0 %587
        %589 = vrot.lane.b32.xlu0 %v497, 16
        %v590 = vpop.permute.xlu0 %589
        %vm591 = vcmask 130048
        %v592 = vsel %vm591, %v588, %v590
        %v595 = vsel %vm591, 0.0, %v588
        %s596 = scalar_lea.vmem %s5, 2
        %v597 = vld [vmem:[%s596] sm:$0x3]
        %v599 = vlaneseq
        %v600 = vshrl.u32 %v599, 7
        %v601 = vsub.s32 0, %v600
        %v602 = vrot.slane %v597, %v601
        %v603 = vlaneseq
        %v604 = vshrl.u32 %v603, 7
        %v605 = vsub.s32 1, %v604
        %v606 = vrot.slane %v597, %v605
        %v609 = vmul.f32 %v595, %v602
        %v610 = vmul.f32 %v592, %v606
        %s611 = sadd.s32 %s523, 1
        %s612 = smul.addr %s611, 4
        %s613 = scalar_lea.vmem %s3, %s612
        %v614 = vld [vmem:[%s613] sm:$0xf]
        %v615 = vld [vmem:[#allocation2] sm:$0xff]
        %v616 = vld [vmem:[#allocation2 + $0x8] sm:$0xff]
        %v617 = vpack.c.bf16 %v609, %v609
        %v618 = vpack.c.bf16 %v610, %v610
        %v620 = vsel %vm531, %v614, 0
        %v623 = vsel %vm535, %v617, 0
        %v626 = vsel %vm535, %v618, 0
        %628 = vmatprep.subr.bf16.mxu0 0
        %629 = vmatpush1.bf16.msra.mxu0 0
        %630 = vmatprep.subr.bf16.mxu0 0
        %631 = vmatpush1.bf16.msra.mxu0 0
        %632 = vmatprep.subr.bf16.mxu0 0
        %633 = vmatpush1.bf16.msra.mxu0 0
        %634 = vmatprep.subr.bf16.mxu0 0
        %635 = vmatpush1.bf16.msra.mxu0 0
        %636 = vmatprep.subr.bf16.mxu0 0
        %637 = vmatpush1.bf16.msra.mxu0 0
        %638 = vmatprep.subr.bf16.mxu0 0
        %639 = vmatpush1.bf16.msra.mxu0 0
        %640 = vmatprep.subr.bf16.mxu0 0
        %641 = vmatpush1.bf16.msra.mxu0 0
        %642 = vmatprep.subr.bf16.mxu0 %v626
        %643 = vmatpush1.bf16.msra.mxu0 %v623
        %644 = vmatprep.subr.bf16.mxu0 0
        %645 = vmatpush2.bf16.msra.mxu0 0
        %646 = vmatprep.subr.bf16.mxu0 0
        %647 = vmatpush2.bf16.msra.mxu0 0
        %648 = vmatprep.subr.bf16.mxu0 0
        %649 = vmatpush2.bf16.msra.mxu0 0
        %650 = vmatprep.subr.bf16.mxu0 0
        %651 = vmatpush2.bf16.msra.mxu0 0
        %652 = vmatprep.subr.bf16.mxu0 0
        %653 = vmatpush2.bf16.msra.mxu0 0
        %654 = vmatprep.subr.bf16.mxu0 0
        %655 = vmatpush2.bf16.msra.mxu0 0
        %656 = vmatprep.subr.bf16.mxu0 0
        %657 = vmatpush2.bf16.msra.mxu0 0
        %658 = vmatprep.subr.bf16.mxu0 0
        %659 = vmatpush2.bf16.msra.mxu0 0
        %660 = vmatprep.mubr.bf16.mxu0 0
        %661 = vmatmul.mubr.bf16.gmra.mxu0 %v620
        %v662 = vpop.f32.mrf.mxu0
        %v663 = vadd.f32 0.0, %v662
        %v664 = vpop.f32.mrf.mxu0
        %v665 = vadd.f32 0.0, %v664
        %v666 = vpop.f32.mrf.mxu0
        %v667 = vpop.f32.mrf.mxu0
        %668 = vdwg.mxu0
        %v669 = vadd.f32 %v615, %v663
        %v670 = vadd.f32 %v616, %v665
        %671 = vst [vmem:[#allocation2] sm:$0xff] %v669
        %672 = vst [vmem:[#allocation2 + $0x8] sm:$0xff] %v670
        %673 = vrot.lane.b32.xlu0 %v496, 15
        %v674 = vpop.permute.xlu0 %673
        %675 = vrot.lane.b32.xlu0 %v497, 15
        %v676 = vpop.permute.xlu0 %675
        %vm677 = vcmask 121856
        %v678 = vsel %vm677, %v674, %v676
        %v681 = vsel %vm677, 0.0, %v674
        %s682 = scalar_lea.vmem %s5, 4
        %v683 = vld [vmem:[%s682] sm:$0x3]
        %v685 = vlaneseq
        %v686 = vshrl.u32 %v685, 7
        %v687 = vsub.s32 0, %v686
        %v688 = vrot.slane %v683, %v687
        %v689 = vlaneseq
        %v690 = vshrl.u32 %v689, 7
        %v691 = vsub.s32 1, %v690
        %v692 = vrot.slane %v683, %v691
        %v695 = vmul.f32 %v681, %v688
        %v696 = vmul.f32 %v678, %v692
        %s697 = sadd.s32 %s523, 2
        %s698 = smul.addr %s697, 4
        %s699 = scalar_lea.vmem %s3, %s698
        %v700 = vld [vmem:[%s699] sm:$0xf]
        %v701 = vld [vmem:[#allocation2] sm:$0xff]
        %v702 = vld [vmem:[#allocation2 + $0x8] sm:$0xff]
        %v703 = vpack.c.bf16 %v695, %v695
        %v704 = vpack.c.bf16 %v696, %v696
        %v706 = vsel %vm531, %v700, 0
        %v709 = vsel %vm535, %v703, 0
        %v712 = vsel %vm535, %v704, 0
        %714 = vmatprep.subr.bf16.mxu0 0
        %715 = vmatpush1.bf16.msra.mxu0 0
        %716 = vmatprep.subr.bf16.mxu0 0
        %717 = vmatpush1.bf16.msra.mxu0 0
        %718 = vmatprep.subr.bf16.mxu0 0
        %719 = vmatpush1.bf16.msra.mxu0 0
        %720 = vmatprep.subr.bf16.mxu0 0
        %721 = vmatpush1.bf16.msra.mxu0 0
        %722 = vmatprep.subr.bf16.mxu0 0
        %723 = vmatpush1.bf16.msra.mxu0 0
        %724 = vmatprep.subr.bf16.mxu0 0
        %725 = vmatpush1.bf16.msra.mxu0 0
        %726 = vmatprep.subr.bf16.mxu0 0
        %727 = vmatpush1.bf16.msra.mxu0 0
        %728 = vmatprep.subr.bf16.mxu0 %v712
        %729 = vmatpush1.bf16.msra.mxu0 %v709
        %730 = vmatprep.subr.bf16.mxu0 0
        %731 = vmatpush2.bf16.msra.mxu0 0
        %732 = vmatprep.subr.bf16.mxu0 0
        %733 = vmatpush2.bf16.msra.mxu0 0
        %734 = vmatprep.subr.bf16.mxu0 0
        %735 = vmatpush2.bf16.msra.mxu0 0
        %736 = vmatprep.subr.bf16.mxu0 0
        %737 = vmatpush2.bf16.msra.mxu0 0
        %738 = vmatprep.subr.bf16.mxu0 0
        %739 = vmatpush2.bf16.msra.mxu0 0
        %740 = vmatprep.subr.bf16.mxu0 0
        %741 = vmatpush2.bf16.msra.mxu0 0
        %742 = vmatprep.subr.bf16.mxu0 0
        %743 = vmatpush2.bf16.msra.mxu0 0
        %744 = vmatprep.subr.bf16.mxu0 0
        %745 = vmatpush2.bf16.msra.mxu0 0
        %746 = vmatprep.mubr.bf16.mxu0 0
        %747 = vmatmul.mubr.bf16.gmra.mxu0 %v706
        %v748 = vpop.f32.mrf.mxu0
        %v749 = vadd.f32 0.0, %v748
        %v750 = vpop.f32.mrf.mxu0
        %v751 = vadd.f32 0.0, %v750
        %v752 = vpop.f32.mrf.mxu0
        %v753 = vpop.f32.mrf.mxu0
        %754 = vdwg.mxu0
        %v755 = vadd.f32 %v701, %v749
        %v756 = vadd.f32 %v702, %v751
        %757 = vst [vmem:[#allocation2] sm:$0xff] %v755
        %758 = vst [vmem:[#allocation2 + $0x8] sm:$0xff] %v756
        %759 = vrot.lane.b32.xlu0 %v496, 1
        %v760 = vpop.permute.xlu0 %759
        %761 = vrot.lane.b32.xlu0 %v497, 1
        %v762 = vpop.permute.xlu0 %761
        %vm763 = vcmask 7168
        %v764 = vsel %vm763, %v760, %v762
        %v767 = vsel %vm763, 0.0, %v760
        %s768 = scalar_lea.vmem %s5, 6
        %v769 = vld [vmem:[%s768] sm:$0x3]
        %v771 = vlaneseq
        %v772 = vshrl.u32 %v771, 7
        %v773 = vsub.s32 0, %v772
        %v774 = vrot.slane %v769, %v773
        %v775 = vlaneseq
        %v776 = vshrl.u32 %v775, 7
        %v777 = vsub.s32 1, %v776
        %v778 = vrot.slane %v769, %v777
        %v781 = vmul.f32 %v767, %v774
        %v782 = vmul.f32 %v764, %v778
        %s783 = sadd.s32 %s523, 3
        %s784 = smul.addr %s783, 4
        %s785 = scalar_lea.vmem %s3, %s784
        %v786 = vld [vmem:[%s785] sm:$0xf]
        %v787 = vld [vmem:[#allocation2] sm:$0xff]
        %v788 = vld [vmem:[#allocation2 + $0x8] sm:$0xff]
        %v789 = vpack.c.bf16 %v781, %v781
        %v790 = vpack.c.bf16 %v782, %v782
        %v792 = vsel %vm531, %v786, 0
        %v795 = vsel %vm535, %v789, 0
        %v798 = vsel %vm535, %v790, 0
        %800 = vmatprep.subr.bf16.mxu0 0
        %801 = vmatpush1.bf16.msra.mxu0 0
        %802 = vmatprep.subr.bf16.mxu0 0
        %803 = vmatpush1.bf16.msra.mxu0 0
        %804 = vmatprep.subr.bf16.mxu0 0
        %805 = vmatpush1.bf16.msra.mxu0 0
        %806 = vmatprep.subr.bf16.mxu0 0
        %807 = vmatpush1.bf16.msra.mxu0 0
        %808 = vmatprep.subr.bf16.mxu0 0
        %809 = vmatpush1.bf16.msra.mxu0 0
        %810 = vmatprep.subr.bf16.mxu0 0
        %811 = vmatpush1.bf16.msra.mxu0 0
        %812 = vmatprep.subr.bf16.mxu0 0
        %813 = vmatpush1.bf16.msra.mxu0 0
        %814 = vmatprep.subr.bf16.mxu0 %v798
        %815 = vmatpush1.bf16.msra.mxu0 %v795
        %816 = vmatprep.subr.bf16.mxu0 0
        %817 = vmatpush2.bf16.msra.mxu0 0
        %818 = vmatprep.subr.bf16.mxu0 0
        %819 = vmatpush2.bf16.msra.mxu0 0
        %820 = vmatprep.subr.bf16.mxu0 0
        %821 = vmatpush2.bf16.msra.mxu0 0
        %822 = vmatprep.subr.bf16.mxu0 0
        %823 = vmatpush2.bf16.msra.mxu0 0
        %824 = vmatprep.subr.bf16.mxu0 0
        %825 = vmatpush2.bf16.msra.mxu0 0
        %826 = vmatprep.subr.bf16.mxu0 0
        %827 = vmatpush2.bf16.msra.mxu0 0
        %828 = vmatprep.subr.bf16.mxu0 0
        %829 = vmatpush2.bf16.msra.mxu0 0
        %830 = vmatprep.subr.bf16.mxu0 0
        %831 = vmatpush2.bf16.msra.mxu0 0
        %832 = vmatprep.mubr.bf16.mxu0 0
        %833 = vmatmul.mubr.bf16.gmra.mxu0 %v792
        %v834 = vpop.f32.mrf.mxu0
        %v835 = vadd.f32 0.0, %v834
        %v836 = vpop.f32.mrf.mxu0
        %v837 = vadd.f32 0.0, %v836
        %v838 = vpop.f32.mrf.mxu0
        %v839 = vpop.f32.mrf.mxu0
        %840 = vdwg.mxu0
        %v841 = vadd.f32 %v787, %v835
        %v842 = vadd.f32 %v788, %v837
        %843 = vst [vmem:[#allocation2] sm:$0xff] %v841
        %844 = vst [vmem:[#allocation2 + $0x8] sm:$0xff] %v842
        %s845 = scalar_lea.vmem %s5, 8
        %v846 = vld [vmem:[%s845] sm:$0x3]
        %v848 = vlaneseq
        %v849 = vshrl.u32 %v848, 7
        %v850 = vsub.s32 0, %v849
        %v851 = vrot.slane %v846, %v850
        %v852 = vlaneseq
        %v853 = vshrl.u32 %v852, 7
        %v854 = vsub.s32 1, %v853
        %v855 = vrot.slane %v846, %v854
        %v858 = vmul.f32 %v496, %v851
        %v859 = vmul.f32 %v497, %v855
        %s860 = sadd.s32 %s523, 4
        %s861 = smul.addr %s860, 4
        %s862 = scalar_lea.vmem %s3, %s861
        %v863 = vld [vmem:[%s862] sm:$0xf]
        %v864 = vld [vmem:[#allocation2] sm:$0xff]
        %v865 = vld [vmem:[#allocation2 + $0x8] sm:$0xff]
        %v866 = vpack.c.bf16 %v858, %v858
        %v867 = vpack.c.bf16 %v859, %v859
        %v869 = vsel %vm531, %v863, 0
        %v872 = vsel %vm535, %v866, 0
        %v875 = vsel %vm535, %v867, 0
        %877 = vmatprep.subr.bf16.mxu0 0
        %878 = vmatpush1.bf16.msra.mxu0 0
        %879 = vmatprep.subr.bf16.mxu0 0
        %880 = vmatpush1.bf16.msra.mxu0 0
        %881 = vmatprep.subr.bf16.mxu0 0
        %882 = vmatpush1.bf16.msra.mxu0 0
        %883 = vmatprep.subr.bf16.mxu0 0
        %884 = vmatpush1.bf16.msra.mxu0 0
        %885 = vmatprep.subr.bf16.mxu0 0
        %886 = vmatpush1.bf16.msra.mxu0 0
        %887 = vmatprep.subr.bf16.mxu0 0
        %888 = vmatpush1.bf16.msra.mxu0 0
        %889 = vmatprep.subr.bf16.mxu0 0
        %890 = vmatpush1.bf16.msra.mxu0 0
        %891 = vmatprep.subr.bf16.mxu0 %v875
        %892 = vmatpush1.bf16.msra.mxu0 %v872
        %893 = vmatprep.subr.bf16.mxu0 0
        %894 = vmatpush2.bf16.msra.mxu0 0
        %895 = vmatprep.subr.bf16.mxu0 0
        %896 = vmatpush2.bf16.msra.mxu0 0
        %897 = vmatprep.subr.bf16.mxu0 0
        %898 = vmatpush2.bf16.msra.mxu0 0
        %899 = vmatprep.subr.bf16.mxu0 0
        %900 = vmatpush2.bf16.msra.mxu0 0
        %901 = vmatprep.subr.bf16.mxu0 0
        %902 = vmatpush2.bf16.msra.mxu0 0
        %903 = vmatprep.subr.bf16.mxu0 0
        %904 = vmatpush2.bf16.msra.mxu0 0
        %905 = vmatprep.subr.bf16.mxu0 0
        %906 = vmatpush2.bf16.msra.mxu0 0
        %907 = vmatprep.subr.bf16.mxu0 0
        %908 = vmatpush2.bf16.msra.mxu0 0
        %909 = vmatprep.mubr.bf16.mxu0 0
        %910 = vmatmul.mubr.bf16.gmra.mxu0 %v869
        %v911 = vpop.f32.mrf.mxu0
        %v912 = vadd.f32 0.0, %v911
        %v913 = vpop.f32.mrf.mxu0
        %v914 = vadd.f32 0.0, %v913
        %v915 = vpop.f32.mrf.mxu0
        %v916 = vpop.f32.mrf.mxu0
        %917 = vdwg.mxu0
        %v918 = vadd.f32 %v864, %v912
        %v919 = vadd.f32 %v865, %v914
        %920 = vst [vmem:[#allocation2] sm:$0xff] %v918
        %921 = vst [vmem:[#allocation2 + $0x8] sm:$0xff] %v919
        %922 = vrot.lane.b32.xlu0 %v496, 127
        %v923 = vpop.permute.xlu0 %922
        %924 = vrot.lane.b32.xlu0 %v497, 127
        %v925 = vpop.permute.xlu0 %924
        %vm926 = vcmask 1039360
        %v927 = vsel %vm926, %v923, %v925
        %v930 = vsel %vm926, %v925, 0.0
        %s931 = scalar_lea.vmem %s5, 10
        %v932 = vld [vmem:[%s931] sm:$0x3]
        %v934 = vlaneseq
        %v935 = vshrl.u32 %v934, 7
        %v936 = vsub.s32 0, %v935
        %v937 = vrot.slane %v932, %v936
        %v938 = vlaneseq
        %v939 = vshrl.u32 %v938, 7
        %v940 = vsub.s32 1, %v939
        %v941 = vrot.slane %v932, %v940
        %v944 = vmul.f32 %v927, %v937
        %v945 = vmul.f32 %v930, %v941
        %s946 = sadd.s32 %s523, 5
        %s947 = smul.addr %s946, 4
        %s948 = scalar_lea.vmem %s3, %s947
        %v949 = vld [vmem:[%s948] sm:$0xf]
        %v950 = vld [vmem:[#allocation2] sm:$0xff]
        %v951 = vld [vmem:[#allocation2 + $0x8] sm:$0xff]
        %v952 = vpack.c.bf16 %v944, %v944
        %v953 = vpack.c.bf16 %v945, %v945
        %v955 = vsel %vm531, %v949, 0
        %v958 = vsel %vm535, %v952, 0
        %v961 = vsel %vm535, %v953, 0
        %963 = vmatprep.subr.bf16.mxu0 0
        %964 = vmatpush1.bf16.msra.mxu0 0
        %965 = vmatprep.subr.bf16.mxu0 0
        %966 = vmatpush1.bf16.msra.mxu0 0
        %967 = vmatprep.subr.bf16.mxu0 0
        %968 = vmatpush1.bf16.msra.mxu0 0
        %969 = vmatprep.subr.bf16.mxu0 0
        %970 = vmatpush1.bf16.msra.mxu0 0
        %971 = vmatprep.subr.bf16.mxu0 0
        %972 = vmatpush1.bf16.msra.mxu0 0
        %973 = vmatprep.subr.bf16.mxu0 0
        %974 = vmatpush1.bf16.msra.mxu0 0
        %975 = vmatprep.subr.bf16.mxu0 0
        %976 = vmatpush1.bf16.msra.mxu0 0
        %977 = vmatprep.subr.bf16.mxu0 %v961
        %978 = vmatpush1.bf16.msra.mxu0 %v958
        %979 = vmatprep.subr.bf16.mxu0 0
        %980 = vmatpush2.bf16.msra.mxu0 0
        %981 = vmatprep.subr.bf16.mxu0 0
        %982 = vmatpush2.bf16.msra.mxu0 0
        %983 = vmatprep.subr.bf16.mxu0 0
        %984 = vmatpush2.bf16.msra.mxu0 0
        %985 = vmatprep.subr.bf16.mxu0 0
        %986 = vmatpush2.bf16.msra.mxu0 0
        %987 = vmatprep.subr.bf16.mxu0 0
        %988 = vmatpush2.bf16.msra.mxu0 0
        %989 = vmatprep.subr.bf16.mxu0 0
        %990 = vmatpush2.bf16.msra.mxu0 0
        %991 = vmatprep.subr.bf16.mxu0 0
        %992 = vmatpush2.bf16.msra.mxu0 0
        %993 = vmatprep.subr.bf16.mxu0 0
        %994 = vmatpush2.bf16.msra.mxu0 0
        %995 = vmatprep.mubr.bf16.mxu0 0
        %996 = vmatmul.mubr.bf16.gmra.mxu0 %v955
        %v997 = vpop.f32.mrf.mxu0
        %v998 = vadd.f32 0.0, %v997
        %v999 = vpop.f32.mrf.mxu0
        %v1000 = vadd.f32 0.0, %v999
        %v1001 = vpop.f32.mrf.mxu0
        %v1002 = vpop.f32.mrf.mxu0
        %1003 = vdwg.mxu0
        %v1004 = vadd.f32 %v950, %v998
        %v1005 = vadd.f32 %v951, %v1000
        %1006 = vst [vmem:[#allocation2] sm:$0xff] %v1004
        %1007 = vst [vmem:[#allocation2 + $0x8] sm:$0xff] %v1005
        %1008 = vrot.lane.b32.xlu0 %v496, 113
        %v1009 = vpop.permute.xlu0 %1008
        %1010 = vrot.lane.b32.xlu0 %v497, 113
        %v1011 = vpop.permute.xlu0 %1010
        %vm1012 = vcmask 924672
        %v1013 = vsel %vm1012, %v1009, %v1011
        %v1016 = vsel %vm1012, %v1011, 0.0
        %s1017 = scalar_lea.vmem %s5, 12
        %v1018 = vld [vmem:[%s1017] sm:$0x3]
        %v1020 = vlaneseq
        %v1021 = vshrl.u32 %v1020, 7
        %v1022 = vsub.s32 0, %v1021
        %v1023 = vrot.slane %v1018, %v1022
        %v1024 = vlaneseq
        %v1025 = vshrl.u32 %v1024, 7
        %v1026 = vsub.s32 1, %v1025
        %v1027 = vrot.slane %v1018, %v1026
        %v1030 = vmul.f32 %v1013, %v1023
        %v1031 = vmul.f32 %v1016, %v1027
        %s1032 = sadd.s32 %s523, 6
        %s1033 = smul.addr %s1032, 4
        %s1034 = scalar_lea.vmem %s3, %s1033
        %v1035 = vld [vmem:[%s1034] sm:$0xf]
        %v1036 = vld [vmem:[#allocation2] sm:$0xff]
        %v1037 = vld [vmem:[#allocation2 + $0x8] sm:$0xff]
        %v1038 = vpack.c.bf16 %v1030, %v1030
        %v1039 = vpack.c.bf16 %v1031, %v1031
        %v1041 = vsel %vm531, %v1035, 0
        %v1044 = vsel %vm535, %v1038, 0
        %v1047 = vsel %vm535, %v1039, 0
        %1049 = vmatprep.subr.bf16.mxu0 0
        %1050 = vmatpush1.bf16.msra.mxu0 0
        %1051 = vmatprep.subr.bf16.mxu0 0
        %1052 = vmatpush1.bf16.msra.mxu0 0
        %1053 = vmatprep.subr.bf16.mxu0 0
        %1054 = vmatpush1.bf16.msra.mxu0 0
        %1055 = vmatprep.subr.bf16.mxu0 0
        %1056 = vmatpush1.bf16.msra.mxu0 0
        %1057 = vmatprep.subr.bf16.mxu0 0
        %1058 = vmatpush1.bf16.msra.mxu0 0
        %1059 = vmatprep.subr.bf16.mxu0 0
        %1060 = vmatpush1.bf16.msra.mxu0 0
        %1061 = vmatprep.subr.bf16.mxu0 0
        %1062 = vmatpush1.bf16.msra.mxu0 0
        %1063 = vmatprep.subr.bf16.mxu0 %v1047
        %1064 = vmatpush1.bf16.msra.mxu0 %v1044
        %1065 = vmatprep.subr.bf16.mxu0 0
        %1066 = vmatpush2.bf16.msra.mxu0 0
        %1067 = vmatprep.subr.bf16.mxu0 0
        %1068 = vmatpush2.bf16.msra.mxu0 0
        %1069 = vmatprep.subr.bf16.mxu0 0
        %1070 = vmatpush2.bf16.msra.mxu0 0
        %1071 = vmatprep.subr.bf16.mxu0 0
        %1072 = vmatpush2.bf16.msra.mxu0 0
        %1073 = vmatprep.subr.bf16.mxu0 0
        %1074 = vmatpush2.bf16.msra.mxu0 0
        %1075 = vmatprep.subr.bf16.mxu0 0
        %1076 = vmatpush2.bf16.msra.mxu0 0
        %1077 = vmatprep.subr.bf16.mxu0 0
        %1078 = vmatpush2.bf16.msra.mxu0 0
        %1079 = vmatprep.subr.bf16.mxu0 0
        %1080 = vmatpush2.bf16.msra.mxu0 0
        %1081 = vmatprep.mubr.bf16.mxu0 0
        %1082 = vmatmul.mubr.bf16.gmra.mxu0 %v1041
        %v1083 = vpop.f32.mrf.mxu0
        %v1084 = vadd.f32 0.0, %v1083
        %v1085 = vpop.f32.mrf.mxu0
        %v1086 = vadd.f32 0.0, %v1085
        %v1087 = vpop.f32.mrf.mxu0
        %v1088 = vpop.f32.mrf.mxu0
        %1089 = vdwg.mxu0
        %v1090 = vadd.f32 %v1036, %v1084
        %v1091 = vadd.f32 %v1037, %v1086
        %1092 = vst [vmem:[#allocation2] sm:$0xff] %v1090
        %1093 = vst [vmem:[#allocation2 + $0x8] sm:$0xff] %v1091
        %1094 = vrot.lane.b32.xlu0 %v496, 112
        %v1095 = vpop.permute.xlu0 %1094
        %1096 = vrot.lane.b32.xlu0 %v497, 112
        %v1097 = vpop.permute.xlu0 %1096
        %vm1098 = vcmask 916480
        %v1099 = vsel %vm1098, %v1095, %v1097
        %v1102 = vsel %vm1098, %v1097, 0.0
        %s1103 = scalar_lea.vmem %s5, 14
        %v1104 = vld [vmem:[%s1103] sm:$0x3]
        %v1106 = vlaneseq
        %v1107 = vshrl.u32 %v1106, 7
        %v1108 = vsub.s32 0, %v1107
        %v1109 = vrot.slane %v1104, %v1108
        %v1110 = vlaneseq
        %v1111 = vshrl.u32 %v1110, 7
        %v1112 = vsub.s32 1, %v1111
        %v1113 = vrot.slane %v1104, %v1112
        %v1116 = vmul.f32 %v1099, %v1109
        %v1117 = vmul.f32 %v1102, %v1113
        %s1118 = sadd.s32 %s523, 7
        %s1119 = smul.addr %s1118, 4
        %s1120 = scalar_lea.vmem %s3, %s1119
        %v1121 = vld [vmem:[%s1120] sm:$0xf]
        %v1122 = vld [vmem:[#allocation2] sm:$0xff]
        %v1123 = vld [vmem:[#allocation2 + $0x8] sm:$0xff]
        %v1124 = vpack.c.bf16 %v1116, %v1116
        %v1125 = vpack.c.bf16 %v1117, %v1117
        %v1127 = vsel %vm531, %v1121, 0
        %v1130 = vsel %vm535, %v1124, 0
        %v1133 = vsel %vm535, %v1125, 0
        %1135 = vmatprep.subr.bf16.mxu0 0
        %1136 = vmatpush1.bf16.msra.mxu0 0
        %1137 = vmatprep.subr.bf16.mxu0 0
        %1138 = vmatpush1.bf16.msra.mxu0 0
        %1139 = vmatprep.subr.bf16.mxu0 0
        %1140 = vmatpush1.bf16.msra.mxu0 0
        %1141 = vmatprep.subr.bf16.mxu0 0
        %1142 = vmatpush1.bf16.msra.mxu0 0
        %1143 = vmatprep.subr.bf16.mxu0 0
        %1144 = vmatpush1.bf16.msra.mxu0 0
        %1145 = vmatprep.subr.bf16.mxu0 0
        %1146 = vmatpush1.bf16.msra.mxu0 0
        %1147 = vmatprep.subr.bf16.mxu0 0
        %1148 = vmatpush1.bf16.msra.mxu0 0
        %1149 = vmatprep.subr.bf16.mxu0 %v1133
        %1150 = vmatpush1.bf16.msra.mxu0 %v1130
        %1151 = vmatprep.subr.bf16.mxu0 0
        %1152 = vmatpush2.bf16.msra.mxu0 0
        %1153 = vmatprep.subr.bf16.mxu0 0
        %1154 = vmatpush2.bf16.msra.mxu0 0
        %1155 = vmatprep.subr.bf16.mxu0 0
        %1156 = vmatpush2.bf16.msra.mxu0 0
        %1157 = vmatprep.subr.bf16.mxu0 0
        %1158 = vmatpush2.bf16.msra.mxu0 0
        %1159 = vmatprep.subr.bf16.mxu0 0
        %1160 = vmatpush2.bf16.msra.mxu0 0
        %1161 = vmatprep.subr.bf16.mxu0 0
        %1162 = vmatpush2.bf16.msra.mxu0 0
        %1163 = vmatprep.subr.bf16.mxu0 0
        %1164 = vmatpush2.bf16.msra.mxu0 0
        %1165 = vmatprep.subr.bf16.mxu0 0
        %1166 = vmatpush2.bf16.msra.mxu0 0
        %1167 = vmatprep.mubr.bf16.mxu0 0
        %1168 = vmatmul.mubr.bf16.gmra.mxu0 %v1127
        %v1169 = vpop.f32.mrf.mxu0
        %v1170 = vadd.f32 0.0, %v1169
        %v1171 = vpop.f32.mrf.mxu0
        %v1172 = vadd.f32 0.0, %v1171
        %v1173 = vpop.f32.mrf.mxu0
        %v1174 = vpop.f32.mrf.mxu0
        %1175 = vdwg.mxu0
        %v1176 = vadd.f32 %v1122, %v1170
        %v1177 = vadd.f32 %v1123, %v1172
        %1178 = vst [vmem:[#allocation2] sm:$0xff] %v1176
        %1179 = vst [vmem:[#allocation2 + $0x8] sm:$0xff] %v1177
        %1180 = vrot.lane.b32.xlu0 %v496, 111
        %v1181 = vpop.permute.xlu0 %1180
        %1182 = vrot.lane.b32.xlu0 %v497, 111
        %v1183 = vpop.permute.xlu0 %1182
        %vm1184 = vcmask 908288
        %v1185 = vsel %vm1184, %v1181, %v1183
        %v1188 = vsel %vm1184, %v1183, 0.0
        %s1189 = scalar_lea.vmem %s5, 16
        %v1190 = vld [vmem:[%s1189] sm:$0x3]
        %v1192 = vlaneseq
        %v1193 = vshrl.u32 %v1192, 7
        %v1194 = vsub.s32 0, %v1193
        %v1195 = vrot.slane %v1190, %v1194
        %v1196 = vlaneseq
        %v1197 = vshrl.u32 %v1196, 7
        %v1198 = vsub.s32 1, %v1197
        %v1199 = vrot.slane %v1190, %v1198
        %v1202 = vmul.f32 %v1185, %v1195
        %v1203 = vmul.f32 %v1188, %v1199
        %s1204 = sadd.s32 %s523, 8
        %s1205 = smul.addr %s1204, 4
        %s1206 = scalar_lea.vmem %s3, %s1205
        %v1207 = vld [vmem:[%s1206] sm:$0xf]
        %v1208 = vld [vmem:[#allocation2] sm:$0xff]
        %v1209 = vld [vmem:[#allocation2 + $0x8] sm:$0xff]
        %v1210 = vpack.c.bf16 %v1202, %v1202
        %v1211 = vpack.c.bf16 %v1203, %v1203
        %v1213 = vsel %vm531, %v1207, 0
        %v1216 = vsel %vm535, %v1210, 0
        %v1219 = vsel %vm535, %v1211, 0
        %1221 = vmatprep.subr.bf16.mxu0 0
        %1222 = vmatpush1.bf16.msra.mxu0 0
        %1223 = vmatprep.subr.bf16.mxu0 0
        %1224 = vmatpush1.bf16.msra.mxu0 0
        %1225 = vmatprep.subr.bf16.mxu0 0
        %1226 = vmatpush1.bf16.msra.mxu0 0
        %1227 = vmatprep.subr.bf16.mxu0 0
        %1228 = vmatpush1.bf16.msra.mxu0 0
        %1229 = vmatprep.subr.bf16.mxu0 0
        %1230 = vmatpush1.bf16.msra.mxu0 0
        %1231 = vmatprep.subr.bf16.mxu0 0
        %1232 = vmatpush1.bf16.msra.mxu0 0
        %1233 = vmatprep.subr.bf16.mxu0 0
        %1234 = vmatpush1.bf16.msra.mxu0 0
        %1235 = vmatprep.subr.bf16.mxu0 %v1219
        %1236 = vmatpush1.bf16.msra.mxu0 %v1216
        %1237 = vmatprep.subr.bf16.mxu0 0
        %1238 = vmatpush2.bf16.msra.mxu0 0
        %1239 = vmatprep.subr.bf16.mxu0 0
        %1240 = vmatpush2.bf16.msra.mxu0 0
        %1241 = vmatprep.subr.bf16.mxu0 0
        %1242 = vmatpush2.bf16.msra.mxu0 0
        %1243 = vmatprep.subr.bf16.mxu0 0
        %1244 = vmatpush2.bf16.msra.mxu0 0
        %1245 = vmatprep.subr.bf16.mxu0 0
        %1246 = vmatpush2.bf16.msra.mxu0 0
        %1247 = vmatprep.subr.bf16.mxu0 0
        %1248 = vmatpush2.bf16.msra.mxu0 0
        %1249 = vmatprep.subr.bf16.mxu0 0
        %1250 = vmatpush2.bf16.msra.mxu0 0
        %1251 = vmatprep.subr.bf16.mxu0 0
        %1252 = vmatpush2.bf16.msra.mxu0 0
        %1253 = vmatprep.mubr.bf16.mxu0 0
        %1254 = vmatmul.mubr.bf16.gmra.mxu0 %v1213
        %v1255 = vpop.f32.mrf.mxu0
        %v1256 = vadd.f32 0.0, %v1255
        %v1257 = vpop.f32.mrf.mxu0
        %v1258 = vadd.f32 0.0, %v1257
        %v1259 = vpop.f32.mrf.mxu0
        %v1260 = vpop.f32.mrf.mxu0
        %1261 = vdwg.mxu0
        %v1262 = vadd.f32 %v1208, %v1256
        %v1263 = vadd.f32 %v1209, %v1258
        %1264 = vst [vmem:[#allocation2] sm:$0xff] %v1262
        %1265 = vst [vmem:[#allocation2 + $0x8] sm:$0xff] %v1263
      $region60: #{adain_resblk_forward.7} parent=51 // pred_fallthru
        _
      %p1266 = scmp.eq.s32.totalorder %s26, 2
      // Predicated region
      $region61: #{adain_resblk_forward.7} parent=51 // pred_check
        %p1267 = pneg %p1266
      $region62: #{adain_resblk_forward.7} parent=51 // pred_check_branch
        %1269 = sbr.rel (%p1267) target = $region64
      $region63: #{adain_resblk_forward.7} parent=51 // pred_region
        %v1270 = vld [vmem:[%s7] sm:$0xf]
        %v1271 = vld [vmem:[%s449] sm:$0xff]
        %v1273 = vcombine.high %v1271, %v1271
        %v1275 = vpack.c.bf16 %v1271, %v1271
        %v1276 = vpack.c.bf16 %v1273, %v1273
        %vm1277 = vcmask 31744
        %v1279 = vsel %vm1277, %v1270, 0
        %vm1281 = vcmask 1041408
        %v1283 = vsel %vm1281, %v1275, 0
        %v1286 = vsel %vm1281, %v1276, 0
        %1288 = vmatprep.subr.bf16.mxu0 0
        %1289 = vmatpush1.bf16.msra.mxu0 0
        %1290 = vmatprep.subr.bf16.mxu0 0
        %1291 = vmatpush1.bf16.msra.mxu0 0
        %1292 = vmatprep.subr.bf16.mxu0 0
        %1293 = vmatpush1.bf16.msra.mxu0 0
        %1294 = vmatprep.subr.bf16.mxu0 0
        %1295 = vmatpush1.bf16.msra.mxu0 0
        %1296 = vmatprep.subr.bf16.mxu0 0
        %1297 = vmatpush1.bf16.msra.mxu0 0
        %1298 = vmatprep.subr.bf16.mxu0 0
        %1299 = vmatpush1.bf16.msra.mxu0 0
        %1300 = vmatprep.subr.bf16.mxu0 0
        %1301 = vmatpush1.bf16.msra.mxu0 0
        %1302 = vmatprep.subr.bf16.mxu0 %v1286
        %1303 = vmatpush1.bf16.msra.mxu0 %v1283
        %1304 = vmatprep.subr.bf16.mxu0 0
        %1305 = vmatpush2.bf16.msra.mxu0 0
        %1306 = vmatprep.subr.bf16.mxu0 0
        %1307 = vmatpush2.bf16.msra.mxu0 0
        %1308 = vmatprep.subr.bf16.mxu0 0
        %1309 = vmatpush2.bf16.msra.mxu0 0
        %1310 = vmatprep.subr.bf16.mxu0 0
        %1311 = vmatpush2.bf16.msra.mxu0 0
        %1312 = vmatprep.subr.bf16.mxu0 0
        %1313 = vmatpush2.bf16.msra.mxu0 0
        %1314 = vmatprep.subr.bf16.mxu0 0
        %1315 = vmatpush2.bf16.msra.mxu0 0
        %1316 = vmatprep.subr.bf16.mxu0 0
        %1317 = vmatpush2.bf16.msra.mxu0 0
        %1318 = vmatprep.subr.bf16.mxu0 0
        %1319 = vmatpush2.bf16.msra.mxu0 0
        %1320 = vmatprep.mubr.bf16.mxu0 0
        %1321 = vmatmul.mubr.bf16.gmra.mxu0 %v1279
        %v1322 = vpop.f32.mrf.mxu0
        %v1323 = vadd.f32 0.0, %v1322
        %v1324 = vpop.f32.mrf.mxu0
        %v1325 = vadd.f32 0.0, %v1324
        %v1326 = vpop.f32.mrf.mxu0
        %v1327 = vpop.f32.mrf.mxu0
        %1328 = vdwg.mxu0
        %v1329 = vld [vmem:[#allocation2] sm:$0xff]
        %v1330 = vld [vmem:[#allocation2 + $0x8] sm:$0xff]
        %v1331 = vld [vmem:[%s4] sm:$0xff]
        %1333 = vset.pattern.permute.xlu0 0
        %1334 = vperm.xlu0 %1333, %v1331
        %v1335 = vpop.permute.xlu0 %1334
        %v1337 = vadd.f32 %v1329, %v1335
        %v1338 = vadd.f32 %v1330, %v1335
        %v1339 = vadd.f32 %v1337, %v1323
        %v1340 = vadd.f32 %v1338, %v1325
        %v1341 = vmul.f32 %v1339, 0.70710677
        %v1342 = vmul.f32 %v1340, 0.70710677
        %1343 = vst [vmem:[%s458] sm:$0xff] %v1341
        %1344 = vst [vmem:[%s458 + $0x8] sm:$0xff] %v1342
      $region64: #{adain_resblk_forward.7} parent=51 // pred_fallthru
        _
      %p1345 = scmp.lt.s32.totalorder %s24, 1
      %s1346 = scalar_select %p1345, %s24, 1
      %p1347 = scmp.lt.s32.totalorder %s25, 7
      %s1348 = scalar_select %p1347, %s25, 7
      %s1349 = smul.addr %s1348, 2
      %s1350 = smul.addr %s1346, 16
      %s1351 = sadd.s32 %s1349, %s1350
      %s1352 = smul.addr %s1351, 8
      %s1353 = scalar_lea.vmem %s8, %s1352
      // Predicated region
      $region65: #{adain_resblk_forward.7} parent=51 // pred_check
        %p1354 = pneg %p262
      $region66: #{adain_resblk_forward.7} parent=51 // pred_check_branch
        %1356 = sbr.rel (%p1354) target = $region68
      $region67: #{adain_resblk_forward.7} parent=51 // pred_region
        _
      $region68: #{adain_resblk_forward.7} parent=51 // pred_fallthru
        _
    $region52: #{adain_resblk_forward.7} parent=5 // pred_fallthru
      _
    %p1357 = scmp.le.s32.totalorder 2, %s14
    // Predicated region
    $region69: #{adain_resblk_forward.7} parent=5 // pred_check
      %p1358 = pneg %p1357
    $region70: #{adain_resblk_forward.7} parent=5 // pred_check_branch
      %1360 = sbr.rel (%p1358) target = $region72
    $region71: #{adain_resblk_forward.7} parent=5 // pred_region
      %s1361 = ssub.s32 %s14, 2
      // Predicated region
      $region73: #{adain_resblk_forward.7} parent=71 // pred_check
        %p1362 = pneg %p268
      $region74: #{adain_resblk_forward.7} parent=71 // pred_check_branch
        %1364 = sbr.rel (%p1362) target = $region76
      $region75: #{adain_resblk_forward.7} parent=71 // pred_region
        %p1365 = scmp.lt.s32.totalorder %s27, 1
        %s1366 = scalar_select %p1365, %s27, 1
        %p1367 = scmp.lt.s32.totalorder %s28, 7
        %s1368 = scalar_select %p1367, %s28, 7
        %s1369 = smul.addr %s1368, 2
        %s1370 = smul.addr %s1366, 16
        %s1371 = sadd.s32 %s1369, %s1370
        %s1372 = smul.addr %s1371, 8
        %s1373 = scalar_lea.vmem %s8, %s1372
      $region76: #{adain_resblk_forward.7} parent=71 // pred_fallthru
        _
    $region72: #{adain_resblk_forward.7} parent=5 // pred_fallthru
      _
  $region6: #{adain_resblk_forward.7} parent=0 // loop_footer
    %s18 = sadd.s32 1, %s14
  $region7: #{adain_resblk_forward.7} parent=0 // loop_footer_branch
    %13 = sbr.rel target = $region3
  $region8: #{adain_resblk_forward.7} parent=0 // loop_exit
    _

</llo_original>
